<compile_context>
chip_gen: v6e
topology: v6e:2x2x1
jax: 0.10.0
libtpu: 0.0.40
codegen_flags: <defaults>
</compile_context>

<pallas_src>
import functools

import jax
import jax.numpy as jnp
from jax.experimental import pallas as pl
from jax.experimental.pallas import tpu as pltpu

GROUPS = 32
GN_EPS = 1e-6
LN_EPS = 1e-5
_GELU_C = 0.7978845608028654  # sqrt(2/pi)
_NEG_INF = -1e30


def _gelu_tanh(x):
    return 0.5 * x * (1.0 + jnp.tanh(_GELU_C * (x + 0.044715 * x * x * x)))


def _layer_norm(x, g, b):
    m = jnp.mean(x, axis=-1, keepdims=True)
    d = x - m
    v = jnp.mean(d * d, axis=-1, keepdims=True)
    return d * jax.lax.rsqrt(v + LN_EPS) * g + b


def _bf(x):
    return x.astype(jnp.bfloat16)


# --------------------- prep kernel: GN stats + K/V projections ---------------------
def _prep_kernel(x_ref, ctx_ref,
                 agg_ref, aggT_ref, gn_w_ref, gn_b_ref,
                 ci_w_ref, ci_b_ref, ln1_w_ref, ln1_b_ref,
                 k1_w_ref, v1_w_ref, k2_w_ref, v2_w_ref,
                 scale_ref, shift_ref, k1_ref, v1_ref, k2_ref, v2_ref,
                 *, groups):
    f32 = jnp.float32
    x = x_ref[0].astype(f32)                        # (S, C)
    S, C = x.shape
    cg = C // groups
    cnt = f32(S * cg)

    # GroupNorm statistics via channel->group 0/1 aggregation matmuls (f32)
    agg = agg_ref[...]                              # (C, G)
    aggT = aggT_ref[...]                            # (G, C)
    s1 = jnp.sum(x, axis=0, keepdims=True)                              # (1, C)
    mean_g = jnp.dot(s1, agg, preferred_element_type=f32) / cnt         # (1, G)
    mean_c = jnp.dot(mean_g, aggT, preferred_element_type=f32)          # (1, C)
    d0 = x - mean_c
    ss = jnp.sum(d0 * d0, axis=0, keepdims=True)                        # (1, C)
    var_g = jnp.dot(ss, agg, preferred_element_type=f32) / cnt          # (1, G)
    inv_c = jnp.dot(jax.lax.rsqrt(var_g + GN_EPS), aggT,
                    preferred_element_type=f32)                         # (1, C)
    scale_c = inv_c * gn_w_ref[...]                 # affine pre-folded
    shift_c = gn_b_ref[...] - mean_c * scale_c
    scale_ref[0] = scale_c
    shift_ref[0] = shift_c

    # full-sequence x0 = conv_input(GN(x)); LN1; self-attention K/V (bf16 out)
    h = x * scale_c + shift_c
    x0 = jnp.dot(_bf(h), ci_w_ref[...], preferred_element_type=f32) + ci_b_ref[...]
    h1 = _bf(_layer_norm(x0, ln1_w_ref[...], ln1_b_ref[...]))
    k1_ref[0] = jnp.dot(h1, k1_w_ref[...],
                        preferred_element_type=f32).astype(k1_ref.dtype)
    v1_ref[0] = jnp.dot(h1, v1_w_ref[...],
                        preferred_element_type=f32).astype(v1_ref.dtype)

    # cross-attention K/V from the (zero-padded) context
    ctx = _bf(ctx_ref[0])
    k2_ref[0] = jnp.dot(ctx, k2_w_ref[...],
                        preferred_element_type=f32).astype(k2_ref.dtype)
    v2_ref[0] = jnp.dot(ctx, v2_w_ref[...],
                        preferred_element_type=f32).astype(v2_ref.dtype)


# --------------------------- main (query-tiled) kernel ------------------------------
def _mha_tile(h, qw_ref, k_ref, v_ref, ow_ref, *, n_head, key_bias=None):
    """h: (tq, C) f32.  qw_ref: (n_head, C, d_head) bf16 (stacked per-head weights).
    k_ref / v_ref blocks: (1, n_head, T, d_head) bf16.  ow_ref: (C, C) bf16.
    Returns the already out-projected (tq, C) f32 (output bias added by caller)."""
    f32 = jnp.float32
    d_head = qw_ref.shape[2]
    inv = 1.0 / float(d_head) ** 0.5
    hb = _bf(h)
    trans_b = (((1,), (1,)), ((), ()))              # contract q dim-1 with k dim-1
    ctxs = []
    for hh in range(n_head):
        qh = jnp.dot(hb, qw_ref[hh], preferred_element_type=f32)        # (tq, dh)
        kh = k_ref[0, hh]                                               # (T, dh) bf16
        vh = v_ref[0, hh]
        s = jax.lax.dot_general(_bf(qh), kh, trans_b,
                                preferred_element_type=f32) * inv       # (tq, T)
        if key_bias is not None:
            s = s + key_bias
        m = jnp.max(s, axis=-1, keepdims=True)
        p = jnp.exp(s - m)
        l = jnp.sum(p, axis=-1, keepdims=True)
        p = p * pl.reciprocal(l, approx=True)
        ctxs.append(jnp.dot(_bf(p), vh, preferred_element_type=f32))    # (tq, dh)
    ctx = jnp.concatenate(ctxs, axis=-1)                                 # (tq, C)
    # single full-width out-projection
    return jnp.dot(_bf(ctx), ow_ref[...], preferred_element_type=f32)


def _main_kernel(x_ref, scale_ref, shift_ref, k1_ref, v1_ref, k2_ref, v2_ref,
                 ci_w_ref, ci_b_ref,
                 ln1_w_ref, ln1_b_ref, q1_w_ref, o1_w_ref, o1_b_ref,
                 ln2_w_ref, ln2_b_ref, q2_w_ref, o2_w_ref, o2_b_ref,
                 ln3_w_ref, ln3_b_ref,
                 g1a_w_ref, g1a_b_ref, g1g_w_ref, g1g_b_ref, g2_w_ref, g2_b_ref,
                 co_w_ref, co_b_ref,
                 out_ref, *, n_head, t_valid):
    f32 = jnp.float32
    xin = x_ref[0].astype(f32)                  # (tq, C)  raw input (long residual)

    # GroupNorm apply (stats folded in prep) + conv_input (1x1 == channel matmul)
    h = xin * scale_ref[0] + shift_ref[0]
    x0 = jnp.dot(_bf(h), ci_w_ref[...], preferred_element_type=f32) + ci_b_ref[...]

    # LN1 + self-attention over the full sequence K/V (+ residual)
    h = _layer_norm(x0, ln1_w_ref[...], ln1_b_ref[...])
    x1 = x0 + _mha_tile(h, q1_w_ref, k1_ref, v1_ref, o1_w_ref,
                        n_head=n_head) + o1_b_ref[...]

    # LN2 + cross-attention over (padded, masked) context (+ residual)
    t_pad = k2_ref.shape[2]
    key_bias = None
    if t_valid < t_pad:                         # static
        col = jax.lax.broadcasted_iota(jnp.int32, (1, t_pad), 1)
        key_bias = jnp.where(col < t_valid, 0.0, _NEG_INF)
    h = _layer_norm(x1, ln2_w_ref[...], ln2_b_ref[...])
    x2 = x1 + _mha_tile(h, q2_w_ref, k2_ref, v2_ref, o2_w_ref,
                        n_head=n_head, key_bias=key_bias) + o2_b_ref[...]

    # LN3 + GeGLU feed-forward (+ residual)
    h = _bf(_layer_norm(x2, ln3_w_ref[...], ln3_b_ref[...]))
    a_lin = jnp.dot(h, g1a_w_ref[...], preferred_element_type=f32) + g1a_b_ref[...]
    gate = jnp.dot(h, g1g_w_ref[...], preferred_element_type=f32) + g1g_b_ref[...]
    y = a_lin * _gelu_tanh(gate)
    x3 = x2 + jnp.dot(_bf(y), g2_w_ref[...], preferred_element_type=f32) + g2_b_ref[...]

    # conv_output (1x1) + long residual
    out = jnp.dot(_bf(x3), co_w_ref[...], preferred_element_type=f32) + co_b_ref[...] + xin
    out_ref[0] = out.astype(out_ref.dtype)


# ----------------------------------- wrapper ----------------------------------------
def _vmem_limit_bytes():
    try:
        info = pltpu.get_tpu_info()
        cap = getattr(info, "vmem_capacity_bytes", None)
        if cap:
            # ~3/4 of physical VMEM: ~96 MiB on v5e/v6e, ~48 MiB on v7x.
            return int(min(cap * 3 // 4, 100 * 1024 * 1024))
    except Exception:
        pass
    return 48 * 1024 * 1024


def unet_attention_block(x_nchw, context, p, *, n_head, tile_q=None):
    """x_nchw: (N, C, H, W) f32, context: (N, T, Dc) f32. Returns (N, C, H, W)."""
    N, C, H, W = x_nchw.shape
    S = H * W
    _, T, Dc = context.shape
    G = GROUPS
    assert C % G == 0 and C % n_head == 0
    d_head = C // n_head
    f32, bf16 = jnp.float32, jnp.bfloat16

    if tile_q is None:
        tile_q = S
        for cand in (512, 256, 128, 64, 32, 16, 8):
            if S % cand == 0:
                tile_q = cand
                break
    assert S % tile_q == 0 and (tile_q % 8 == 0 or tile_q == S)

    # lane-dense context keys: pad up to a multiple of 128 (masked in-kernel)
    T_pad = max(128, ((T + 127) // 128) * 128)
    ctx_pad = context if T_pad == T else jnp.pad(
        context, ((0, 0), (0, T_pad - T), (0, 0)))

    # single NCHW -> (N, S, C) relayout (channels on lanes)
    x_seq = jnp.transpose(x_nchw.reshape(N, C, S), (0, 2, 1))

    cg = C // G
    agg = (jnp.arange(C)[:, None] // cg == jnp.arange(G)[None, :]).astype(f32)  # (C, G)

    def row(v):
        return v.reshape(1, -1).astype(f32)

    w_in = p["a1_in_w"]                         # (3C, C): [q; k; v] rows, no bias
    q1_w = jnp.transpose(w_in[:C])              # (C_in, C_out)
    k1_w = jnp.transpose(w_in[C:2 * C])
    v1_w = jnp.transpose(w_in[2 * C:])

    def heads(w_t):                             # (C_in, C_out) -> (n_head, C_in, d_head)
        return jnp.transpose(w_t.reshape(w_t.shape[0], n_head, d_head), (1, 0, 2))

    vmem_limit = _vmem_limit_bytes()

    # ------------------ prep pass: GN stats + K/V projections --------------------
    prep_ops = [
        agg, jnp.transpose(agg), row(p["gn_w"]), row(p["gn_b"]),
        p["ci_w"][:, :, 0, 0].T.astype(bf16), row(p["ci_b"]),
        row(p["ln1_w"]), row(p["ln1_b"]),
        k1_w.astype(bf16), v1_w.astype(bf16),
        p["a2_k_w"].T.astype(bf16), p["a2_v_w"].T.astype(bf16),
    ]

    def _prep_wspec(w):
        nd = w.ndim
        return pl.BlockSpec(w.shape, lambda n, _nd=nd: (0,) * _nd)

    gn_scale, gn_shift, k1, v1, k2, v2 = pl.pallas_call(
        functools.partial(_prep_kernel, groups=G),
        out_shape=(
            jax.ShapeDtypeStruct((N, 1, C), f32),
            jax.ShapeDtypeStruct((N, 1, C), f32),
            jax.ShapeDtypeStruct((N, S, C), bf16),
            jax.ShapeDtypeStruct((N, S, C), bf16),
            jax.ShapeDtypeStruct((N, T_pad, C), bf16),
            jax.ShapeDtypeStruct((N, T_pad, C), bf16),
        ),
        grid_spec=pltpu.PrefetchScalarGridSpec(
            num_scalar_prefetch=0,
            grid=(N,),
            in_specs=[pl.BlockSpec((1, S, C), lambda n: (n, 0, 0)),
                      pl.BlockSpec((1, T_pad, Dc), lambda n: (n, 0, 0))]
                     + [_prep_wspec(w) for w in prep_ops],
            out_specs=[pl.BlockSpec((1, 1, C), lambda n: (n, 0, 0)),
                       pl.BlockSpec((1, 1, C), lambda n: (n, 0, 0)),
                       pl.BlockSpec((1, S, C), lambda n: (n, 0, 0)),
                       pl.BlockSpec((1, S, C), lambda n: (n, 0, 0)),
                       pl.BlockSpec((1, T_pad, C), lambda n: (n, 0, 0)),
                       pl.BlockSpec((1, T_pad, C), lambda n: (n, 0, 0))],
        ),
        compiler_params=pltpu.CompilerParams(
            dimension_semantics=("parallel",),
            vmem_limit_bytes=vmem_limit),
    )(x_seq, ctx_pad, *prep_ops)

    # head-major K/V: (N, T, C) -> (N, n_head, T, d_head)  (cheap one-time relayout)
    def to_heads(kv):
        n, t, _ = kv.shape
        return jnp.transpose(kv.reshape(n, t, n_head, d_head), (0, 2, 1, 3))

    k1h, v1h, k2h, v2h = to_heads(k1), to_heads(v1), to_heads(k2), to_heads(v2)

    # ----------------------------- main tiled pass --------------------------------
    C4 = 4 * C
    main_ops = [
        p["ci_w"][:, :, 0, 0].T.astype(bf16), row(p["ci_b"]),
        row(p["ln1_w"]), row(p["ln1_b"]),
        heads(q1_w).astype(bf16),
        p["a1_out_w"].T.astype(bf16), row(p["a1_out_b"]),
        row(p["ln2_w"]), row(p["ln2_b"]),
        heads(p["a2_q_w"].T).astype(bf16),
        p["a2_out_w"].T.astype(bf16), row(p["a2_out_b"]),
        row(p["ln3_w"]), row(p["ln3_b"]),
        p["g1_w"][:C4].T.astype(bf16), p["g1_b"][:C4].reshape(1, C4).astype(f32),
        p["g1_w"][C4:].T.astype(bf16), p["g1_b"][C4:].reshape(1, C4).astype(f32),
        p["g2_w"].T.astype(bf16), row(p["g2_b"]),
        p["co_w"][:, :, 0, 0].T.astype(bf16), row(p["co_b"]),
    ]

    def _main_wspec(w):
        nd = w.ndim
        return pl.BlockSpec(w.shape, lambda n, qi, _nd=nd: (0,) * _nd)

    kernel = functools.partial(_main_kernel, n_head=n_head, t_valid=T)

    out_seq = pl.pallas_call(
        kernel,
        out_shape=jax.ShapeDtypeStruct((N, S, C), x_nchw.dtype),
        grid_spec=pltpu.PrefetchScalarGridSpec(
            num_scalar_prefetch=0,
            grid=(N, S // tile_q),
            in_specs=[
                pl.BlockSpec((1, tile_q, C), lambda n, qi: (n, qi, 0)),
                pl.BlockSpec((1, 1, C), lambda n, qi: (n, 0, 0)),
                pl.BlockSpec((1, 1, C), lambda n, qi: (n, 0, 0)),
                pl.BlockSpec((1, n_head, S, d_head), lambda n, qi: (n, 0, 0, 0)),
                pl.BlockSpec((1, n_head, S, d_head), lambda n, qi: (n, 0, 0, 0)),
                pl.BlockSpec((1, n_head, T_pad, d_head), lambda n, qi: (n, 0, 0, 0)),
                pl.BlockSpec((1, n_head, T_pad, d_head), lambda n, qi: (n, 0, 0, 0)),
            ] + [_main_wspec(w) for w in main_ops],
            out_specs=pl.BlockSpec((1, tile_q, C), lambda n, qi: (n, qi, 0)),
        ),
        compiler_params=pltpu.CompilerParams(
            dimension_semantics=("parallel", "parallel"),
            vmem_limit_bytes=vmem_limit),
    )(x_seq, gn_scale, gn_shift, k1h, v1h, k2h, v2h, *main_ops)

    return jnp.transpose(out_seq, (0, 2, 1)).reshape(N, C, H, W)


# ------------------------------- pure-JAX reference ---------------------------------
def _mm(a, b):
    return jnp.matmul(a, b, precision=jax.lax.Precision.HIGHEST)


def _mha_ref(q, k, v, n_head):
    B, Sq, Cq = q.shape
    Tk = k.shape[1]
    dH = Cq // n_head
    qh = q.reshape(B, Sq, n_head, dH).transpose(0, 2, 1, 3)
    kh = k.reshape(B, Tk, n_head, dH).transpose(0, 2, 1, 3)
    vh = v.reshape(B, Tk, n_head, dH).transpose(0, 2, 1, 3)
    w = jnp.einsum("bhqd,bhkd->bhqk", qh, kh,
                   precision=jax.lax.Precision.HIGHEST) / jnp.sqrt(jnp.float32(dH))
    w = jax.nn.softmax(w, axis=-1)
    o = jnp.einsum("bhqk,bhkd->bhqd", w, vh, precision=jax.lax.Precision.HIGHEST)
    return o.transpose(0, 2, 1, 3).reshape(B, Sq, Cq)


def _ln_ref(x, g, b):
    m = x.mean(-1, keepdims=True)
    v = ((x - m) ** 2).mean(-1, keepdims=True)
    return (x - m) / jnp.sqrt(v + LN_EPS) * g + b


def _reference(x, ctx, p, n_head):
    N, C, H, W = x.shape
    G = GROUPS
    xg = x.reshape(N, G, C // G, H, W)
    m = xg.mean(axis=(2, 3, 4), keepdims=True)
    v = ((xg - m) ** 2).mean(axis=(2, 3, 4), keepdims=True)
    xn = ((xg - m) / jnp.sqrt(v + GN_EPS)).reshape(N, C, H, W)
    xn = xn * p["gn_w"][None, :, None, None] + p["gn_b"][None, :, None, None]
    h = jnp.einsum("nchw,oc->nohw", xn, p["ci_w"][:, :, 0, 0],
                   precision=jax.lax.Precision.HIGHEST) + p["ci_b"][None, :, None, None]
    s = h.reshape(N, C, H * W).transpose(0, 2, 1)          # (N, S, C)

    hn = _ln_ref(s, p["ln1_w"], p["ln1_b"])
    q, k, v_ = jnp.split(_mm(hn, p["a1_in_w"].T), 3, axis=-1)
    s = s + _mm(_mha_ref(q, k, v_, n_head), p["a1_out_w"].T) + p["a1_out_b"]

    hn = _ln_ref(s, p["ln2_w"], p["ln2_b"])
    q = _mm(hn, p["a2_q_w"].T)
    k = _mm(ctx, p["a2_k_w"].T)
    v_ = _mm(ctx, p["a2_v_w"].T)
    s = s + _mm(_mha_ref(q, k, v_, n_head), p["a2_out_w"].T) + p["a2_out_b"]

    hn = _ln_ref(s, p["ln3_w"], p["ln3_b"])
    g = _mm(hn, p["g1_w"].T) + p["g1_b"]
    a_part, gate = jnp.split(g, 2, axis=-1)
    s = s + _mm(a_part * _gelu_tanh(gate), p["g2_w"].T) + p["g2_b"]

    hs = s.transpose(0, 2, 1).reshape(N, C, H, W)
    out = jnp.einsum("nchw,oc->nohw", hs, p["co_w"][:, :, 0, 0],
                     precision=jax.lax.Precision.HIGHEST) + p["co_b"][None, :, None, None]
    return out + x


if __name__ == "__main__":
    # small shapes consistent with the module: channels = n_embd * n_head, C % 32 == 0
    N, n_head, n_embd = 2, 4, 16
    C = n_head * n_embd            # 64
    H = W = 16                     # S = 256 -> 4 query tiles of 64
    T_ctx, d_ctx = 16, 32          # context padded to 128 keys inside the wrapper

    key = jax.random.PRNGKey(0)
    ks = jax.random.split(key, 26)
    normal = lambda k, shape, s=0.05: s * jax.random.normal(k, shape, jnp.float32)

    x = jax.random.normal(ks[0], (N, C, H, W), jnp.float32)
    context = jax.random.normal(ks[1], (N, T_ctx, d_ctx), jnp.float32)

    p = {
        "gn_w": 1.0 + 0.1 * jax.random.normal(ks[2], (C,), jnp.float32),
        "gn_b": 0.1 * jax.random.normal(ks[3], (C,), jnp.float32),
        "ci_w": normal(ks[4], (C, C, 1, 1)),
        "ci_b": normal(ks[5], (C,)),
        "ln1_w": 1.0 + 0.1 * jax.random.normal(ks[6], (C,), jnp.float32),
        "ln1_b": 0.1 * jax.random.normal(ks[7], (C,), jnp.float32),
        "a1_in_w": normal(ks[8], (3 * C, C)),
        "a1_out_w": normal(ks[9], (C, C)),
        "a1_out_b": normal(ks[10], (C,)),
        "ln2_w": 1.0 + 0.1 * jax.random.normal(ks[11], (C,), jnp.float32),
        "ln2_b": 0.1 * jax.random.normal(ks[12], (C,), jnp.float32),
        "a2_q_w": normal(ks[13], (C, C)),
        "a2_k_w": normal(ks[14], (C, d_ctx)),
        "a2_v_w": normal(ks[15], (C, d_ctx)),
        "a2_out_w": normal(ks[16], (C, C)),
        "a2_out_b": normal(ks[17], (C,)),
        "ln3_w": 1.0 + 0.1 * jax.random.normal(ks[18], (C,), jnp.float32),
        "ln3_b": 0.1 * jax.random.normal(ks[19], (C,), jnp.float32),
        "g1_w": normal(ks[20], (8 * C, C)),
        "g1_b": normal(ks[21], (8 * C,)),
        "g2_w": normal(ks[22], (C, 4 * C)),
        "g2_b": normal(ks[23], (C,)),
        "co_w": normal(ks[24], (C, C, 1, 1)),
        "co_b": normal(ks[25], (C,)),
    }

    out = unet_attention_block(x, context, p, n_head=n_head, tile_q=64)
    out = jax.block_until_ready(out)

    ref = _reference(x, context, p, n_head)
    assert out.shape == (N, C, H, W)
    max_err = float(jnp.max(jnp.abs(out - ref)))
    mean_err = float(jnp.mean(jnp.abs(out - ref)))
    # bf16 matmul operands + approx reciprocal -> slightly looser tolerance than f32
    assert max_err < 5e-2 and mean_err < 1e-2, (max_err, mean_err)

    print("KERNEL_OK")
</pallas_src>

<mosaic_0001>
module attributes {stable_mosaic.version = 11 : i64} {
  func.func @_prep_kernel(%arg0: i32, %arg1: memref<1x256x64xf32, #tpu.memory_space<vmem>>, %arg2: memref<1x128x32xf32, #tpu.memory_space<vmem>>, %arg3: memref<64x32xf32, #tpu.memory_space<vmem>>, %arg4: memref<32x64xf32, #tpu.memory_space<vmem>>, %arg5: memref<1x64xf32, #tpu.memory_space<vmem>>, %arg6: memref<1x64xf32, #tpu.memory_space<vmem>>, %arg7: memref<64x64xbf16, #tpu.memory_space<vmem>>, %arg8: memref<1x64xf32, #tpu.memory_space<vmem>>, %arg9: memref<1x64xf32, #tpu.memory_space<vmem>>, %arg10: memref<1x64xf32, #tpu.memory_space<vmem>>, %arg11: memref<64x64xbf16, #tpu.memory_space<vmem>>, %arg12: memref<64x64xbf16, #tpu.memory_space<vmem>>, %arg13: memref<32x64xbf16, #tpu.memory_space<vmem>>, %arg14: memref<32x64xbf16, #tpu.memory_space<vmem>>, %arg15: memref<1x1x64xf32, #tpu.memory_space<vmem>>, %arg16: memref<1x1x64xf32, #tpu.memory_space<vmem>>, %arg17: memref<1x256x64xbf16, #tpu.memory_space<vmem>>, %arg18: memref<1x256x64xbf16, #tpu.memory_space<vmem>>, %arg19: memref<1x128x64xbf16, #tpu.memory_space<vmem>>, %arg20: memref<1x128x64xbf16, #tpu.memory_space<vmem>>) attributes {dimension_semantics = [#tpu.dimension_semantics<parallel>], iteration_bounds = array<i64: 2>, scalar_prefetch = 0 : i64, scratch_operands = 0 : i64, tpu.core_type = #tpu.core_type<tc>, window_params = [{transform_indices = @transform_0, window_bounds = array<i64: 1, 256, 64>}, {transform_indices = @transform_1, window_bounds = array<i64: 1, 128, 32>}, {pipeline_mode = #tpu.pipeline_mode<synchronous>, transform_indices = @transform_2, window_bounds = array<i64: 64, 32>}, {pipeline_mode = #tpu.pipeline_mode<synchronous>, transform_indices = @transform_3, window_bounds = array<i64: 32, 64>}, {pipeline_mode = #tpu.pipeline_mode<synchronous>, transform_indices = @transform_4, window_bounds = array<i64: 1, 64>}, {pipeline_mode = #tpu.pipeline_mode<synchronous>, transform_indices = @transform_5, window_bounds = array<i64: 1, 64>}, {pipeline_mode = #tpu.pipeline_mode<synchronous>, transform_indices = @transform_6, window_bounds = array<i64: 64, 64>}, {pipeline_mode = #tpu.pipeline_mode<synchronous>, transform_indices = @transform_7, window_bounds = array<i64: 1, 64>}, {pipeline_mode = #tpu.pipeline_mode<synchronous>, transform_indices = @transform_8, window_bounds = array<i64: 1, 64>}, {pipeline_mode = #tpu.pipeline_mode<synchronous>, transform_indices = @transform_9, window_bounds = array<i64: 1, 64>}, {pipeline_mode = #tpu.pipeline_mode<synchronous>, transform_indices = @transform_10, window_bounds = array<i64: 64, 64>}, {pipeline_mode = #tpu.pipeline_mode<synchronous>, transform_indices = @transform_11, window_bounds = array<i64: 64, 64>}, {pipeline_mode = #tpu.pipeline_mode<synchronous>, transform_indices = @transform_12, window_bounds = array<i64: 32, 64>}, {pipeline_mode = #tpu.pipeline_mode<synchronous>, transform_indices = @transform_13, window_bounds = array<i64: 32, 64>}, {transform_indices = @transform_14, window_bounds = array<i64: 1, 1, 64>}, {transform_indices = @transform_15, window_bounds = array<i64: 1, 1, 64>}, {transform_indices = @transform_16, window_bounds = array<i64: 1, 256, 64>}, {transform_indices = @transform_17, window_bounds = array<i64: 1, 256, 64>}, {transform_indices = @transform_18, window_bounds = array<i64: 1, 128, 64>}, {transform_indices = @transform_19, window_bounds = array<i64: 1, 128, 64>}]} {
    %c0 = arith.constant 0 : index
    %c0_0 = arith.constant 0 : index
    %c0_1 = arith.constant 0 : index
    %0 = vector.load %arg1[%c0, %c0_0, %c0_1] : memref<1x256x64xf32, #tpu.memory_space<vmem>>, vector<1x256x64xf32>
    %1 = vector.shape_cast %0 : vector<1x256x64xf32> to vector<256x64xf32>
    %c0_2 = arith.constant 0 : index
    %c0_3 = arith.constant 0 : index
    %2 = vector.load %arg3[%c0_2, %c0_3] : memref<64x32xf32, #tpu.memory_space<vmem>>, vector<64x32xf32>
    %c0_4 = arith.constant 0 : index
    %c0_5 = arith.constant 0 : index
    %3 = vector.load %arg4[%c0_4, %c0_5] : memref<32x64xf32, #tpu.memory_space<vmem>>, vector<32x64xf32>
    %cst = arith.constant dense<0.000000e+00> : vector<64xf32>
    %4 = vector.multi_reduction <add>, %1, %cst [0] : vector<256x64xf32> to vector<64xf32>
    %5 = vector.shape_cast %4 : vector<64xf32> to vector<1x64xf32>
    %cst_6 = arith.constant dense<0.000000e+00> : vector<1x32xf32>
    %6 = tpu.matmul %5, %2, %cst_6 {dimension_numbers = #tpu.dot_dimension_numbers<[1], [0], [0], [1], [0, 0, 1, 1], [], []>} : vector<1x64xf32>, vector<64x32xf32>, vector<1x32xf32> -> vector<1x32xf32>
    %cst_7 = arith.constant 5.120000e+02 : f32
    %7 = vector.broadcast %cst_7 : f32 to vector<1x32xf32>
    %8 = arith.divf %6, %7 : vector<1x32xf32>
    %cst_8 = arith.constant dense<0.000000e+00> : vector<1x64xf32>
    %9 = tpu.matmul %8, %3, %cst_8 {dimension_numbers = #tpu.dot_dimension_numbers<[1], [0], [0], [1], [0, 0, 1, 1], [], []>} : vector<1x32xf32>, vector<32x64xf32>, vector<1x64xf32> -> vector<1x64xf32>
    %10 = vector.broadcast %9 : vector<1x64xf32> to vector<256x64xf32>
    %11 = arith.subf %1, %10 : vector<256x64xf32>
    %12 = arith.mulf %11, %11 : vector<256x64xf32>
    %cst_9 = arith.constant dense<0.000000e+00> : vector<64xf32>
    %13 = vector.multi_reduction <add>, %12, %cst_9 [0] : vector<256x64xf32> to vector<64xf32>
    %14 = vector.shape_cast %13 : vector<64xf32> to vector<1x64xf32>
    %cst_10 = arith.constant dense<0.000000e+00> : vector<1x32xf32>
    %15 = tpu.matmul %14, %2, %cst_10 {dimension_numbers = #tpu.dot_dimension_numbers<[1], [0], [0], [1], [0, 0, 1, 1], [], []>} : vector<1x64xf32>, vector<64x32xf32>, vector<1x32xf32> -> vector<1x32xf32>
    %cst_11 = arith.constant 5.120000e+02 : f32
    %16 = vector.broadcast %cst_11 : f32 to vector<1x32xf32>
    %17 = arith.divf %15, %16 : vector<1x32xf32>
    %cst_12 = arith.constant 9.99999997E-7 : f32
    %18 = vector.broadcast %cst_12 : f32 to vector<1x32xf32>
    %19 = arith.addf %17, %18 : vector<1x32xf32>
    %20 = math.rsqrt %19 : vector<1x32xf32>
    %cst_13 = arith.constant dense<0.000000e+00> : vector<1x64xf32>
    %21 = tpu.matmul %20, %3, %cst_13 {dimension_numbers = #tpu.dot_dimension_numbers<[1], [0], [0], [1], [0, 0, 1, 1], [], []>} : vector<1x32xf32>, vector<32x64xf32>, vector<1x64xf32> -> vector<1x64xf32>
    %c0_14 = arith.constant 0 : index
    %c0_15 = arith.constant 0 : index
    %22 = vector.load %arg5[%c0_14, %c0_15] : memref<1x64xf32, #tpu.memory_space<vmem>>, vector<1x64xf32>
    %23 = arith.mulf %21, %22 : vector<1x64xf32>
    %c0_16 = arith.constant 0 : index
    %c0_17 = arith.constant 0 : index
    %24 = vector.load %arg6[%c0_16, %c0_17] : memref<1x64xf32, #tpu.memory_space<vmem>>, vector<1x64xf32>
    %25 = arith.mulf %9, %23 : vector<1x64xf32>
    %26 = arith.subf %24, %25 : vector<1x64xf32>
    %c0_18 = arith.constant 0 : index
    %c0_19 = arith.constant 0 : index
    %c0_20 = arith.constant 0 : index
    %27 = vector.load %arg15[%c0_18, %c0_19, %c0_20] : memref<1x1x64xf32, #tpu.memory_space<vmem>>, vector<1x1x64xf32>
    %28 = vector.shape_cast %27 : vector<1x1x64xf32> to vector<1x64xf32>
    %29 = vector.shape_cast %23 : vector<1x64xf32> to vector<1x1x64xf32>
    tpu.vector_store %arg15[%c0_18, %c0_19, %c0_20], %29 {strides = array<i32>} : memref<1x1x64xf32, #tpu.memory_space<vmem>>, vector<1x1x64xf32>,
    %c0_21 = arith.constant 0 : index
    %c0_22 = arith.constant 0 : index
    %c0_23 = arith.constant 0 : index
    %30 = vector.load %arg16[%c0_21, %c0_22, %c0_23] : memref<1x1x64xf32, #tpu.memory_space<vmem>>, vector<1x1x64xf32>
    %31 = vector.shape_cast %30 : vector<1x1x64xf32> to vector<1x64xf32>
    %32 = vector.shape_cast %26 : vector<1x64xf32> to vector<1x1x64xf32>
    tpu.vector_store %arg16[%c0_21, %c0_22, %c0_23], %32 {strides = array<i32>} : memref<1x1x64xf32, #tpu.memory_space<vmem>>, vector<1x1x64xf32>,
    %33 = vector.broadcast %23 : vector<1x64xf32> to vector<256x64xf32>
    %34 = arith.mulf %1, %33 : vector<256x64xf32>
    %35 = vector.broadcast %26 : vector<1x64xf32> to vector<256x64xf32>
    %36 = arith.addf %34, %35 : vector<256x64xf32>
    %37 = arith.truncf %36 : vector<256x64xf32> to vector<256x64xbf16>
    %c0_24 = arith.constant 0 : index
    %c0_25 = arith.constant 0 : index
    %38 = vector.load %arg7[%c0_24, %c0_25] : memref<64x64xbf16, #tpu.memory_space<vmem>>, vector<64x64xbf16>
    %cst_26 = arith.constant dense<0.000000e+00> : vector<256x64xf32>
    %39 = tpu.matmul %37, %38, %cst_26 {dimension_numbers = #tpu.dot_dimension_numbers<[1], [0], [0], [1], [0, 0, 1, 1], [], []>} : vector<256x64xbf16>, vector<64x64xbf16>, vector<256x64xf32> -> vector<256x64xf32>
    %c0_27 = arith.constant 0 : index
    %c0_28 = arith.constant 0 : index
    %40 = vector.load %arg8[%c0_27, %c0_28] : memref<1x64xf32, #tpu.memory_space<vmem>>, vector<1x64xf32>
    %41 = vector.broadcast %40 : vector<1x64xf32> to vector<256x64xf32>
    %42 = arith.addf %39, %41 : vector<256x64xf32>
    %c0_29 = arith.constant 0 : index
    %c0_30 = arith.constant 0 : index
    %43 = vector.load %arg9[%c0_29, %c0_30] : memref<1x64xf32, #tpu.memory_space<vmem>>, vector<1x64xf32>
    %c0_31 = arith.constant 0 : index
    %c0_32 = arith.constant 0 : index
    %44 = vector.load %arg10[%c0_31, %c0_32] : memref<1x64xf32, #tpu.memory_space<vmem>>, vector<1x64xf32>
    %cst_33 = arith.constant dense<0.000000e+00> : vector<256xf32>
    %45 = vector.multi_reduction <add>, %42, %cst_33 [1] : vector<256x64xf32> to vector<256xf32>
    %46 = vector.shape_cast %45 : vector<256xf32> to vector<256x1xf32>
    %cst_34 = arith.constant 6.400000e+01 : f32
    %47 = vector.broadcast %cst_34 : f32 to vector<256x1xf32>
    %48 = arith.divf %46, %47 : vector<256x1xf32>
    %49 = vector.broadcast %48 : vector<256x1xf32> to vector<256x64xf32>
    %50 = arith.subf %42, %49 : vector<256x64xf32>
    %51 = arith.mulf %50, %50 : vector<256x64xf32>
    %cst_35 = arith.constant dense<0.000000e+00> : vector<256xf32>
    %52 = vector.multi_reduction <add>, %51, %cst_35 [1] : vector<256x64xf32> to vector<256xf32>
    %53 = vector.shape_cast %52 : vector<256xf32> to vector<256x1xf32>
    %cst_36 = arith.constant 6.400000e+01 : f32
    %54 = vector.broadcast %cst_36 : f32 to vector<256x1xf32>
    %55 = arith.divf %53, %54 : vector<256x1xf32>
    %cst_37 = arith.constant 9.99999974E-6 : f32
    %56 = vector.broadcast %cst_37 : f32 to vector<256x1xf32>
    %57 = arith.addf %55, %56 : vector<256x1xf32>
    %58 = math.rsqrt %57 : vector<256x1xf32>
    %59 = vector.broadcast %58 : vector<256x1xf32> to vector<256x64xf32>
    %60 = arith.mulf %50, %59 : vector<256x64xf32>
    %61 = vector.broadcast %43 : vector<1x64xf32> to vector<256x64xf32>
    %62 = arith.mulf %60, %61 : vector<256x64xf32>
    %63 = vector.broadcast %44 : vector<1x64xf32> to vector<256x64xf32>
    %64 = arith.addf %62, %63 : vector<256x64xf32>
    %65 = arith.truncf %64 : vector<256x64xf32> to vector<256x64xbf16>
    %c0_38 = arith.constant 0 : index
    %c0_39 = arith.constant 0 : index
    %66 = vector.load %arg11[%c0_38, %c0_39] : memref<64x64xbf16, #tpu.memory_space<vmem>>, vector<64x64xbf16>
    %cst_40 = arith.constant dense<0.000000e+00> : vector<256x64xf32>
    %67 = tpu.matmul %65, %66, %cst_40 {dimension_numbers = #tpu.dot_dimension_numbers<[1], [0], [0], [1], [0, 0, 1, 1], [], []>} : vector<256x64xbf16>, vector<64x64xbf16>, vector<256x64xf32> -> vector<256x64xf32>
    %68 = arith.truncf %67 : vector<256x64xf32> to vector<256x64xbf16>
    %c0_41 = arith.constant 0 : index
    %c0_42 = arith.constant 0 : index
    %c0_43 = arith.constant 0 : index
    %69 = vector.load %arg17[%c0_41, %c0_42, %c0_43] : memref<1x256x64xbf16, #tpu.memory_space<vmem>>, vector<1x256x64xbf16>
    %70 = vector.shape_cast %69 : vector<1x256x64xbf16> to vector<256x64xbf16>
    %71 = vector.shape_cast %68 : vector<256x64xbf16> to vector<1x256x64xbf16>
    tpu.vector_store %arg17[%c0_41, %c0_42, %c0_43], %71 {strides = array<i32>} : memref<1x256x64xbf16, #tpu.memory_space<vmem>>, vector<1x256x64xbf16>,
    %c0_44 = arith.constant 0 : index
    %c0_45 = arith.constant 0 : index
    %72 = vector.load %arg12[%c0_44, %c0_45] : memref<64x64xbf16, #tpu.memory_space<vmem>>, vector<64x64xbf16>
    %cst_46 = arith.constant dense<0.000000e+00> : vector<256x64xf32>
    %73 = tpu.matmul %65, %72, %cst_46 {dimension_numbers = #tpu.dot_dimension_numbers<[1], [0], [0], [1], [0, 0, 1, 1], [], []>} : vector<256x64xbf16>, vector<64x64xbf16>, vector<256x64xf32> -> vector<256x64xf32>
    %74 = arith.truncf %73 : vector<256x64xf32> to vector<256x64xbf16>
    %c0_47 = arith.constant 0 : index
    %c0_48 = arith.constant 0 : index
    %c0_49 = arith.constant 0 : index
    %75 = vector.load %arg18[%c0_47, %c0_48, %c0_49] : memref<1x256x64xbf16, #tpu.memory_space<vmem>>, vector<1x256x64xbf16>
    %76 = vector.shape_cast %75 : vector<1x256x64xbf16> to vector<256x64xbf16>
    %77 = vector.shape_cast %74 : vector<256x64xbf16> to vector<1x256x64xbf16>
    tpu.vector_store %arg18[%c0_47, %c0_48, %c0_49], %77 {strides = array<i32>} : memref<1x256x64xbf16, #tpu.memory_space<vmem>>, vector<1x256x64xbf16>,
    %c0_50 = arith.constant 0 : index
    %c0_51 = arith.constant 0 : index
    %c0_52 = arith.constant 0 : index
    %78 = vector.load %arg2[%c0_50, %c0_51, %c0_52] : memref<1x128x32xf32, #tpu.memory_space<vmem>>, vector<1x128x32xf32>
    %79 = vector.shape_cast %78 : vector<1x128x32xf32> to vector<128x32xf32>
    %80 = arith.truncf %79 : vector<128x32xf32> to vector<128x32xbf16>
    %c0_53 = arith.constant 0 : index
    %c0_54 = arith.constant 0 : index
    %81 = vector.load %arg13[%c0_53, %c0_54] : memref<32x64xbf16, #tpu.memory_space<vmem>>, vector<32x64xbf16>
    %cst_55 = arith.constant dense<0.000000e+00> : vector<128x64xf32>
    %82 = tpu.matmul %80, %81, %cst_55 {dimension_numbers = #tpu.dot_dimension_numbers<[1], [0], [0], [1], [0, 0, 1, 1], [], []>} : vector<128x32xbf16>, vector<32x64xbf16>, vector<128x64xf32> -> vector<128x64xf32>
    %83 = arith.truncf %82 : vector<128x64xf32> to vector<128x64xbf16>
    %c0_56 = arith.constant 0 : index
    %c0_57 = arith.constant 0 : index
    %c0_58 = arith.constant 0 : index
    %84 = vector.load %arg19[%c0_56, %c0_57, %c0_58] : memref<1x128x64xbf16, #tpu.memory_space<vmem>>, vector<1x128x64xbf16>
    %85 = vector.shape_cast %84 : vector<1x128x64xbf16> to vector<128x64xbf16>
    %86 = vector.shape_cast %83 : vector<128x64xbf16> to vector<1x128x64xbf16>
    tpu.vector_store %arg19[%c0_56, %c0_57, %c0_58], %86 {strides = array<i32>} : memref<1x128x64xbf16, #tpu.memory_space<vmem>>, vector<1x128x64xbf16>,
    %c0_59 = arith.constant 0 : index
    %c0_60 = arith.constant 0 : index
    %87 = vector.load %arg14[%c0_59, %c0_60] : memref<32x64xbf16, #tpu.memory_space<vmem>>, vector<32x64xbf16>
    %cst_61 = arith.constant dense<0.000000e+00> : vector<128x64xf32>
    %88 = tpu.matmul %80, %87, %cst_61 {dimension_numbers = #tpu.dot_dimension_numbers<[1], [0], [0], [1], [0, 0, 1, 1], [], []>} : vector<128x32xbf16>, vector<32x64xbf16>, vector<128x64xf32> -> vector<128x64xf32>
    %89 = arith.truncf %88 : vector<128x64xf32> to vector<128x64xbf16>
    %c0_62 = arith.constant 0 : index
    %c0_63 = arith.constant 0 : index
    %c0_64 = arith.constant 0 : index
    %90 = vector.load %arg20[%c0_62, %c0_63, %c0_64] : memref<1x128x64xbf16, #tpu.memory_space<vmem>>, vector<1x128x64xbf16>
    %91 = vector.shape_cast %90 : vector<1x128x64xbf16> to vector<128x64xbf16>
    %92 = vector.shape_cast %89 : vector<128x64xbf16> to vector<1x128x64xbf16>
    tpu.vector_store %arg20[%c0_62, %c0_63, %c0_64], %92 {strides = array<i32>} : memref<1x128x64xbf16, #tpu.memory_space<vmem>>, vector<1x128x64xbf16>,
    return
  }
  func.func @transform_0(%arg0: i32) -> (i32, i32, i32) {
    %c0_i32 = arith.constant 0 : i32
    %c0_i32_0 = arith.constant 0 : i32
    %c0_i32_1 = arith.constant 0 : i32
    return %arg0, %c0_i32, %c0_i32_0 : i32, i32, i32
  }
  func.func @transform_1(%arg0: i32) -> (i32, i32, i32) {
    %c0_i32 = arith.constant 0 : i32
    %c0_i32_0 = arith.constant 0 : i32
    %c0_i32_1 = arith.constant 0 : i32
    return %arg0, %c0_i32, %c0_i32_0 : i32, i32, i32
  }
  func.func @transform_2(%arg0: i32) -> (i32, i32) {
    %c0_i32 = arith.constant 0 : i32
    %c0_i32_0 = arith.constant 0 : i32
    %c0_i32_1 = arith.constant 0 : i32
    return %c0_i32, %c0_i32_0 : i32, i32
  }
  func.func @transform_3(%arg0: i32) -> (i32, i32) {
    %c0_i32 = arith.constant 0 : i32
    %c0_i32_0 = arith.constant 0 : i32
    %c0_i32_1 = arith.constant 0 : i32
    return %c0_i32, %c0_i32_0 : i32, i32
  }
  func.func @transform_4(%arg0: i32) -> (i32, i32) {
    %c0_i32 = arith.constant 0 : i32
    %c0_i32_0 = arith.constant 0 : i32
    %c0_i32_1 = arith.constant 0 : i32
    return %c0_i32, %c0_i32_0 : i32, i32
  }
  func.func @transform_5(%arg0: i32) -> (i32, i32) {
    %c0_i32 = arith.constant 0 : i32
    %c0_i32_0 = arith.constant 0 : i32
    %c0_i32_1 = arith.constant 0 : i32
    return %c0_i32, %c0_i32_0 : i32, i32
  }
  func.func @transform_6(%arg0: i32) -> (i32, i32) {
    %c0_i32 = arith.constant 0 : i32
    %c0_i32_0 = arith.constant 0 : i32
    %c0_i32_1 = arith.constant 0 : i32
    return %c0_i32, %c0_i32_0 : i32, i32
  }
  func.func @transform_7(%arg0: i32) -> (i32, i32) {
    %c0_i32 = arith.constant 0 : i32
    %c0_i32_0 = arith.constant 0 : i32
    %c0_i32_1 = arith.constant 0 : i32
    return %c0_i32, %c0_i32_0 : i32, i32
  }
  func.func @transform_8(%arg0: i32) -> (i32, i32) {
    %c0_i32 = arith.constant 0 : i32
    %c0_i32_0 = arith.constant 0 : i32
    %c0_i32_1 = arith.constant 0 : i32
    return %c0_i32, %c0_i32_0 : i32, i32
  }
  func.func @transform_9(%arg0: i32) -> (i32, i32) {
    %c0_i32 = arith.constant 0 : i32
    %c0_i32_0 = arith.constant 0 : i32
    %c0_i32_1 = arith.constant 0 : i32
    return %c0_i32, %c0_i32_0 : i32, i32
  }
  func.func @transform_10(%arg0: i32) -> (i32, i32) {
    %c0_i32 = arith.constant 0 : i32
    %c0_i32_0 = arith.constant 0 : i32
    %c0_i32_1 = arith.constant 0 : i32
    return %c0_i32, %c0_i32_0 : i32, i32
  }
  func.func @transform_11(%arg0: i32) -> (i32, i32) {
    %c0_i32 = arith.constant 0 : i32
    %c0_i32_0 = arith.constant 0 : i32
    %c0_i32_1 = arith.constant 0 : i32
    return %c0_i32, %c0_i32_0 : i32, i32
  }
  func.func @transform_12(%arg0: i32) -> (i32, i32) {
    %c0_i32 = arith.constant 0 : i32
    %c0_i32_0 = arith.constant 0 : i32
    %c0_i32_1 = arith.constant 0 : i32
    return %c0_i32, %c0_i32_0 : i32, i32
  }
  func.func @transform_13(%arg0: i32) -> (i32, i32) {
    %c0_i32 = arith.constant 0 : i32
    %c0_i32_0 = arith.constant 0 : i32
    %c0_i32_1 = arith.constant 0 : i32
    return %c0_i32, %c0_i32_0 : i32, i32
  }
  func.func @transform_14(%arg0: i32) -> (i32, i32, i32) {
    %c0_i32 = arith.constant 0 : i32
    %c0_i32_0 = arith.constant 0 : i32
    %c0_i32_1 = arith.constant 0 : i32
    return %arg0, %c0_i32, %c0_i32_0 : i32, i32, i32
  }
  func.func @transform_15(%arg0: i32) -> (i32, i32, i32) {
    %c0_i32 = arith.constant 0 : i32
    %c0_i32_0 = arith.constant 0 : i32
    %c0_i32_1 = arith.constant 0 : i32
    return %arg0, %c0_i32, %c0_i32_0 : i32, i32, i32
  }
  func.func @transform_16(%arg0: i32) -> (i32, i32, i32) {
    %c0_i32 = arith.constant 0 : i32
    %c0_i32_0 = arith.constant 0 : i32
    %c0_i32_1 = arith.constant 0 : i32
    return %arg0, %c0_i32, %c0_i32_0 : i32, i32, i32
  }
  func.func @transform_17(%arg0: i32) -> (i32, i32, i32) {
    %c0_i32 = arith.constant 0 : i32
    %c0_i32_0 = arith.constant 0 : i32
    %c0_i32_1 = arith.constant 0 : i32
    return %arg0, %c0_i32, %c0_i32_0 : i32, i32, i32
  }
  func.func @transform_18(%arg0: i32) -> (i32, i32, i32) {
    %c0_i32 = arith.constant 0 : i32
    %c0_i32_0 = arith.constant 0 : i32
    %c0_i32_1 = arith.constant 0 : i32
    return %arg0, %c0_i32, %c0_i32_0 : i32, i32, i32
  }
  func.func @transform_19(%arg0: i32) -> (i32, i32, i32) {
    %c0_i32 = arith.constant 0 : i32
    %c0_i32_0 = arith.constant 0 : i32
    %c0_i32_1 = arith.constant 0 : i32
    return %arg0, %c0_i32, %c0_i32_0 : i32, i32, i32
  }
}

</mosaic_0001>

<llo_original>
// kernel: tpu_custom_call.1
$region0: #{tpu_custom_call.1}
  #allocation0 [shape = 'u32[]', space=smem, size = 0x4, offset = 0x4, fixed_abs, tag = 'smem constant byte address 0x4 - core index']
  #allocation1 [shape = 'u32[144,128]{1,0:T(1,128)}', space=vmem, size = 0x12000, scoped, tag = 'internal scratch']
  %s0 = inlined_call_operand.vmem [shape: f32[2,256,64], index: 0, kind: input, shape index: {}]
  %s1 = inlined_call_operand.vmem [shape: f32[2,128,32], index: 1, kind: input, shape index: {}]
  %s2 = inlined_call_operand.vmem [shape: f32[64,32], index: 2, kind: input, shape index: {}]
  %s3 = inlined_call_operand.vmem [shape: f32[32,64], index: 3, kind: input, shape index: {}]
  %s4 = inlined_call_operand.vmem [shape: f32[1,64], index: 4, kind: input, shape index: {}]
  %s5 = inlined_call_operand.vmem [shape: f32[1,64], index: 5, kind: input, shape index: {}]
  %s6 = inlined_call_operand.vmem [shape: bf16[64,64], index: 6, kind: input, shape index: {}]
  %s7 = inlined_call_operand.vmem [shape: f32[1,64], index: 7, kind: input, shape index: {}]
  %s8 = inlined_call_operand.vmem [shape: f32[1,64], index: 8, kind: input, shape index: {}]
  %s9 = inlined_call_operand.vmem [shape: f32[1,64], index: 9, kind: input, shape index: {}]
  %s10 = inlined_call_operand.vmem [shape: bf16[64,64], index: 10, kind: input, shape index: {}]
  %s11 = inlined_call_operand.vmem [shape: bf16[64,64], index: 11, kind: input, shape index: {}]
  %s12 = inlined_call_operand.vmem [shape: bf16[32,64], index: 12, kind: input, shape index: {}]
  %s13 = inlined_call_operand.vmem [shape: bf16[32,64], index: 13, kind: input, shape index: {}]
  %s14 = inlined_call_operand.hbm [shape: f32[2,1,64], index: 14, kind: output, shape index: {0}]
  %s15 = inlined_call_operand.hbm [shape: f32[2,1,64], index: 15, kind: output, shape index: {1}]
  %s16 = inlined_call_operand.vmem [shape: bf16[2,256,64], index: 16, kind: output, shape index: {2}]
  %s17 = inlined_call_operand.vmem [shape: bf16[2,256,64], index: 17, kind: output, shape index: {3}]
  %s18 = inlined_call_operand.vmem [shape: bf16[2,128,64], index: 18, kind: output, shape index: {4}]
  %s19 = inlined_call_operand.vmem [shape: bf16[2,128,64], index: 19, kind: output, shape index: {5}]
  %20 = xla_tuple %s14, %s15, %s16, %s17, %s18, %s19
  %s21 = sld [smem:[#allocation0]]
  $region129: #{tpu_custom_call.1} parent=0
    _
  %s23 = ssub.s32 1, %s21
  %s24 = scalar_select 0, %s23, %s21
  $region1: #{tpu_custom_call.1} parent=0
    #allocation2 [shape = 'u8[1024]{0}', space=vmem, size = 0x400, scoped, tag = 'output window, operand 0']
    #allocation3 [shape = 's32[2]{0}', space=sflag, size = 0x8, scoped, tag = 'scoped memory for tpu_custom_call.1']
    #allocation4 [shape = 'u8[1024]{0}', space=vmem, size = 0x400, scoped, tag = 'output window, operand 1']
    #allocation5 [shape = 's32[2]{0}', space=sflag, size = 0x8, scoped, tag = 'scoped memory for tpu_custom_call.1']
    %25 = vsyncpa [#allocation3], 0
    %s26 = scalar_lea.sflag [#allocation3], 1
    %27 = vsyncpa %s26, 0
    %28 = vsyncpa [#allocation5], 0
    %s29 = scalar_lea.sflag [#allocation5], 1
    %30 = vsyncpa %s29, 0
    loop: start=0, step=1, limit=4
    $region2: #{tpu_custom_call.1} parent=1 // loop_pre_header
      _
    $region3: #{tpu_custom_call.1} parent=1 // loop_header
      %s32 = sphi 0, %s36
      %p33 = scmp.ge.s32.totalorder %s32, 4
      %s42 = sphi 0, %s44
      %s45 = sphi 0, %s42
      %s46 = sphi 0, %s45
      %s62 = sphi 0, %s46
      %s68 = sphi 0, %s70
      %s71 = sphi 0, %s68
      %s72 = sphi 0, %s71
      %s88 = sphi 0, %s72
      %s92 = sphi 0, %s92
      %s94 = sphi 0, %s92
      %s95 = sphi 0, %s94
      %s109 = sphi 0, %s95
      %s113 = sphi 0, %s113
      %s115 = sphi 0, %s113
      %s116 = sphi 0, %s115
      %s130 = sphi 0, %s116
      %s134 = sphi 0, %s134
      %s136 = sphi 0, %s134
      %s137 = sphi 0, %s136
      %s151 = sphi 0, %s137
      %s155 = sphi 0, %s155
      %s157 = sphi 0, %s155
      %s158 = sphi 0, %s157
      %s172 = sphi 0, %s158
      %s176 = sphi 0, %s176
      %s178 = sphi 0, %s176
      %s179 = sphi 0, %s178
      %s193 = sphi 0, %s179
      %s197 = sphi 0, %s197
      %s199 = sphi 0, %s197
      %s200 = sphi 0, %s199
      %s214 = sphi 0, %s200
      %s218 = sphi 0, %s218
      %s220 = sphi 0, %s218
      %s221 = sphi 0, %s220
      %s235 = sphi 0, %s221
      %s239 = sphi 0, %s239
      %s241 = sphi 0, %s239
      %s242 = sphi 0, %s241
      %s256 = sphi 0, %s242
      %s260 = sphi 0, %s260
      %s262 = sphi 0, %s260
      %s263 = sphi 0, %s262
      %s277 = sphi 0, %s263
      %s281 = sphi 0, %s281
      %s283 = sphi 0, %s281
      %s284 = sphi 0, %s283
      %s298 = sphi 0, %s284
      %s302 = sphi 0, %s302
      %s304 = sphi 0, %s302
      %s305 = sphi 0, %s304
      %s319 = sphi 0, %s305
      %s323 = sphi 0, %s323
      %s325 = sphi 0, %s323
      %s326 = sphi 0, %s325
      %s340 = sphi 0, %s326
      %s346 = sphi 0, %s348
      %s349 = sphi 0, %s346
      %s350 = sphi 0, %s349
      %s366 = sphi 0, %s350
      %s372 = sphi 0, %s374
      %s375 = sphi 0, %s372
      %s376 = sphi 0, %s375
      %s392 = sphi 0, %s376
      %s398 = sphi 0, %s400
      %s401 = sphi 0, %s398
      %s402 = sphi 0, %s401
      %s418 = sphi 0, %s402
      %s424 = sphi 0, %s426
      %s427 = sphi 0, %s424
      %s428 = sphi 0, %s427
      %s444 = sphi 0, %s428
      %s450 = sphi 0, %s452
      %s453 = sphi 0, %s450
      %s454 = sphi 0, %s453
      %s470 = sphi 0, %s454
      %s476 = sphi 0, %s478
      %s479 = sphi 0, %s476
      %s480 = sphi 0, %s479
      %s496 = sphi 0, %s480
    $region4: #{tpu_custom_call.1} parent=1 // loop_header_branch
      %35 = sbr.rel (%p33) target = $region8
    $region5: #{tpu_custom_call.1} parent=1 // loop_body
      %s37 = ssub.s32 %s32, 1
      %s38 = ssub.s32 %s32, 2
      %s39 = sadd.s32 %s32, 1
      %s40 = ssub.s32 %s32, %s39
      %p41 = scmp.eq.s32.totalorder %s40, 0
      %s43 = sadd.s32 %s42, 1
      %s44 = scalar_select %p41, %s42, %s43
      %p47 = pneg %p41
      %p48 = scmp.eq.s32.totalorder %s32, 1
      %p49 = por %p47, %p48
      %p50 = scmp.ne.s32.totalorder %s42, %s45
      %p51 = scmp.eq.s32.totalorder %s32, 0
      %p52 = por %p50, %p51
      %p53 = scmp.ne.s32.totalorder %s42, %s45
      %p54 = scmp.eq.s32.totalorder %s37, 1
      %p55 = por %p53, %p54
      %p56 = scmp.ne.s32.totalorder %s45, %s46
      %p57 = scmp.eq.s32.totalorder %s37, 0
      %p58 = por %p56, %p57
      %p59 = scmp.ne.s32.totalorder %s45, %s46
      %p60 = scmp.eq.s32.totalorder %s38, 1
      %p61 = por %p59, %p60
      %p63 = scmp.ne.s32.totalorder %s46, %s62
      %p64 = scmp.eq.s32.totalorder %s38, 0
      %p65 = por %p63, %p64
      %s66 = ssub.s32 %s32, %s39
      %p67 = scmp.eq.s32.totalorder %s66, 0
      %s69 = sadd.s32 %s68, 1
      %s70 = scalar_select %p67, %s68, %s69
      %p73 = pneg %p67
      %p74 = scmp.eq.s32.totalorder %s32, 1
      %p75 = por %p73, %p74
      %p76 = scmp.ne.s32.totalorder %s68, %s71
      %p77 = scmp.eq.s32.totalorder %s32, 0
      %p78 = por %p76, %p77
      %p79 = scmp.ne.s32.totalorder %s68, %s71
      %p80 = scmp.eq.s32.totalorder %s37, 1
      %p81 = por %p79, %p80
      %p82 = scmp.ne.s32.totalorder %s71, %s72
      %p83 = scmp.eq.s32.totalorder %s37, 0
      %p84 = por %p82, %p83
      %p85 = scmp.ne.s32.totalorder %s71, %s72
      %p86 = scmp.eq.s32.totalorder %s38, 1
      %p87 = por %p85, %p86
      %p89 = scmp.ne.s32.totalorder %s72, %s88
      %p90 = scmp.eq.s32.totalorder %s38, 0
      %p91 = por %p89, %p90
      %s93 = sadd.s32 %s92, 1
      %p96 = scmp.eq.s32.totalorder %s32, 1
      %p97 = scmp.ne.s32.totalorder %s92, %s94
      %p98 = scmp.eq.s32.totalorder %s32, 0
      %p99 = por %p97, %p98
      %p100 = scmp.ne.s32.totalorder %s92, %s94
      %p101 = scmp.eq.s32.totalorder %s37, 1
      %p102 = por %p100, %p101
      %p103 = scmp.ne.s32.totalorder %s94, %s95
      %p104 = scmp.eq.s32.totalorder %s37, 0
      %p105 = por %p103, %p104
      %p106 = scmp.ne.s32.totalorder %s94, %s95
      %p107 = scmp.eq.s32.totalorder %s38, 1
      %p108 = por %p106, %p107
      %p110 = scmp.ne.s32.totalorder %s95, %s109
      %p111 = scmp.eq.s32.totalorder %s38, 0
      %p112 = por %p110, %p111
      %s114 = sadd.s32 %s113, 1
      %p117 = scmp.eq.s32.totalorder %s32, 1
      %p118 = scmp.ne.s32.totalorder %s113, %s115
      %p119 = scmp.eq.s32.totalorder %s32, 0
      %p120 = por %p118, %p119
      %p121 = scmp.ne.s32.totalorder %s113, %s115
      %p122 = scmp.eq.s32.totalorder %s37, 1
      %p123 = por %p121, %p122
      %p124 = scmp.ne.s32.totalorder %s115, %s116
      %p125 = scmp.eq.s32.totalorder %s37, 0
      %p126 = por %p124, %p125
      %p127 = scmp.ne.s32.totalorder %s115, %s116
      %p128 = scmp.eq.s32.totalorder %s38, 1
      %p129 = por %p127, %p128
      %p131 = scmp.ne.s32.totalorder %s116, %s130
      %p132 = scmp.eq.s32.totalorder %s38, 0
      %p133 = por %p131, %p132
      %s135 = sadd.s32 %s134, 1
      %p138 = scmp.eq.s32.totalorder %s32, 1
      %p139 = scmp.ne.s32.totalorder %s134, %s136
      %p140 = scmp.eq.s32.totalorder %s32, 0
      %p141 = por %p139, %p140
      %p142 = scmp.ne.s32.totalorder %s134, %s136
      %p143 = scmp.eq.s32.totalorder %s37, 1
      %p144 = por %p142, %p143
      %p145 = scmp.ne.s32.totalorder %s136, %s137
      %p146 = scmp.eq.s32.totalorder %s37, 0
      %p147 = por %p145, %p146
      %p148 = scmp.ne.s32.totalorder %s136, %s137
      %p149 = scmp.eq.s32.totalorder %s38, 1
      %p150 = por %p148, %p149
      %p152 = scmp.ne.s32.totalorder %s137, %s151
      %p153 = scmp.eq.s32.totalorder %s38, 0
      %p154 = por %p152, %p153
      %s156 = sadd.s32 %s155, 1
      %p159 = scmp.eq.s32.totalorder %s32, 1
      %p160 = scmp.ne.s32.totalorder %s155, %s157
      %p161 = scmp.eq.s32.totalorder %s32, 0
      %p162 = por %p160, %p161
      %p163 = scmp.ne.s32.totalorder %s155, %s157
      %p164 = scmp.eq.s32.totalorder %s37, 1
      %p165 = por %p163, %p164
      %p166 = scmp.ne.s32.totalorder %s157, %s158
      %p167 = scmp.eq.s32.totalorder %s37, 0
      %p168 = por %p166, %p167
      %p169 = scmp.ne.s32.totalorder %s157, %s158
      %p170 = scmp.eq.s32.totalorder %s38, 1
      %p171 = por %p169, %p170
      %p173 = scmp.ne.s32.totalorder %s158, %s172
      %p174 = scmp.eq.s32.totalorder %s38, 0
      %p175 = por %p173, %p174
      %s177 = sadd.s32 %s176, 1
      %p180 = scmp.eq.s32.totalorder %s32, 1
      %p181 = scmp.ne.s32.totalorder %s176, %s178
      %p182 = scmp.eq.s32.totalorder %s32, 0
      %p183 = por %p181, %p182
      %p184 = scmp.ne.s32.totalorder %s176, %s178
      %p185 = scmp.eq.s32.totalorder %s37, 1
      %p186 = por %p184, %p185
      %p187 = scmp.ne.s32.totalorder %s178, %s179
      %p188 = scmp.eq.s32.totalorder %s37, 0
      %p189 = por %p187, %p188
      %p190 = scmp.ne.s32.totalorder %s178, %s179
      %p191 = scmp.eq.s32.totalorder %s38, 1
      %p192 = por %p190, %p191
      %p194 = scmp.ne.s32.totalorder %s179, %s193
      %p195 = scmp.eq.s32.totalorder %s38, 0
      %p196 = por %p194, %p195
      %s198 = sadd.s32 %s197, 1
      %p201 = scmp.eq.s32.totalorder %s32, 1
      %p202 = scmp.ne.s32.totalorder %s197, %s199
      %p203 = scmp.eq.s32.totalorder %s32, 0
      %p204 = por %p202, %p203
      %p205 = scmp.ne.s32.totalorder %s197, %s199
      %p206 = scmp.eq.s32.totalorder %s37, 1
      %p207 = por %p205, %p206
      %p208 = scmp.ne.s32.totalorder %s199, %s200
      %p209 = scmp.eq.s32.totalorder %s37, 0
      %p210 = por %p208, %p209
      %p211 = scmp.ne.s32.totalorder %s199, %s200
      %p212 = scmp.eq.s32.totalorder %s38, 1
      %p213 = por %p211, %p212
      %p215 = scmp.ne.s32.totalorder %s200, %s214
      %p216 = scmp.eq.s32.totalorder %s38, 0
      %p217 = por %p215, %p216
      %s219 = sadd.s32 %s218, 1
      %p222 = scmp.eq.s32.totalorder %s32, 1
      %p223 = scmp.ne.s32.totalorder %s218, %s220
      %p224 = scmp.eq.s32.totalorder %s32, 0
      %p225 = por %p223, %p224
      %p226 = scmp.ne.s32.totalorder %s218, %s220
      %p227 = scmp.eq.s32.totalorder %s37, 1
      %p228 = por %p226, %p227
      %p229 = scmp.ne.s32.totalorder %s220, %s221
      %p230 = scmp.eq.s32.totalorder %s37, 0
      %p231 = por %p229, %p230
      %p232 = scmp.ne.s32.totalorder %s220, %s221
      %p233 = scmp.eq.s32.totalorder %s38, 1
      %p234 = por %p232, %p233
      %p236 = scmp.ne.s32.totalorder %s221, %s235
      %p237 = scmp.eq.s32.totalorder %s38, 0
      %p238 = por %p236, %p237
      %s240 = sadd.s32 %s239, 1
      %p243 = scmp.eq.s32.totalorder %s32, 1
      %p244 = scmp.ne.s32.totalorder %s239, %s241
      %p245 = scmp.eq.s32.totalorder %s32, 0
      %p246 = por %p244, %p245
      %p247 = scmp.ne.s32.totalorder %s239, %s241
      %p248 = scmp.eq.s32.totalorder %s37, 1
      %p249 = por %p247, %p248
      %p250 = scmp.ne.s32.totalorder %s241, %s242
      %p251 = scmp.eq.s32.totalorder %s37, 0
      %p252 = por %p250, %p251
      %p253 = scmp.ne.s32.totalorder %s241, %s242
      %p254 = scmp.eq.s32.totalorder %s38, 1
      %p255 = por %p253, %p254
      %p257 = scmp.ne.s32.totalorder %s242, %s256
      %p258 = scmp.eq.s32.totalorder %s38, 0
      %p259 = por %p257, %p258
      %s261 = sadd.s32 %s260, 1
      %p264 = scmp.eq.s32.totalorder %s32, 1
      %p265 = scmp.ne.s32.totalorder %s260, %s262
      %p266 = scmp.eq.s32.totalorder %s32, 0
      %p267 = por %p265, %p266
      %p268 = scmp.ne.s32.totalorder %s260, %s262
      %p269 = scmp.eq.s32.totalorder %s37, 1
      %p270 = por %p268, %p269
      %p271 = scmp.ne.s32.totalorder %s262, %s263
      %p272 = scmp.eq.s32.totalorder %s37, 0
      %p273 = por %p271, %p272
      %p274 = scmp.ne.s32.totalorder %s262, %s263
      %p275 = scmp.eq.s32.totalorder %s38, 1
      %p276 = por %p274, %p275
      %p278 = scmp.ne.s32.totalorder %s263, %s277
      %p279 = scmp.eq.s32.totalorder %s38, 0
      %p280 = por %p278, %p279
      %s282 = sadd.s32 %s281, 1
      %p285 = scmp.eq.s32.totalorder %s32, 1
      %p286 = scmp.ne.s32.totalorder %s281, %s283
      %p287 = scmp.eq.s32.totalorder %s32, 0
      %p288 = por %p286, %p287
      %p289 = scmp.ne.s32.totalorder %s281, %s283
      %p290 = scmp.eq.s32.totalorder %s37, 1
      %p291 = por %p289, %p290
      %p292 = scmp.ne.s32.totalorder %s283, %s284
      %p293 = scmp.eq.s32.totalorder %s37, 0
      %p294 = por %p292, %p293
      %p295 = scmp.ne.s32.totalorder %s283, %s284
      %p296 = scmp.eq.s32.totalorder %s38, 1
      %p297 = por %p295, %p296
      %p299 = scmp.ne.s32.totalorder %s284, %s298
      %p300 = scmp.eq.s32.totalorder %s38, 0
      %p301 = por %p299, %p300
      %s303 = sadd.s32 %s302, 1
      %p306 = scmp.eq.s32.totalorder %s32, 1
      %p307 = scmp.ne.s32.totalorder %s302, %s304
      %p308 = scmp.eq.s32.totalorder %s32, 0
      %p309 = por %p307, %p308
      %p310 = scmp.ne.s32.totalorder %s302, %s304
      %p311 = scmp.eq.s32.totalorder %s37, 1
      %p312 = por %p310, %p311
      %p313 = scmp.ne.s32.totalorder %s304, %s305
      %p314 = scmp.eq.s32.totalorder %s37, 0
      %p315 = por %p313, %p314
      %p316 = scmp.ne.s32.totalorder %s304, %s305
      %p317 = scmp.eq.s32.totalorder %s38, 1
      %p318 = por %p316, %p317
      %p320 = scmp.ne.s32.totalorder %s305, %s319
      %p321 = scmp.eq.s32.totalorder %s38, 0
      %p322 = por %p320, %p321
      %s324 = sadd.s32 %s323, 1
      %p327 = scmp.eq.s32.totalorder %s32, 1
      %p328 = scmp.ne.s32.totalorder %s323, %s325
      %p329 = scmp.eq.s32.totalorder %s32, 0
      %p330 = por %p328, %p329
      %p331 = scmp.ne.s32.totalorder %s323, %s325
      %p332 = scmp.eq.s32.totalorder %s37, 1
      %p333 = por %p331, %p332
      %p334 = scmp.ne.s32.totalorder %s325, %s326
      %p335 = scmp.eq.s32.totalorder %s37, 0
      %p336 = por %p334, %p335
      %p337 = scmp.ne.s32.totalorder %s325, %s326
      %p338 = scmp.eq.s32.totalorder %s38, 1
      %p339 = por %p337, %p338
      %p341 = scmp.ne.s32.totalorder %s326, %s340
      %p342 = scmp.eq.s32.totalorder %s38, 0
      %p343 = por %p341, %p342
      %s344 = ssub.s32 %s32, %s39
      %p345 = scmp.eq.s32.totalorder %s344, 0
      %s347 = sadd.s32 %s346, 1
      %s348 = scalar_select %p345, %s346, %s347
      %p351 = pneg %p345
      %p352 = scmp.eq.s32.totalorder %s32, 1
      %p353 = por %p351, %p352
      %p354 = scmp.ne.s32.totalorder %s346, %s349
      %p355 = scmp.eq.s32.totalorder %s32, 0
      %p356 = por %p354, %p355
      %p357 = scmp.ne.s32.totalorder %s346, %s349
      %p358 = scmp.eq.s32.totalorder %s37, 1
      %p359 = por %p357, %p358
      %p360 = scmp.ne.s32.totalorder %s349, %s350
      %p361 = scmp.eq.s32.totalorder %s37, 0
      %p362 = por %p360, %p361
      %p363 = scmp.ne.s32.totalorder %s349, %s350
      %p364 = scmp.eq.s32.totalorder %s38, 1
      %p365 = por %p363, %p364
      %p367 = scmp.ne.s32.totalorder %s350, %s366
      %p368 = scmp.eq.s32.totalorder %s38, 0
      %p369 = por %p367, %p368
      %s370 = ssub.s32 %s32, %s39
      %p371 = scmp.eq.s32.totalorder %s370, 0
      %s373 = sadd.s32 %s372, 1
      %s374 = scalar_select %p371, %s372, %s373
      %p377 = pneg %p371
      %p378 = scmp.eq.s32.totalorder %s32, 1
      %p379 = por %p377, %p378
      %p380 = scmp.ne.s32.totalorder %s372, %s375
      %p381 = scmp.eq.s32.totalorder %s32, 0
      %p382 = por %p380, %p381
      %p383 = scmp.ne.s32.totalorder %s372, %s375
      %p384 = scmp.eq.s32.totalorder %s37, 1
      %p385 = por %p383, %p384
      %p386 = scmp.ne.s32.totalorder %s375, %s376
      %p387 = scmp.eq.s32.totalorder %s37, 0
      %p388 = por %p386, %p387
      %p389 = scmp.ne.s32.totalorder %s375, %s376
      %p390 = scmp.eq.s32.totalorder %s38, 1
      %p391 = por %p389, %p390
      %p393 = scmp.ne.s32.totalorder %s376, %s392
      %p394 = scmp.eq.s32.totalorder %s38, 0
      %p395 = por %p393, %p394
      %s396 = ssub.s32 %s32, %s39
      %p397 = scmp.eq.s32.totalorder %s396, 0
      %s399 = sadd.s32 %s398, 1
      %s400 = scalar_select %p397, %s398, %s399
      %p403 = pneg %p397
      %p404 = scmp.eq.s32.totalorder %s32, 1
      %p405 = por %p403, %p404
      %p406 = scmp.ne.s32.totalorder %s398, %s401
      %p407 = scmp.eq.s32.totalorder %s32, 0
      %p408 = por %p406, %p407
      %p409 = scmp.ne.s32.totalorder %s398, %s401
      %p410 = scmp.eq.s32.totalorder %s37, 1
      %p411 = por %p409, %p410
      %p412 = scmp.ne.s32.totalorder %s401, %s402
      %p413 = scmp.eq.s32.totalorder %s37, 0
      %p414 = por %p412, %p413
      %p415 = scmp.ne.s32.totalorder %s401, %s402
      %p416 = scmp.eq.s32.totalorder %s38, 1
      %p417 = por %p415, %p416
      %p419 = scmp.ne.s32.totalorder %s402, %s418
      %p420 = scmp.eq.s32.totalorder %s38, 0
      %p421 = por %p419, %p420
      %s422 = ssub.s32 %s32, %s39
      %p423 = scmp.eq.s32.totalorder %s422, 0
      %s425 = sadd.s32 %s424, 1
      %s426 = scalar_select %p423, %s424, %s425
      %p429 = pneg %p423
      %p430 = scmp.eq.s32.totalorder %s32, 1
      %p431 = por %p429, %p430
      %p432 = scmp.ne.s32.totalorder %s424, %s427
      %p433 = scmp.eq.s32.totalorder %s32, 0
      %p434 = por %p432, %p433
      %p435 = scmp.ne.s32.totalorder %s424, %s427
      %p436 = scmp.eq.s32.totalorder %s37, 1
      %p437 = por %p435, %p436
      %p438 = scmp.ne.s32.totalorder %s427, %s428
      %p439 = scmp.eq.s32.totalorder %s37, 0
      %p440 = por %p438, %p439
      %p441 = scmp.ne.s32.totalorder %s427, %s428
      %p442 = scmp.eq.s32.totalorder %s38, 1
      %p443 = por %p441, %p442
      %p445 = scmp.ne.s32.totalorder %s428, %s444
      %p446 = scmp.eq.s32.totalorder %s38, 0
      %p447 = por %p445, %p446
      %s448 = ssub.s32 %s32, %s39
      %p449 = scmp.eq.s32.totalorder %s448, 0
      %s451 = sadd.s32 %s450, 1
      %s452 = scalar_select %p449, %s450, %s451
      %p455 = pneg %p449
      %p456 = scmp.eq.s32.totalorder %s32, 1
      %p457 = por %p455, %p456
      %p458 = scmp.ne.s32.totalorder %s450, %s453
      %p459 = scmp.eq.s32.totalorder %s32, 0
      %p460 = por %p458, %p459
      %p461 = scmp.ne.s32.totalorder %s450, %s453
      %p462 = scmp.eq.s32.totalorder %s37, 1
      %p463 = por %p461, %p462
      %p464 = scmp.ne.s32.totalorder %s453, %s454
      %p465 = scmp.eq.s32.totalorder %s37, 0
      %p466 = por %p464, %p465
      %p467 = scmp.ne.s32.totalorder %s453, %s454
      %p468 = scmp.eq.s32.totalorder %s38, 1
      %p469 = por %p467, %p468
      %p471 = scmp.ne.s32.totalorder %s454, %s470
      %p472 = scmp.eq.s32.totalorder %s38, 0
      %p473 = por %p471, %p472
      %s474 = ssub.s32 %s32, %s39
      %p475 = scmp.eq.s32.totalorder %s474, 0
      %s477 = sadd.s32 %s476, 1
      %s478 = scalar_select %p475, %s476, %s477
      %p481 = pneg %p475
      %p482 = scmp.eq.s32.totalorder %s32, 1
      %p483 = por %p481, %p482
      %p484 = scmp.ne.s32.totalorder %s476, %s479
      %p485 = scmp.eq.s32.totalorder %s32, 0
      %p486 = por %p484, %p485
      %p487 = scmp.ne.s32.totalorder %s476, %s479
      %p488 = scmp.eq.s32.totalorder %s37, 1
      %p489 = por %p487, %p488
      %p490 = scmp.ne.s32.totalorder %s479, %s480
      %p491 = scmp.eq.s32.totalorder %s37, 0
      %p492 = por %p490, %p491
      %p493 = scmp.ne.s32.totalorder %s479, %s480
      %p494 = scmp.eq.s32.totalorder %s38, 1
      %p495 = por %p493, %p494
      %p497 = scmp.ne.s32.totalorder %s480, %s496
      %p498 = scmp.eq.s32.totalorder %s38, 0
      %p499 = por %p497, %p498
      %p500 = scmp.le.s32.totalorder 1, %s32
      %p501 = scmp.lt.s32.totalorder %s32, 3
      %p502 = pnand %p500, %p501
      %p503 = pneg %p502
      // Predicated region
      $region9: #{tpu_custom_call.1} parent=5 // pred_check
        _
      $region10: #{tpu_custom_call.1} parent=5 // pred_check_branch
        %505 = sbr.rel (%p502) target = $region12
      $region11: #{tpu_custom_call.1} parent=5 // pred_region
        %s506 = ssub.s32 %s32, 1
        // Predicated region
        $region13: #{tpu_custom_call.1} parent=11 // pred_check
          %p507 = pneg %p105
        $region14: #{tpu_custom_call.1} parent=11 // pred_check_branch
          %509 = sbr.rel (%p507) target = $region16
        $region15: #{tpu_custom_call.1} parent=11 // pred_region
          _
        $region16: #{tpu_custom_call.1} parent=11 // pred_fallthru
          _
        // Predicated region
        $region17: #{tpu_custom_call.1} parent=11 // pred_check
          %p510 = pneg %p126
        $region18: #{tpu_custom_call.1} parent=11 // pred_check_branch
          %512 = sbr.rel (%p510) target = $region20
        $region19: #{tpu_custom_call.1} parent=11 // pred_region
          _
        $region20: #{tpu_custom_call.1} parent=11 // pred_fallthru
          _
        // Predicated region
        $region21: #{tpu_custom_call.1} parent=11 // pred_check
          %p513 = pneg %p147
        $region22: #{tpu_custom_call.1} parent=11 // pred_check_branch
          %515 = sbr.rel (%p513) target = $region24
        $region23: #{tpu_custom_call.1} parent=11 // pred_region
          _
        $region24: #{tpu_custom_call.1} parent=11 // pred_fallthru
          _
        // Predicated region
        $region25: #{tpu_custom_call.1} parent=11 // pred_check
          %p516 = pneg %p168
        $region26: #{tpu_custom_call.1} parent=11 // pred_check_branch
          %518 = sbr.rel (%p516) target = $region28
        $region27: #{tpu_custom_call.1} parent=11 // pred_region
          _
        $region28: #{tpu_custom_call.1} parent=11 // pred_fallthru
          _
        // Predicated region
        $region29: #{tpu_custom_call.1} parent=11 // pred_check
          %p519 = pneg %p189
        $region30: #{tpu_custom_call.1} parent=11 // pred_check_branch
          %521 = sbr.rel (%p519) target = $region32
        $region31: #{tpu_custom_call.1} parent=11 // pred_region
          _
        $region32: #{tpu_custom_call.1} parent=11 // pred_fallthru
          _
        // Predicated region
        $region33: #{tpu_custom_call.1} parent=11 // pred_check
          %p522 = pneg %p210
        $region34: #{tpu_custom_call.1} parent=11 // pred_check_branch
          %524 = sbr.rel (%p522) target = $region36
        $region35: #{tpu_custom_call.1} parent=11 // pred_region
          _
        $region36: #{tpu_custom_call.1} parent=11 // pred_fallthru
          _
        // Predicated region
        $region37: #{tpu_custom_call.1} parent=11 // pred_check
          %p525 = pneg %p231
        $region38: #{tpu_custom_call.1} parent=11 // pred_check_branch
          %527 = sbr.rel (%p525) target = $region40
        $region39: #{tpu_custom_call.1} parent=11 // pred_region
          _
        $region40: #{tpu_custom_call.1} parent=11 // pred_fallthru
          _
        // Predicated region
        $region41: #{tpu_custom_call.1} parent=11 // pred_check
          %p528 = pneg %p252
        $region42: #{tpu_custom_call.1} parent=11 // pred_check_branch
          %530 = sbr.rel (%p528) target = $region44
        $region43: #{tpu_custom_call.1} parent=11 // pred_region
          _
        $region44: #{tpu_custom_call.1} parent=11 // pred_fallthru
          _
        // Predicated region
        $region45: #{tpu_custom_call.1} parent=11 // pred_check
          %p531 = pneg %p273
        $region46: #{tpu_custom_call.1} parent=11 // pred_check_branch
          %533 = sbr.rel (%p531) target = $region48
        $region47: #{tpu_custom_call.1} parent=11 // pred_region
          _
        $region48: #{tpu_custom_call.1} parent=11 // pred_fallthru
          _
        // Predicated region
        $region49: #{tpu_custom_call.1} parent=11 // pred_check
          %p534 = pneg %p294
        $region50: #{tpu_custom_call.1} parent=11 // pred_check_branch
          %536 = sbr.rel (%p534) target = $region52
        $region51: #{tpu_custom_call.1} parent=11 // pred_region
          _
        $region52: #{tpu_custom_call.1} parent=11 // pred_fallthru
          _
        // Predicated region
        $region53: #{tpu_custom_call.1} parent=11 // pred_check
          %p537 = pneg %p315
        $region54: #{tpu_custom_call.1} parent=11 // pred_check_branch
          %539 = sbr.rel (%p537) target = $region56
        $region55: #{tpu_custom_call.1} parent=11 // pred_region
          _
        $region56: #{tpu_custom_call.1} parent=11 // pred_fallthru
          _
        // Predicated region
        $region57: #{tpu_custom_call.1} parent=11 // pred_check
          %p540 = pneg %p336
        $region58: #{tpu_custom_call.1} parent=11 // pred_check_branch
          %542 = sbr.rel (%p540) target = $region60
        $region59: #{tpu_custom_call.1} parent=11 // pred_region
          _
        $region60: #{tpu_custom_call.1} parent=11 // pred_fallthru
          _
      $region12: #{tpu_custom_call.1} parent=5 // pred_fallthru
        _
      %p543 = scmp.lt.s32.totalorder %s32, 2
      // Predicated region
      $region61: #{tpu_custom_call.1} parent=5 // pred_check
        %p544 = pneg %p543
      $region62: #{tpu_custom_call.1} parent=5 // pred_check_branch
        %546 = sbr.rel (%p544) target = $region64
      $region63: #{tpu_custom_call.1} parent=5 // pred_region
        // Predicated region
        $region65: #{tpu_custom_call.1} parent=63 // pred_check
          %p547 = pneg %p52
        $region66: #{tpu_custom_call.1} parent=63 // pred_check_branch
          %549 = sbr.rel (%p547) target = $region68
        $region67: #{tpu_custom_call.1} parent=63 // pred_region
          %p550 = scmp.lt.s32.totalorder %s32, 1
          %s551 = scalar_select %p550, %s32, 1
          %s552 = smul.addr %s551, 32
          %s553 = smul.addr %s552, 8
          %s554 = scalar_lea.vmem %s0, %s553
        $region68: #{tpu_custom_call.1} parent=63 // pred_fallthru
          _
        // Predicated region
        $region69: #{tpu_custom_call.1} parent=63 // pred_check
          %p555 = pneg %p78
        $region70: #{tpu_custom_call.1} parent=63 // pred_check_branch
          %557 = sbr.rel (%p555) target = $region72
        $region71: #{tpu_custom_call.1} parent=63 // pred_region
          %p558 = scmp.lt.s32.totalorder %s32, 1
          %s559 = scalar_select %p558, %s32, 1
          %s560 = smul.addr %s559, 16
          %s561 = smul.addr %s560, 8
          %s562 = scalar_lea.vmem %s1, %s561
        $region72: #{tpu_custom_call.1} parent=63 // pred_fallthru
          _
      $region64: #{tpu_custom_call.1} parent=5 // pred_fallthru
        _
      %p563 = scmp.le.s32.totalorder 1, %s32
      %p564 = scmp.lt.s32.totalorder %s32, 3
      %p565 = pnand %p563, %p564
      %p566 = pneg %p565
      // Predicated region
      $region73: #{tpu_custom_call.1} parent=5 // pred_check
        _
      $region74: #{tpu_custom_call.1} parent=5 // pred_check_branch
        %568 = sbr.rel (%p565) target = $region76
      $region75: #{tpu_custom_call.1} parent=5 // pred_region
        %s569 = ssub.s32 %s32, 1
        %p570 = scmp.lt.s32.totalorder %s37, 1
        %s571 = scalar_select %p570, %s37, 1
        %s572 = smul.addr %s571, 32
        %s573 = smul.addr %s572, 8
        %s574 = scalar_lea.vmem %s0, %s573
        %p575 = pneg %p58
        %p576 = pneg %p55
        %p577 = scmp.lt.s32.totalorder %s37, 1
        %s578 = scalar_select %p577, %s37, 1
        %s579 = smul.addr %s578, 16
        %s580 = smul.addr %s579, 8
        %s581 = scalar_lea.vmem %s1, %s580
        %p582 = pneg %p84
        %p583 = pneg %p81
        %p584 = pneg %p105
        %p585 = pneg %p102
        %p586 = pneg %p126
        %p587 = pneg %p123
        %p588 = pneg %p147
        %p589 = pneg %p144
        %p590 = pneg %p168
        %p591 = pneg %p165
        %p592 = pneg %p189
        %p593 = pneg %p186
        %p594 = pneg %p210
        %p595 = pneg %p207
        %p596 = pneg %p231
        %p597 = pneg %p228
        %p598 = pneg %p252
        %p599 = pneg %p249
        %p600 = pneg %p273
        %p601 = pneg %p270
        %p602 = pneg %p294
        %p603 = pneg %p291
        %p604 = pneg %p315
        %p605 = pneg %p312
        %p606 = pneg %p336
        %p607 = pneg %p333
        %p608 = pneg %p362
        %p609 = pneg %p359
        %s610 = sand.u32 %s349, 1
        %s611 = scalar_lea.sflag [#allocation3], %s610
        %s612 = sand.u32 %s349, 1
        %s613 = scalar_lea.vmem [#allocation2], %s612
        %p614 = pneg %p388
        %p615 = pneg %p385
        %s616 = sand.u32 %s375, 1
        %s617 = scalar_lea.sflag [#allocation5], %s616
        %s618 = sand.u32 %s375, 1
        %s619 = scalar_lea.vmem [#allocation4], %s618
        %p620 = pneg %p414
        %p621 = pneg %p411
        %p622 = scmp.lt.s32.totalorder %s37, 1
        %s623 = scalar_select %p622, %s37, 1
        %s624 = smul.addr %s623, 32
        %s625 = smul.addr %s624, 4
        %s626 = scalar_lea.vmem %s16, %s625
        %p627 = pneg %p440
        %p628 = pneg %p437
        %p629 = scmp.lt.s32.totalorder %s37, 1
        %s630 = scalar_select %p629, %s37, 1
        %s631 = smul.addr %s630, 32
        %s632 = smul.addr %s631, 4
        %s633 = scalar_lea.vmem %s17, %s632
        %p634 = pneg %p466
        %p635 = pneg %p463
        %p636 = scmp.lt.s32.totalorder %s37, 1
        %s637 = scalar_select %p636, %s37, 1
        %s638 = smul.addr %s637, 16
        %s639 = smul.addr %s638, 4
        %s640 = scalar_lea.vmem %s18, %s639
        %p641 = pneg %p492
        %p642 = pneg %p489
        %p643 = scmp.lt.s32.totalorder %s37, 1
        %s644 = scalar_select %p643, %s37, 1
        %s645 = smul.addr %s644, 16
        %s646 = smul.addr %s645, 4
        %s647 = scalar_lea.vmem %s19, %s646
        %p648 = scmp.lt.s32.totalorder %s37, 1
        %s649 = scalar_select %p648, %s37, 1
        %s650 = smul.addr %s649, 32
        %s651 = smul.addr %s650, 8
        %s652 = scalar_lea.vmem %s0, %s651
        %p653 = scmp.lt.s32.totalorder %s37, 1
        %s654 = scalar_select %p653, %s37, 1
        %s655 = smul.addr %s654, 16
        %s656 = smul.addr %s655, 8
        %s657 = scalar_lea.vmem %s1, %s656
        %p658 = scmp.lt.s32.totalorder %s37, 1
        %s659 = scalar_select %p658, %s37, 1
        %s660 = smul.addr %s659, 32
        %s661 = smul.addr %s660, 4
        %s662 = scalar_lea.vmem %s16, %s661
        %p663 = scmp.lt.s32.totalorder %s37, 1
        %s664 = scalar_select %p663, %s37, 1
        %s665 = smul.addr %s664, 32
        %s666 = smul.addr %s665, 4
        %s667 = scalar_lea.vmem %s17, %s666
        %p668 = scmp.lt.s32.totalorder %s37, 1
        %s669 = scalar_select %p668, %s37, 1
        %s670 = smul.addr %s669, 16
        %s671 = smul.addr %s670, 4
        %s672 = scalar_lea.vmem %s18, %s671
        %p673 = scmp.lt.s32.totalorder %s37, 1
        %s674 = scalar_select %p673, %s37, 1
        %s675 = smul.addr %s674, 16
        %s676 = smul.addr %s675, 4
        %s677 = scalar_lea.vmem %s19, %s676
        %v679 = vld [vmem:[%s652] sm:$0xff]
        %v680 = vld [vmem:[%s652 + $0x8] sm:$0xff]
        %v681 = vld [vmem:[%s652 + $0x10] sm:$0xff]
        %v682 = vld [vmem:[%s652 + $0x18] sm:$0xff]
        %v683 = vld [vmem:[%s652 + $0x20] sm:$0xff]
        %v684 = vld [vmem:[%s652 + $0x28] sm:$0xff]
        %v685 = vld [vmem:[%s652 + $0x30] sm:$0xff]
        %v686 = vld [vmem:[%s652 + $0x38] sm:$0xff]
        %v687 = vld [vmem:[%s652 + $0x40] sm:$0xff]
        %v688 = vld [vmem:[%s652 + $0x48] sm:$0xff]
        %v689 = vld [vmem:[%s652 + $0x50] sm:$0xff]
        %v690 = vld [vmem:[%s652 + $0x58] sm:$0xff]
        %v691 = vld [vmem:[%s652 + $0x60] sm:$0xff]
        %v692 = vld [vmem:[%s652 + $0x68] sm:$0xff]
        %v693 = vld [vmem:[%s652 + $0x70] sm:$0xff]
        %v694 = vld [vmem:[%s652 + $0x78] sm:$0xff]
        %v695 = vld [vmem:[%s652 + $0x80] sm:$0xff]
        %v696 = vld [vmem:[%s652 + $0x88] sm:$0xff]
        %v697 = vld [vmem:[%s652 + $0x90] sm:$0xff]
        %v698 = vld [vmem:[%s652 + $0x98] sm:$0xff]
        %v699 = vld [vmem:[%s652 + $0xa0] sm:$0xff]
        %v700 = vld [vmem:[%s652 + $0xa8] sm:$0xff]
        %v701 = vld [vmem:[%s652 + $0xb0] sm:$0xff]
        %v702 = vld [vmem:[%s652 + $0xb8] sm:$0xff]
        %v703 = vld [vmem:[%s652 + $0xc0] sm:$0xff]
        %v704 = vld [vmem:[%s652 + $0xc8] sm:$0xff]
        %v705 = vld [vmem:[%s652 + $0xd0] sm:$0xff]
        %v706 = vld [vmem:[%s652 + $0xd8] sm:$0xff]
        %v707 = vld [vmem:[%s652 + $0xe0] sm:$0xff]
        %v708 = vld [vmem:[%s652 + $0xe8] sm:$0xff]
        %v709 = vld [vmem:[%s652 + $0xf0] sm:$0xff]
        %v710 = vld [vmem:[%s652 + $0xf8] sm:$0xff]
        %v711 = vld [vmem:[%s2] sm:$0xff]
        %v712 = vld [vmem:[%s2 + $0x8] sm:$0xff]
        %v713 = vld [vmem:[%s2 + $0x10] sm:$0xff]
        %v714 = vld [vmem:[%s2 + $0x18] sm:$0xff]
        %v715 = vld [vmem:[%s2 + $0x20] sm:$0xff]
        %v716 = vld [vmem:[%s2 + $0x28] sm:$0xff]
        %v717 = vld [vmem:[%s2 + $0x30] sm:$0xff]
        %v718 = vld [vmem:[%s2 + $0x38] sm:$0xff]
        %v719 = vld [vmem:[%s3] sm:$0xff]
        %v720 = vld [vmem:[%s3 + $0x8] sm:$0xff]
        %v721 = vld [vmem:[%s3 + $0x10] sm:$0xff]
        %v722 = vld [vmem:[%s3 + $0x18] sm:$0xff]
        %vm723 = vcmask 523264
        %v724 = vsel %vm723, %v679, 0.0
        %v725 = vsel %vm723, %v680, 0.0
        %v726 = vadd.f32 %v724, %v725
        %v727 = vsel %vm723, %v681, 0.0
        %v728 = vadd.f32 %v726, %v727
        %v729 = vsel %vm723, %v682, 0.0
        %v730 = vadd.f32 %v728, %v729
        %v731 = vsel %vm723, %v683, 0.0
        %v732 = vadd.f32 %v730, %v731
        %v733 = vsel %vm723, %v684, 0.0
        %v734 = vadd.f32 %v732, %v733
        %v735 = vsel %vm723, %v685, 0.0
        %v736 = vadd.f32 %v734, %v735
        %v737 = vsel %vm723, %v686, 0.0
        %v738 = vadd.f32 %v736, %v737
        %v739 = vsel %vm723, %v687, 0.0
        %v740 = vadd.f32 %v738, %v739
        %v741 = vsel %vm723, %v688, 0.0
        %v742 = vadd.f32 %v740, %v741
        %v743 = vsel %vm723, %v689, 0.0
        %v744 = vadd.f32 %v742, %v743
        %v745 = vsel %vm723, %v690, 0.0
        %v746 = vadd.f32 %v744, %v745
        %v747 = vsel %vm723, %v691, 0.0
        %v748 = vadd.f32 %v746, %v747
        %v749 = vsel %vm723, %v692, 0.0
        %v750 = vadd.f32 %v748, %v749
        %v751 = vsel %vm723, %v693, 0.0
        %v752 = vadd.f32 %v750, %v751
        %v753 = vsel %vm723, %v694, 0.0
        %v754 = vadd.f32 %v752, %v753
        %v755 = vsel %vm723, %v695, 0.0
        %v756 = vadd.f32 %v754, %v755
        %v757 = vsel %vm723, %v696, 0.0
        %v758 = vadd.f32 %v756, %v757
        %v759 = vsel %vm723, %v697, 0.0
        %v760 = vadd.f32 %v758, %v759
        %v761 = vsel %vm723, %v698, 0.0
        %v762 = vadd.f32 %v760, %v761
        %v763 = vsel %vm723, %v699, 0.0
        %v764 = vadd.f32 %v762, %v763
        %v765 = vsel %vm723, %v700, 0.0
        %v766 = vadd.f32 %v764, %v765
        %v767 = vsel %vm723, %v701, 0.0
        %v768 = vadd.f32 %v766, %v767
        %v769 = vsel %vm723, %v702, 0.0
        %v770 = vadd.f32 %v768, %v769
        %v771 = vsel %vm723, %v703, 0.0
        %v772 = vadd.f32 %v770, %v771
        %v773 = vsel %vm723, %v704, 0.0
        %v774 = vadd.f32 %v772, %v773
        %v775 = vsel %vm723, %v705, 0.0
        %v776 = vadd.f32 %v774, %v775
        %v777 = vsel %vm723, %v706, 0.0
        %v778 = vadd.f32 %v776, %v777
        %v779 = vsel %vm723, %v707, 0.0
        %v780 = vadd.f32 %v778, %v779
        %v781 = vsel %vm723, %v708, 0.0
        %v782 = vadd.f32 %v780, %v781
        %v783 = vsel %vm723, %v709, 0.0
        %v784 = vadd.f32 %v782, %v783
        %v785 = vsel %vm723, %v710, 0.0
        %v786 = vadd.f32 %v784, %v785
        %v787 = vrot.slane %v786, 4
        %v788 = vadd.f32 %v786, %v787
        %v789 = vrot.slane %v788, 2
        %v790 = vadd.f32 %v788, %v789
        %v791 = vrot.slane %v790, 1
        %v792 = vadd.f32 %v790, %v791
        %v794 = vsel %vm723, %v792, 0
        %796 = vmatprep.subr.mxu0 0.0
        %797 = vmatpush1.msra.mxu0 0.0
        %798 = vmatprep.subr.mxu0 0.0
        %799 = vmatpush1.msra.mxu0 0.0
        %800 = vmatprep.subr.mxu0 0.0
        %801 = vmatpush1.msra.mxu0 0.0
        %802 = vmatprep.subr.mxu0 0.0
        %803 = vmatpush1.msra.mxu0 0.0
        %804 = vmatprep.subr.mxu0 0.0
        %805 = vmatpush1.msra.mxu0 0.0
        %806 = vmatprep.subr.mxu0 0.0
        %807 = vmatpush1.msra.mxu0 0.0
        %808 = vmatprep.subr.mxu0 0.0
        %809 = vmatpush1.msra.mxu0 0.0
        %810 = vmatprep.subr.mxu0 0.0
        %811 = vmatpush1.msra.mxu0 0.0
        %812 = vmatprep.subr.mxu0 0.0
        %813 = vmatpush1.msra.mxu0 %v718
        %814 = vmatprep.subr.mxu0 0.0
        %815 = vmatpush1.msra.mxu0 %v717
        %816 = vmatprep.subr.mxu0 0.0
        %817 = vmatpush1.msra.mxu0 %v716
        %818 = vmatprep.subr.mxu0 0.0
        %819 = vmatpush1.msra.mxu0 %v715
        %820 = vmatprep.subr.mxu0 0.0
        %821 = vmatpush1.msra.mxu0 %v714
        %822 = vmatprep.subr.mxu0 0.0
        %823 = vmatpush1.msra.mxu0 %v713
        %824 = vmatprep.subr.mxu0 0.0
        %825 = vmatpush1.msra.mxu0 %v712
        %826 = vmatprep.subr.mxu0 0.0
        %827 = vmatpush1.msra.mxu0 %v711
        %828 = vmatprep.subr.mxu0 0.0
        %829 = vmatpush2.msra.mxu0 0.0
        %830 = vmatprep.subr.mxu0 0.0
        %831 = vmatpush2.msra.mxu0 0.0
        %832 = vmatprep.subr.mxu0 0.0
        %833 = vmatpush2.msra.mxu0 0.0
        %834 = vmatprep.subr.mxu0 0.0
        %835 = vmatpush2.msra.mxu0 0.0
        %836 = vmatprep.subr.mxu0 0.0
        %837 = vmatpush2.msra.mxu0 0.0
        %838 = vmatprep.subr.mxu0 0.0
        %839 = vmatpush2.msra.mxu0 0.0
        %840 = vmatprep.subr.mxu0 0.0
        %841 = vmatpush2.msra.mxu0 0.0
        %842 = vmatprep.subr.mxu0 0.0
        %843 = vmatpush2.msra.mxu0 0.0
        %844 = vmatprep.subr.mxu0 0.0
        %845 = vmatpush2.msra.mxu0 0.0
        %846 = vmatprep.subr.mxu0 0.0
        %847 = vmatpush2.msra.mxu0 0.0
        %848 = vmatprep.subr.mxu0 0.0
        %849 = vmatpush2.msra.mxu0 0.0
        %850 = vmatprep.subr.mxu0 0.0
        %851 = vmatpush2.msra.mxu0 0.0
        %852 = vmatprep.subr.mxu0 0.0
        %853 = vmatpush2.msra.mxu0 0.0
        %854 = vmatprep.subr.mxu0 0.0
        %855 = vmatpush2.msra.mxu0 0.0
        %856 = vmatprep.subr.mxu0 0.0
        %857 = vmatpush2.msra.mxu0 0.0
        %858 = vmatprep.subr.mxu0 0.0
        %859 = vmatpush2.msra.mxu0 0.0
        %860 = vmatprep.mubr.f32.mxu0 0.0
        %861 = vmatmul.mubr.f32.gmra.mxu0 %v794
        %v862 = vpop.f32.mrf.mxu0
        %v863 = vadd.f32 0.0, %v862
        %v864 = vpop.f32.mrf.mxu0
        %865 = vdwg.mxu0
        %v866 = vrcp.pop 512.0
        %v867 = vmul.f32 %v863, %v866
        %vm868 = vcmask 261120
        %v870 = vsel %vm868, %v867, 0
        %872 = vmatprep.subr.mxu0 0.0
        %873 = vmatpush1.msra.mxu0 0.0
        %874 = vmatprep.subr.mxu0 0.0
        %875 = vmatpush1.msra.mxu0 0.0
        %876 = vmatprep.subr.mxu0 0.0
        %877 = vmatpush1.msra.mxu0 0.0
        %878 = vmatprep.subr.mxu0 0.0
        %879 = vmatpush1.msra.mxu0 0.0
        %880 = vmatprep.subr.mxu0 0.0
        %881 = vmatpush1.msra.mxu0 0.0
        %882 = vmatprep.subr.mxu0 0.0
        %883 = vmatpush1.msra.mxu0 0.0
        %884 = vmatprep.subr.mxu0 0.0
        %885 = vmatpush1.msra.mxu0 0.0
        %886 = vmatprep.subr.mxu0 0.0
        %887 = vmatpush1.msra.mxu0 0.0
        %888 = vmatprep.subr.mxu0 0.0
        %889 = vmatpush1.msra.mxu0 0.0
        %890 = vmatprep.subr.mxu0 0.0
        %891 = vmatpush1.msra.mxu0 0.0
        %892 = vmatprep.subr.mxu0 0.0
        %893 = vmatpush1.msra.mxu0 0.0
        %894 = vmatprep.subr.mxu0 0.0
        %895 = vmatpush1.msra.mxu0 0.0
        %896 = vmatprep.subr.mxu0 0.0
        %897 = vmatpush1.msra.mxu0 %v722
        %898 = vmatprep.subr.mxu0 0.0
        %899 = vmatpush1.msra.mxu0 %v721
        %900 = vmatprep.subr.mxu0 0.0
        %901 = vmatpush1.msra.mxu0 %v720
        %902 = vmatprep.subr.mxu0 0.0
        %903 = vmatpush1.msra.mxu0 %v719
        %904 = vmatprep.subr.mxu0 0.0
        %905 = vmatpush2.msra.mxu0 0.0
        %906 = vmatprep.subr.mxu0 0.0
        %907 = vmatpush2.msra.mxu0 0.0
        %908 = vmatprep.subr.mxu0 0.0
        %909 = vmatpush2.msra.mxu0 0.0
        %910 = vmatprep.subr.mxu0 0.0
        %911 = vmatpush2.msra.mxu0 0.0
        %912 = vmatprep.subr.mxu0 0.0
        %913 = vmatpush2.msra.mxu0 0.0
        %914 = vmatprep.subr.mxu0 0.0
        %915 = vmatpush2.msra.mxu0 0.0
        %916 = vmatprep.subr.mxu0 0.0
        %917 = vmatpush2.msra.mxu0 0.0
        %918 = vmatprep.subr.mxu0 0.0
        %919 = vmatpush2.msra.mxu0 0.0
        %920 = vmatprep.subr.mxu0 0.0
        %921 = vmatpush2.msra.mxu0 0.0
        %922 = vmatprep.subr.mxu0 0.0
        %923 = vmatpush2.msra.mxu0 0.0
        %924 = vmatprep.subr.mxu0 0.0
        %925 = vmatpush2.msra.mxu0 0.0
        %926 = vmatprep.subr.mxu0 0.0
        %927 = vmatpush2.msra.mxu0 0.0
        %928 = vmatprep.subr.mxu0 0.0
        %929 = vmatpush2.msra.mxu0 0.0
        %930 = vmatprep.subr.mxu0 0.0
        %931 = vmatpush2.msra.mxu0 0.0
        %932 = vmatprep.subr.mxu0 0.0
        %933 = vmatpush2.msra.mxu0 0.0
        %934 = vmatprep.subr.mxu0 0.0
        %935 = vmatpush2.msra.mxu0 0.0
        %936 = vmatprep.mubr.f32.mxu0 0.0
        %937 = vmatmul.mubr.f32.gmra.mxu0 %v870
        %v938 = vpop.f32.mrf.mxu0
        %v939 = vadd.f32 0.0, %v938
        %v940 = vpop.f32.mrf.mxu0
        %941 = vdwg.mxu0
        %v942 = vlaneseq
        %v943 = vshrl.u32 %v942, 7
        %v944 = vsub.s32 0, %v943
        %v945 = vrot.slane %v939, %v944
        %v946 = vsub.f32 %v679, %v945
        %v947 = vsub.f32 %v680, %v945
        %v948 = vsub.f32 %v681, %v945
        %v949 = vsub.f32 %v682, %v945
        %v950 = vsub.f32 %v683, %v945
        %v951 = vsub.f32 %v684, %v945
        %v952 = vsub.f32 %v685, %v945
        %v953 = vsub.f32 %v686, %v945
        %v954 = vsub.f32 %v687, %v945
        %v955 = vsub.f32 %v688, %v945
        %v956 = vsub.f32 %v689, %v945
        %v957 = vsub.f32 %v690, %v945
        %v958 = vsub.f32 %v691, %v945
        %v959 = vsub.f32 %v692, %v945
        %v960 = vsub.f32 %v693, %v945
        %v961 = vsub.f32 %v694, %v945
        %v962 = vsub.f32 %v695, %v945
        %v963 = vsub.f32 %v696, %v945
        %v964 = vsub.f32 %v697, %v945
        %v965 = vsub.f32 %v698, %v945
        %v966 = vsub.f32 %v699, %v945
        %v967 = vsub.f32 %v700, %v945
        %v968 = vsub.f32 %v701, %v945
        %v969 = vsub.f32 %v702, %v945
        %v970 = vsub.f32 %v703, %v945
        %v971 = vsub.f32 %v704, %v945
        %v972 = vsub.f32 %v705, %v945
        %v973 = vsub.f32 %v706, %v945
        %v974 = vsub.f32 %v707, %v945
        %v975 = vsub.f32 %v708, %v945
        %v976 = vsub.f32 %v709, %v945
        %v977 = vsub.f32 %v710, %v945
        %v978 = vmul.f32 %v946, %v946
        %v979 = vmul.f32 %v947, %v947
        %v980 = vmul.f32 %v948, %v948
        %v981 = vmul.f32 %v949, %v949
        %v982 = vmul.f32 %v950, %v950
        %v983 = vmul.f32 %v951, %v951
        %v984 = vmul.f32 %v952, %v952
        %v985 = vmul.f32 %v953, %v953
        %v986 = vmul.f32 %v954, %v954
        %v987 = vmul.f32 %v955, %v955
        %v988 = vmul.f32 %v956, %v956
        %v989 = vmul.f32 %v957, %v957
        %v990 = vmul.f32 %v958, %v958
        %v991 = vmul.f32 %v959, %v959
        %v992 = vmul.f32 %v960, %v960
        %v993 = vmul.f32 %v961, %v961
        %v994 = vmul.f32 %v962, %v962
        %v995 = vmul.f32 %v963, %v963
        %v996 = vmul.f32 %v964, %v964
        %v997 = vmul.f32 %v965, %v965
        %v998 = vmul.f32 %v966, %v966
        %v999 = vmul.f32 %v967, %v967
        %v1000 = vmul.f32 %v968, %v968
        %v1001 = vmul.f32 %v969, %v969
        %v1002 = vmul.f32 %v970, %v970
        %v1003 = vmul.f32 %v971, %v971
        %v1004 = vmul.f32 %v972, %v972
        %v1005 = vmul.f32 %v973, %v973
        %v1006 = vmul.f32 %v974, %v974
        %v1007 = vmul.f32 %v975, %v975
        %v1008 = vmul.f32 %v976, %v976
        %v1009 = vmul.f32 %v977, %v977
        %v1010 = vsel %vm723, %v978, 0.0
        %v1011 = vsel %vm723, %v979, 0.0
        %v1012 = vadd.f32 %v1010, %v1011
        %v1013 = vsel %vm723, %v980, 0.0
        %v1014 = vadd.f32 %v1012, %v1013
        %v1015 = vsel %vm723, %v981, 0.0
        %v1016 = vadd.f32 %v1014, %v1015
        %v1017 = vsel %vm723, %v982, 0.0
        %v1018 = vadd.f32 %v1016, %v1017
        %v1019 = vsel %vm723, %v983, 0.0
        %v1020 = vadd.f32 %v1018, %v1019
        %v1021 = vsel %vm723, %v984, 0.0
        %v1022 = vadd.f32 %v1020, %v1021
        %v1023 = vsel %vm723, %v985, 0.0
        %v1024 = vadd.f32 %v1022, %v1023
        %v1025 = vsel %vm723, %v986, 0.0
        %v1026 = vadd.f32 %v1024, %v1025
        %v1027 = vsel %vm723, %v987, 0.0
        %v1028 = vadd.f32 %v1026, %v1027
        %v1029 = vsel %vm723, %v988, 0.0
        %v1030 = vadd.f32 %v1028, %v1029
        %v1031 = vsel %vm723, %v989, 0.0
        %v1032 = vadd.f32 %v1030, %v1031
        %v1033 = vsel %vm723, %v990, 0.0
        %v1034 = vadd.f32 %v1032, %v1033
        %v1035 = vsel %vm723, %v991, 0.0
        %v1036 = vadd.f32 %v1034, %v1035
        %v1037 = vsel %vm723, %v992, 0.0
        %v1038 = vadd.f32 %v1036, %v1037
        %v1039 = vsel %vm723, %v993, 0.0
        %v1040 = vadd.f32 %v1038, %v1039
        %v1041 = vsel %vm723, %v994, 0.0
        %v1042 = vadd.f32 %v1040, %v1041
        %v1043 = vsel %vm723, %v995, 0.0
        %v1044 = vadd.f32 %v1042, %v1043
        %v1045 = vsel %vm723, %v996, 0.0
        %v1046 = vadd.f32 %v1044, %v1045
        %v1047 = vsel %vm723, %v997, 0.0
        %v1048 = vadd.f32 %v1046, %v1047
        %v1049 = vsel %vm723, %v998, 0.0
        %v1050 = vadd.f32 %v1048, %v1049
        %v1051 = vsel %vm723, %v999, 0.0
        %v1052 = vadd.f32 %v1050, %v1051
        %v1053 = vsel %vm723, %v1000, 0.0
        %v1054 = vadd.f32 %v1052, %v1053
        %v1055 = vsel %vm723, %v1001, 0.0
        %v1056 = vadd.f32 %v1054, %v1055
        %v1057 = vsel %vm723, %v1002, 0.0
        %v1058 = vadd.f32 %v1056, %v1057
        %v1059 = vsel %vm723, %v1003, 0.0
        %v1060 = vadd.f32 %v1058, %v1059
        %v1061 = vsel %vm723, %v1004, 0.0
        %v1062 = vadd.f32 %v1060, %v1061
        %v1063 = vsel %vm723, %v1005, 0.0
        %v1064 = vadd.f32 %v1062, %v1063
        %v1065 = vsel %vm723, %v1006, 0.0
        %v1066 = vadd.f32 %v1064, %v1065
        %v1067 = vsel %vm723, %v1007, 0.0
        %v1068 = vadd.f32 %v1066, %v1067
        %v1069 = vsel %vm723, %v1008, 0.0
        %v1070 = vadd.f32 %v1068, %v1069
        %v1071 = vsel %vm723, %v1009, 0.0
        %v1072 = vadd.f32 %v1070, %v1071
        %v1073 = vrot.slane %v1072, 4
        %v1074 = vadd.f32 %v1072, %v1073
        %v1075 = vrot.slane %v1074, 2
        %v1076 = vadd.f32 %v1074, %v1075
        %v1077 = vrot.slane %v1076, 1
        %v1078 = vadd.f32 %v1076, %v1077
        %v1080 = vsel %vm723, %v1078, 0
        %1082 = vmatprep.subr.mxu0 0.0
        %1083 = vmatpush1.msra.mxu0 0.0
        %1084 = vmatprep.subr.mxu0 0.0
        %1085 = vmatpush1.msra.mxu0 0.0
        %1086 = vmatprep.subr.mxu0 0.0
        %1087 = vmatpush1.msra.mxu0 0.0
        %1088 = vmatprep.subr.mxu0 0.0
        %1089 = vmatpush1.msra.mxu0 0.0
        %1090 = vmatprep.subr.mxu0 0.0
        %1091 = vmatpush1.msra.mxu0 0.0
        %1092 = vmatprep.subr.mxu0 0.0
        %1093 = vmatpush1.msra.mxu0 0.0
        %1094 = vmatprep.subr.mxu0 0.0
        %1095 = vmatpush1.msra.mxu0 0.0
        %1096 = vmatprep.subr.mxu0 0.0
        %1097 = vmatpush1.msra.mxu0 0.0
        %1098 = vmatprep.subr.mxu0 0.0
        %1099 = vmatpush1.msra.mxu0 %v718
        %1100 = vmatprep.subr.mxu0 0.0
        %1101 = vmatpush1.msra.mxu0 %v717
        %1102 = vmatprep.subr.mxu0 0.0
        %1103 = vmatpush1.msra.mxu0 %v716
        %1104 = vmatprep.subr.mxu0 0.0
        %1105 = vmatpush1.msra.mxu0 %v715
        %1106 = vmatprep.subr.mxu0 0.0
        %1107 = vmatpush1.msra.mxu0 %v714
        %1108 = vmatprep.subr.mxu0 0.0
        %1109 = vmatpush1.msra.mxu0 %v713
        %1110 = vmatprep.subr.mxu0 0.0
        %1111 = vmatpush1.msra.mxu0 %v712
        %1112 = vmatprep.subr.mxu0 0.0
        %1113 = vmatpush1.msra.mxu0 %v711
        %1114 = vmatprep.subr.mxu0 0.0
        %1115 = vmatpush2.msra.mxu0 0.0
        %1116 = vmatprep.subr.mxu0 0.0
        %1117 = vmatpush2.msra.mxu0 0.0
        %1118 = vmatprep.subr.mxu0 0.0
        %1119 = vmatpush2.msra.mxu0 0.0
        %1120 = vmatprep.subr.mxu0 0.0
        %1121 = vmatpush2.msra.mxu0 0.0
        %1122 = vmatprep.subr.mxu0 0.0
        %1123 = vmatpush2.msra.mxu0 0.0
        %1124 = vmatprep.subr.mxu0 0.0
        %1125 = vmatpush2.msra.mxu0 0.0
        %1126 = vmatprep.subr.mxu0 0.0
        %1127 = vmatpush2.msra.mxu0 0.0
        %1128 = vmatprep.subr.mxu0 0.0
        %1129 = vmatpush2.msra.mxu0 0.0
        %1130 = vmatprep.subr.mxu0 0.0
        %1131 = vmatpush2.msra.mxu0 0.0
        %1132 = vmatprep.subr.mxu0 0.0
        %1133 = vmatpush2.msra.mxu0 0.0
        %1134 = vmatprep.subr.mxu0 0.0
        %1135 = vmatpush2.msra.mxu0 0.0
        %1136 = vmatprep.subr.mxu0 0.0
        %1137 = vmatpush2.msra.mxu0 0.0
        %1138 = vmatprep.subr.mxu0 0.0
        %1139 = vmatpush2.msra.mxu0 0.0
        %1140 = vmatprep.subr.mxu0 0.0
        %1141 = vmatpush2.msra.mxu0 0.0
        %1142 = vmatprep.subr.mxu0 0.0
        %1143 = vmatpush2.msra.mxu0 0.0
        %1144 = vmatprep.subr.mxu0 0.0
        %1145 = vmatpush2.msra.mxu0 0.0
        %1146 = vmatprep.mubr.f32.mxu0 0.0
        %1147 = vmatmul.mubr.f32.gmra.mxu0 %v1080
        %v1148 = vpop.f32.mrf.mxu0
        %v1149 = vadd.f32 0.0, %v1148
        %v1150 = vpop.f32.mrf.mxu0
        %1151 = vdwg.mxu0
        %v1152 = vmul.f32 %v1149, %v866
        %v1153 = vadd.f32 %v1152, 1e-06
        %v1154 = vrsqrt.pop %v1153
        %v1156 = vsel %vm868, %v1154, 0
        %1158 = vmatprep.subr.mxu0 0.0
        %1159 = vmatpush1.msra.mxu0 0.0
        %1160 = vmatprep.subr.mxu0 0.0
        %1161 = vmatpush1.msra.mxu0 0.0
        %1162 = vmatprep.subr.mxu0 0.0
        %1163 = vmatpush1.msra.mxu0 0.0
        %1164 = vmatprep.subr.mxu0 0.0
        %1165 = vmatpush1.msra.mxu0 0.0
        %1166 = vmatprep.subr.mxu0 0.0
        %1167 = vmatpush1.msra.mxu0 0.0
        %1168 = vmatprep.subr.mxu0 0.0
        %1169 = vmatpush1.msra.mxu0 0.0
        %1170 = vmatprep.subr.mxu0 0.0
        %1171 = vmatpush1.msra.mxu0 0.0
        %1172 = vmatprep.subr.mxu0 0.0
        %1173 = vmatpush1.msra.mxu0 0.0
        %1174 = vmatprep.subr.mxu0 0.0
        %1175 = vmatpush1.msra.mxu0 0.0
        %1176 = vmatprep.subr.mxu0 0.0
        %1177 = vmatpush1.msra.mxu0 0.0
        %1178 = vmatprep.subr.mxu0 0.0
        %1179 = vmatpush1.msra.mxu0 0.0
        %1180 = vmatprep.subr.mxu0 0.0
        %1181 = vmatpush1.msra.mxu0 0.0
        %1182 = vmatprep.subr.mxu0 0.0
        %1183 = vmatpush1.msra.mxu0 %v722
        %1184 = vmatprep.subr.mxu0 0.0
        %1185 = vmatpush1.msra.mxu0 %v721
        %1186 = vmatprep.subr.mxu0 0.0
        %1187 = vmatpush1.msra.mxu0 %v720
        %1188 = vmatprep.subr.mxu0 0.0
        %1189 = vmatpush1.msra.mxu0 %v719
        %1190 = vmatprep.subr.mxu0 0.0
        %1191 = vmatpush2.msra.mxu0 0.0
        %1192 = vmatprep.subr.mxu0 0.0
        %1193 = vmatpush2.msra.mxu0 0.0
        %1194 = vmatprep.subr.mxu0 0.0
        %1195 = vmatpush2.msra.mxu0 0.0
        %1196 = vmatprep.subr.mxu0 0.0
        %1197 = vmatpush2.msra.mxu0 0.0
        %1198 = vmatprep.subr.mxu0 0.0
        %1199 = vmatpush2.msra.mxu0 0.0
        %1200 = vmatprep.subr.mxu0 0.0
        %1201 = vmatpush2.msra.mxu0 0.0
        %1202 = vmatprep.subr.mxu0 0.0
        %1203 = vmatpush2.msra.mxu0 0.0
        %1204 = vmatprep.subr.mxu0 0.0
        %1205 = vmatpush2.msra.mxu0 0.0
        %1206 = vmatprep.subr.mxu0 0.0
        %1207 = vmatpush2.msra.mxu0 0.0
        %1208 = vmatprep.subr.mxu0 0.0
        %1209 = vmatpush2.msra.mxu0 0.0
        %1210 = vmatprep.subr.mxu0 0.0
        %1211 = vmatpush2.msra.mxu0 0.0
        %1212 = vmatprep.subr.mxu0 0.0
        %1213 = vmatpush2.msra.mxu0 0.0
        %1214 = vmatprep.subr.mxu0 0.0
        %1215 = vmatpush2.msra.mxu0 0.0
        %1216 = vmatprep.subr.mxu0 0.0
        %1217 = vmatpush2.msra.mxu0 0.0
        %1218 = vmatprep.subr.mxu0 0.0
        %1219 = vmatpush2.msra.mxu0 0.0
        %1220 = vmatprep.subr.mxu0 0.0
        %1221 = vmatpush2.msra.mxu0 0.0
        %1222 = vmatprep.mubr.f32.mxu0 0.0
        %1223 = vmatmul.mubr.f32.gmra.mxu0 %v1156
        %v1224 = vpop.f32.mrf.mxu0
        %v1225 = vadd.f32 0.0, %v1224
        %v1226 = vpop.f32.mrf.mxu0
        %1227 = vdwg.mxu0
        %v1228 = vld [vmem:[%s4] sm:$0x1]
        %v1229 = vmul.f32 %v1225, %v1228
        %v1230 = vld [vmem:[%s5] sm:$0x1]
        %v1231 = vmul.f32 %v939, %v1229
        %v1232 = vsub.f32 %v1230, %v1231
        %vm1233 = vcmask 516096
        %1234 = vst.msk [vmem:[%s613] sm:$0x1] %vm1233, %v1229
        %1235 = vst.msk [vmem:[%s619] sm:$0x1] %vm1233, %v1232
        %v1236 = vlaneseq
        %v1237 = vshrl.u32 %v1236, 7
        %v1238 = vsub.s32 0, %v1237
        %v1239 = vrot.slane %v1229, %v1238
        %v1240 = vmul.f32 %v679, %v1239
        %v1241 = vmul.f32 %v680, %v1239
        %v1242 = vmul.f32 %v681, %v1239
        %v1243 = vmul.f32 %v682, %v1239
        %v1244 = vmul.f32 %v683, %v1239
        %v1245 = vmul.f32 %v684, %v1239
        %v1246 = vmul.f32 %v685, %v1239
        %v1247 = vmul.f32 %v686, %v1239
        %v1248 = vmul.f32 %v687, %v1239
        %v1249 = vmul.f32 %v688, %v1239
        %v1250 = vmul.f32 %v689, %v1239
        %v1251 = vmul.f32 %v690, %v1239
        %v1252 = vmul.f32 %v691, %v1239
        %v1253 = vmul.f32 %v692, %v1239
        %v1254 = vmul.f32 %v693, %v1239
        %v1255 = vmul.f32 %v694, %v1239
        %v1256 = vmul.f32 %v695, %v1239
        %v1257 = vmul.f32 %v696, %v1239
        %v1258 = vmul.f32 %v697, %v1239
        %v1259 = vmul.f32 %v698, %v1239
        %v1260 = vmul.f32 %v699, %v1239
        %v1261 = vmul.f32 %v700, %v1239
        %v1262 = vmul.f32 %v701, %v1239
        %v1263 = vmul.f32 %v702, %v1239
        %v1264 = vmul.f32 %v703, %v1239
        %v1265 = vmul.f32 %v704, %v1239
        %v1266 = vmul.f32 %v705, %v1239
        %v1267 = vmul.f32 %v706, %v1239
        %v1268 = vmul.f32 %v707, %v1239
        %v1269 = vmul.f32 %v708, %v1239
        %v1270 = vmul.f32 %v709, %v1239
        %v1271 = vmul.f32 %v710, %v1239
        %v1273 = vlaneseq
        %v1274 = vshrl.u32 %v1273, 7
        %v1275 = vsub.s32 0, %v1274
        %v1276 = vrot.slane %v1232, %v1275
        %v1278 = vadd.f32 %v1240, %v1276
        %v1279 = vadd.f32 %v1241, %v1276
        %v1280 = vadd.f32 %v1242, %v1276
        %v1281 = vadd.f32 %v1243, %v1276
        %v1282 = vadd.f32 %v1244, %v1276
        %v1283 = vadd.f32 %v1245, %v1276
        %v1284 = vadd.f32 %v1246, %v1276
        %v1285 = vadd.f32 %v1247, %v1276
        %v1286 = vadd.f32 %v1248, %v1276
        %v1287 = vadd.f32 %v1249, %v1276
        %v1288 = vadd.f32 %v1250, %v1276
        %v1289 = vadd.f32 %v1251, %v1276
        %v1290 = vadd.f32 %v1252, %v1276
        %v1291 = vadd.f32 %v1253, %v1276
        %v1292 = vadd.f32 %v1254, %v1276
        %v1293 = vadd.f32 %v1255, %v1276
        %v1294 = vadd.f32 %v1256, %v1276
        %v1295 = vadd.f32 %v1257, %v1276
        %v1296 = vadd.f32 %v1258, %v1276
        %v1297 = vadd.f32 %v1259, %v1276
        %v1298 = vadd.f32 %v1260, %v1276
        %v1299 = vadd.f32 %v1261, %v1276
        %v1300 = vadd.f32 %v1262, %v1276
        %v1301 = vadd.f32 %v1263, %v1276
        %v1302 = vadd.f32 %v1264, %v1276
        %v1303 = vadd.f32 %v1265, %v1276
        %v1304 = vadd.f32 %v1266, %v1276
        %v1305 = vadd.f32 %v1267, %v1276
        %v1306 = vadd.f32 %v1268, %v1276
        %v1307 = vadd.f32 %v1269, %v1276
        %v1308 = vadd.f32 %v1270, %v1276
        %v1309 = vadd.f32 %v1271, %v1276
        %v1310 = vpack.c.bf16 %v1279, %v1278
        %v1311 = vpack.c.bf16 %v1281, %v1280
        %v1312 = vpack.c.bf16 %v1283, %v1282
        %v1313 = vpack.c.bf16 %v1285, %v1284
        %v1314 = vpack.c.bf16 %v1287, %v1286
        %v1315 = vpack.c.bf16 %v1289, %v1288
        %v1316 = vpack.c.bf16 %v1291, %v1290
        %v1317 = vpack.c.bf16 %v1293, %v1292
        %v1318 = vpack.c.bf16 %v1295, %v1294
        %v1319 = vpack.c.bf16 %v1297, %v1296
        %v1320 = vpack.c.bf16 %v1299, %v1298
        %v1321 = vpack.c.bf16 %v1301, %v1300
        %v1322 = vpack.c.bf16 %v1303, %v1302
        %v1323 = vpack.c.bf16 %v1305, %v1304
        %v1324 = vpack.c.bf16 %v1307, %v1306
        %v1325 = vpack.c.bf16 %v1309, %v1308
        %v1326 = vld [vmem:[%s6] sm:$0xf]
        %v1327 = vld [vmem:[%s6 + $0x4] sm:$0xf]
        %v1328 = vld [vmem:[%s6 + $0x8] sm:$0xf]
        %v1329 = vld [vmem:[%s6 + $0xc] sm:$0xf]
        %v1330 = vld [vmem:[%s6 + $0x10] sm:$0xf]
        %v1331 = vld [vmem:[%s6 + $0x14] sm:$0xf]
        %v1332 = vld [vmem:[%s6 + $0x18] sm:$0xf]
        %v1333 = vld [vmem:[%s6 + $0x1c] sm:$0xf]
        %v1334 = vld [vmem:[%s7] sm:$0x1]
        %v1336 = vlaneseq
        %v1337 = vshrl.u32 %v1336, 7
        %v1338 = vsub.s32 0, %v1337
        %v1339 = vrot.slane %v1334, %v1338
        %v1349 = vunpack.c.l.b16 %v1326
        %v1350 = vunpack.c.l.b16 %v1327
        %v1351 = vunpack.c.l.b16 %v1328
        %v1352 = vunpack.c.l.b16 %v1329
        %v1353 = vunpack.c.l.b16 %v1330
        %v1354 = vunpack.c.l.b16 %v1331
        %v1355 = vunpack.c.l.b16 %v1332
        %v1356 = vunpack.c.l.b16 %v1333
        %v1357 = vpack.c.b16 %v1350, %v1349
        %v1358 = vpack.c.b16 %v1352, %v1351
        %v1359 = vpack.c.b16 %v1354, %v1353
        %v1360 = vpack.c.b16 %v1356, %v1355
        %v1366 = vsel %vm723, %v1310, 0
        %v1369 = vsel %vm723, %v1311, 0
        %v1372 = vsel %vm723, %v1312, 0
        %v1375 = vsel %vm723, %v1313, 0
        %v1378 = vsel %vm723, %v1314, 0
        %v1381 = vsel %vm723, %v1315, 0
        %v1384 = vsel %vm723, %v1316, 0
        %v1387 = vsel %vm723, %v1317, 0
        %v1390 = vsel %vm723, %v1318, 0
        %v1393 = vsel %vm723, %v1319, 0
        %v1396 = vsel %vm723, %v1320, 0
        %v1399 = vsel %vm723, %v1321, 0
        %v1402 = vsel %vm723, %v1322, 0
        %v1405 = vsel %vm723, %v1323, 0
        %v1408 = vsel %vm723, %v1324, 0
        %v1411 = vsel %vm723, %v1325, 0
        %1413 = vmatprep.subr.bf16.mxu0 0
        %1414 = vmatpush1.bf16.msra.mxu0 0
        %1415 = vmatprep.subr.bf16.mxu0 0
        %1416 = vmatpush1.bf16.msra.mxu0 0
        %1417 = vmatprep.subr.bf16.mxu0 0
        %1418 = vmatpush1.bf16.msra.mxu0 0
        %1419 = vmatprep.subr.bf16.mxu0 0
        %1420 = vmatpush1.bf16.msra.mxu0 0
        %1421 = vmatprep.subr.bf16.mxu0 0
        %1422 = vmatpush1.bf16.msra.mxu0 %v1360
        %1423 = vmatprep.subr.bf16.mxu0 0
        %1424 = vmatpush1.bf16.msra.mxu0 %v1359
        %1425 = vmatprep.subr.bf16.mxu0 0
        %1426 = vmatpush1.bf16.msra.mxu0 %v1358
        %1427 = vmatprep.subr.bf16.mxu0 0
        %1428 = vmatpush1.bf16.msra.mxu0 %v1357
        %1429 = vmatprep.subr.bf16.mxu0 0
        %1430 = vmatpush2.bf16.msra.mxu0 0
        %1431 = vmatprep.subr.bf16.mxu0 0
        %1432 = vmatpush2.bf16.msra.mxu0 0
        %1433 = vmatprep.subr.bf16.mxu0 0
        %1434 = vmatpush2.bf16.msra.mxu0 0
        %1435 = vmatprep.subr.bf16.mxu0 0
        %1436 = vmatpush2.bf16.msra.mxu0 0
        %1437 = vmatprep.subr.bf16.mxu0 0
        %1438 = vmatpush2.bf16.msra.mxu0 0
        %1439 = vmatprep.subr.bf16.mxu0 0
        %1440 = vmatpush2.bf16.msra.mxu0 0
        %1441 = vmatprep.subr.bf16.mxu0 0
        %1442 = vmatpush2.bf16.msra.mxu0 0
        %1443 = vmatprep.subr.bf16.mxu0 0
        %1444 = vmatpush2.bf16.msra.mxu0 0
        %1445 = vmatprep.mubr.bf16.mxu0 0
        %1446 = vmatmul.mubr.bf16.gmra.mxu0 %v1366
        %v1447 = vpop.f32.mrf.mxu0
        %v1448 = vadd.f32 %v1339, %v1447
        %v1449 = vpop.f32.mrf.mxu0
        %v1450 = vpop.f32.mrf.mxu0
        %v1451 = vadd.f32 %v1339, %v1450
        %v1452 = vpop.f32.mrf.mxu0
        %1453 = vmatprep.mubr.bf16.mxu0 0
        %1454 = vmatmul.mubr.bf16.gmra.mxu0 %v1369
        %v1455 = vpop.f32.mrf.mxu0
        %v1456 = vadd.f32 %v1339, %v1455
        %v1457 = vpop.f32.mrf.mxu0
        %v1458 = vpop.f32.mrf.mxu0
        %v1459 = vadd.f32 %v1339, %v1458
        %v1460 = vpop.f32.mrf.mxu0
        %1461 = vmatprep.mubr.bf16.mxu0 0
        %1462 = vmatmul.mubr.bf16.gmra.mxu0 %v1372
        %v1463 = vpop.f32.mrf.mxu0
        %v1464 = vadd.f32 %v1339, %v1463
        %v1465 = vpop.f32.mrf.mxu0
        %v1466 = vpop.f32.mrf.mxu0
        %v1467 = vadd.f32 %v1339, %v1466
        %v1468 = vpop.f32.mrf.mxu0
        %1469 = vmatprep.mubr.bf16.mxu0 0
        %1470 = vmatmul.mubr.bf16.gmra.mxu0 %v1375
        %v1471 = vpop.f32.mrf.mxu0
        %v1472 = vadd.f32 %v1339, %v1471
        %v1473 = vpop.f32.mrf.mxu0
        %v1474 = vpop.f32.mrf.mxu0
        %v1475 = vadd.f32 %v1339, %v1474
        %v1476 = vpop.f32.mrf.mxu0
        %1477 = vmatprep.mubr.bf16.mxu0 0
        %1478 = vmatmul.mubr.bf16.gmra.mxu0 %v1378
        %v1479 = vpop.f32.mrf.mxu0
        %v1480 = vadd.f32 %v1339, %v1479
        %v1481 = vpop.f32.mrf.mxu0
        %v1482 = vpop.f32.mrf.mxu0
        %v1483 = vadd.f32 %v1339, %v1482
        %v1484 = vpop.f32.mrf.mxu0
        %1485 = vmatprep.mubr.bf16.mxu0 0
        %1486 = vmatmul.mubr.bf16.gmra.mxu0 %v1381
        %v1487 = vpop.f32.mrf.mxu0
        %v1488 = vadd.f32 %v1339, %v1487
        %v1489 = vpop.f32.mrf.mxu0
        %v1490 = vpop.f32.mrf.mxu0
        %v1491 = vadd.f32 %v1339, %v1490
        %v1492 = vpop.f32.mrf.mxu0
        %1493 = vmatprep.mubr.bf16.mxu0 0
        %1494 = vmatmul.mubr.bf16.gmra.mxu0 %v1384
        %v1495 = vpop.f32.mrf.mxu0
        %v1496 = vadd.f32 %v1339, %v1495
        %v1497 = vpop.f32.mrf.mxu0
        %v1498 = vpop.f32.mrf.mxu0
        %v1499 = vadd.f32 %v1339, %v1498
        %v1500 = vpop.f32.mrf.mxu0
        %1501 = vmatprep.mubr.bf16.mxu0 0
        %1502 = vmatmul.mubr.bf16.gmra.mxu0 %v1387
        %v1503 = vpop.f32.mrf.mxu0
        %v1504 = vadd.f32 %v1339, %v1503
        %v1505 = vpop.f32.mrf.mxu0
        %v1506 = vpop.f32.mrf.mxu0
        %v1507 = vadd.f32 %v1339, %v1506
        %v1508 = vpop.f32.mrf.mxu0
        %1509 = vmatprep.mubr.bf16.mxu0 0
        %1510 = vmatmul.mubr.bf16.gmra.mxu0 %v1390
        %v1511 = vpop.f32.mrf.mxu0
        %v1512 = vadd.f32 %v1339, %v1511
        %v1513 = vpop.f32.mrf.mxu0
        %v1514 = vpop.f32.mrf.mxu0
        %v1515 = vadd.f32 %v1339, %v1514
        %v1516 = vpop.f32.mrf.mxu0
        %1517 = vmatprep.mubr.bf16.mxu0 0
        %1518 = vmatmul.mubr.bf16.gmra.mxu0 %v1393
        %v1519 = vpop.f32.mrf.mxu0
        %v1520 = vadd.f32 %v1339, %v1519
        %v1521 = vpop.f32.mrf.mxu0
        %v1522 = vpop.f32.mrf.mxu0
        %v1523 = vadd.f32 %v1339, %v1522
        %v1524 = vpop.f32.mrf.mxu0
        %1525 = vmatprep.mubr.bf16.mxu0 0
        %1526 = vmatmul.mubr.bf16.gmra.mxu0 %v1396
        %v1527 = vpop.f32.mrf.mxu0
        %v1528 = vadd.f32 %v1339, %v1527
        %v1529 = vpop.f32.mrf.mxu0
        %v1530 = vpop.f32.mrf.mxu0
        %v1531 = vadd.f32 %v1339, %v1530
        %v1532 = vpop.f32.mrf.mxu0
        %1533 = vmatprep.mubr.bf16.mxu0 0
        %1534 = vmatmul.mubr.bf16.gmra.mxu0 %v1399
        %v1535 = vpop.f32.mrf.mxu0
        %v1536 = vadd.f32 %v1339, %v1535
        %v1537 = vpop.f32.mrf.mxu0
        %v1538 = vpop.f32.mrf.mxu0
        %v1539 = vadd.f32 %v1339, %v1538
        %v1540 = vpop.f32.mrf.mxu0
        %1541 = vmatprep.mubr.bf16.mxu0 0
        %1542 = vmatmul.mubr.bf16.gmra.mxu0 %v1402
        %v1543 = vpop.f32.mrf.mxu0
        %v1544 = vadd.f32 %v1339, %v1543
        %v1545 = vpop.f32.mrf.mxu0
        %v1546 = vpop.f32.mrf.mxu0
        %v1547 = vadd.f32 %v1339, %v1546
        %v1548 = vpop.f32.mrf.mxu0
        %1549 = vmatprep.mubr.bf16.mxu0 0
        %1550 = vmatmul.mubr.bf16.gmra.mxu0 %v1405
        %v1551 = vpop.f32.mrf.mxu0
        %v1552 = vadd.f32 %v1339, %v1551
        %v1553 = vpop.f32.mrf.mxu0
        %v1554 = vpop.f32.mrf.mxu0
        %v1555 = vadd.f32 %v1339, %v1554
        %v1556 = vpop.f32.mrf.mxu0
        %1557 = vmatprep.mubr.bf16.mxu0 0
        %1558 = vmatmul.mubr.bf16.gmra.mxu0 %v1408
        %v1559 = vpop.f32.mrf.mxu0
        %v1560 = vadd.f32 %v1339, %v1559
        %v1561 = vpop.f32.mrf.mxu0
        %v1562 = vpop.f32.mrf.mxu0
        %v1563 = vadd.f32 %v1339, %v1562
        %v1564 = vpop.f32.mrf.mxu0
        %1565 = vmatprep.mubr.bf16.mxu0 0
        %1566 = vmatmul.mubr.bf16.gmra.mxu0 %v1411
        %v1567 = vpop.f32.mrf.mxu0
        %v1568 = vadd.f32 %v1339, %v1567
        %v1569 = vpop.f32.mrf.mxu0
        %v1570 = vpop.f32.mrf.mxu0
        %v1571 = vadd.f32 %v1339, %v1570
        %v1572 = vpop.f32.mrf.mxu0
        %1573 = vdwg.mxu0
        %v1574 = vld [vmem:[%s8] sm:$0x1]
        %v1575 = vld [vmem:[%s9] sm:$0x1]
        %v1576 = vsel %vm723, %v1448, 0.0
        %1577 = vadd.xlane.f32.xlu0 %v1576
        %v1578 = vpop.xlane.xlu0 %1577
        %v1579 = vsel %vm723, %v1451, 0.0
        %1580 = vadd.xlane.f32.xlu0 %v1579
        %v1581 = vpop.xlane.xlu0 %1580
        %v1582 = vsel %vm723, %v1456, 0.0
        %1583 = vadd.xlane.f32.xlu0 %v1582
        %v1584 = vpop.xlane.xlu0 %1583
        %v1585 = vsel %vm723, %v1459, 0.0
        %1586 = vadd.xlane.f32.xlu0 %v1585
        %v1587 = vpop.xlane.xlu0 %1586
        %v1588 = vsel %vm723, %v1464, 0.0
        %1589 = vadd.xlane.f32.xlu0 %v1588
        %v1590 = vpop.xlane.xlu0 %1589
        %v1591 = vsel %vm723, %v1467, 0.0
        %1592 = vadd.xlane.f32.xlu0 %v1591
        %v1593 = vpop.xlane.xlu0 %1592
        %v1594 = vsel %vm723, %v1472, 0.0
        %1595 = vadd.xlane.f32.xlu0 %v1594
        %v1596 = vpop.xlane.xlu0 %1595
        %v1597 = vsel %vm723, %v1475, 0.0
        %1598 = vadd.xlane.f32.xlu0 %v1597
        %v1599 = vpop.xlane.xlu0 %1598
        %v1600 = vsel %vm723, %v1480, 0.0
        %1601 = vadd.xlane.f32.xlu0 %v1600
        %v1602 = vpop.xlane.xlu0 %1601
        %v1603 = vsel %vm723, %v1483, 0.0
        %1604 = vadd.xlane.f32.xlu0 %v1603
        %v1605 = vpop.xlane.xlu0 %1604
        %v1606 = vsel %vm723, %v1488, 0.0
        %1607 = vadd.xlane.f32.xlu0 %v1606
        %v1608 = vpop.xlane.xlu0 %1607
        %v1609 = vsel %vm723, %v1491, 0.0
        %1610 = vadd.xlane.f32.xlu0 %v1609
        %v1611 = vpop.xlane.xlu0 %1610
        %v1612 = vsel %vm723, %v1496, 0.0
        %1613 = vadd.xlane.f32.xlu0 %v1612
        %v1614 = vpop.xlane.xlu0 %1613
        %v1615 = vsel %vm723, %v1499, 0.0
        %1616 = vadd.xlane.f32.xlu0 %v1615
        %v1617 = vpop.xlane.xlu0 %1616
        %v1618 = vsel %vm723, %v1504, 0.0
        %1619 = vadd.xlane.f32.xlu0 %v1618
        %v1620 = vpop.xlane.xlu0 %1619
        %v1621 = vsel %vm723, %v1507, 0.0
        %1622 = vadd.xlane.f32.xlu0 %v1621
        %v1623 = vpop.xlane.xlu0 %1622
        %v1624 = vsel %vm723, %v1512, 0.0
        %1625 = vadd.xlane.f32.xlu0 %v1624
        %v1626 = vpop.xlane.xlu0 %1625
        %v1627 = vsel %vm723, %v1515, 0.0
        %1628 = vadd.xlane.f32.xlu0 %v1627
        %v1629 = vpop.xlane.xlu0 %1628
        %v1630 = vsel %vm723, %v1520, 0.0
        %1631 = vadd.xlane.f32.xlu0 %v1630
        %v1632 = vpop.xlane.xlu0 %1631
        %v1633 = vsel %vm723, %v1523, 0.0
        %1634 = vadd.xlane.f32.xlu0 %v1633
        %v1635 = vpop.xlane.xlu0 %1634
        %v1636 = vsel %vm723, %v1528, 0.0
        %1637 = vadd.xlane.f32.xlu0 %v1636
        %v1638 = vpop.xlane.xlu0 %1637
        %v1639 = vsel %vm723, %v1531, 0.0
        %1640 = vadd.xlane.f32.xlu0 %v1639
        %v1641 = vpop.xlane.xlu0 %1640
        %v1642 = vsel %vm723, %v1536, 0.0
        %1643 = vadd.xlane.f32.xlu0 %v1642
        %v1644 = vpop.xlane.xlu0 %1643
        %v1645 = vsel %vm723, %v1539, 0.0
        %1646 = vadd.xlane.f32.xlu0 %v1645
        %v1647 = vpop.xlane.xlu0 %1646
        %v1648 = vsel %vm723, %v1544, 0.0
        %1649 = vadd.xlane.f32.xlu0 %v1648
        %v1650 = vpop.xlane.xlu0 %1649
        %v1651 = vsel %vm723, %v1547, 0.0
        %1652 = vadd.xlane.f32.xlu0 %v1651
        %v1653 = vpop.xlane.xlu0 %1652
        %v1654 = vsel %vm723, %v1552, 0.0
        %1655 = vadd.xlane.f32.xlu0 %v1654
        %v1656 = vpop.xlane.xlu0 %1655
        %v1657 = vsel %vm723, %v1555, 0.0
        %1658 = vadd.xlane.f32.xlu0 %v1657
        %v1659 = vpop.xlane.xlu0 %1658
        %v1660 = vsel %vm723, %v1560, 0.0
        %1661 = vadd.xlane.f32.xlu0 %v1660
        %v1662 = vpop.xlane.xlu0 %1661
        %v1663 = vsel %vm723, %v1563, 0.0
        %1664 = vadd.xlane.f32.xlu0 %v1663
        %v1665 = vpop.xlane.xlu0 %1664
        %v1666 = vsel %vm723, %v1568, 0.0
        %1667 = vadd.xlane.f32.xlu0 %v1666
        %v1668 = vpop.xlane.xlu0 %1667
        %v1669 = vsel %vm723, %v1571, 0.0
        %1670 = vadd.xlane.f32.xlu0 %v1669
        %v1671 = vpop.xlane.xlu0 %1670
        %v1672 = vrcp.pop 64.0
        %v1673 = vmul.f32 %v1578, %v1672
        %v1674 = vmul.f32 %v1581, %v1672
        %v1675 = vmul.f32 %v1584, %v1672
        %v1676 = vmul.f32 %v1587, %v1672
        %v1677 = vmul.f32 %v1590, %v1672
        %v1678 = vmul.f32 %v1593, %v1672
        %v1679 = vmul.f32 %v1596, %v1672
        %v1680 = vmul.f32 %v1599, %v1672
        %v1681 = vmul.f32 %v1602, %v1672
        %v1682 = vmul.f32 %v1605, %v1672
        %v1683 = vmul.f32 %v1608, %v1672
        %v1684 = vmul.f32 %v1611, %v1672
        %v1685 = vmul.f32 %v1614, %v1672
        %v1686 = vmul.f32 %v1617, %v1672
        %v1687 = vmul.f32 %v1620, %v1672
        %v1688 = vmul.f32 %v1623, %v1672
        %v1689 = vmul.f32 %v1626, %v1672
        %v1690 = vmul.f32 %v1629, %v1672
        %v1691 = vmul.f32 %v1632, %v1672
        %v1692 = vmul.f32 %v1635, %v1672
        %v1693 = vmul.f32 %v1638, %v1672
        %v1694 = vmul.f32 %v1641, %v1672
        %v1695 = vmul.f32 %v1644, %v1672
        %v1696 = vmul.f32 %v1647, %v1672
        %v1697 = vmul.f32 %v1650, %v1672
        %v1698 = vmul.f32 %v1653, %v1672
        %v1699 = vmul.f32 %v1656, %v1672
        %v1700 = vmul.f32 %v1659, %v1672
        %v1701 = vmul.f32 %v1662, %v1672
        %v1702 = vmul.f32 %v1665, %v1672
        %v1703 = vmul.f32 %v1668, %v1672
        %v1704 = vmul.f32 %v1671, %v1672
        %v1705 = vsub.f32 %v1448, %v1673
        %v1706 = vsub.f32 %v1451, %v1674
        %v1707 = vsub.f32 %v1456, %v1675
        %v1708 = vsub.f32 %v1459, %v1676
        %v1709 = vsub.f32 %v1464, %v1677
        %v1710 = vsub.f32 %v1467, %v1678
        %v1711 = vsub.f32 %v1472, %v1679
        %v1712 = vsub.f32 %v1475, %v1680
        %v1713 = vsub.f32 %v1480, %v1681
        %v1714 = vsub.f32 %v1483, %v1682
        %v1715 = vsub.f32 %v1488, %v1683
        %v1716 = vsub.f32 %v1491, %v1684
        %v1717 = vsub.f32 %v1496, %v1685
        %v1718 = vsub.f32 %v1499, %v1686
        %v1719 = vsub.f32 %v1504, %v1687
        %v1720 = vsub.f32 %v1507, %v1688
        %v1721 = vsub.f32 %v1512, %v1689
        %v1722 = vsub.f32 %v1515, %v1690
        %v1723 = vsub.f32 %v1520, %v1691
        %v1724 = vsub.f32 %v1523, %v1692
        %v1725 = vsub.f32 %v1528, %v1693
        %v1726 = vsub.f32 %v1531, %v1694
        %v1727 = vsub.f32 %v1536, %v1695
        %v1728 = vsub.f32 %v1539, %v1696
        %v1729 = vsub.f32 %v1544, %v1697
        %v1730 = vsub.f32 %v1547, %v1698
        %v1731 = vsub.f32 %v1552, %v1699
        %v1732 = vsub.f32 %v1555, %v1700
        %v1733 = vsub.f32 %v1560, %v1701
        %v1734 = vsub.f32 %v1563, %v1702
        %v1735 = vsub.f32 %v1568, %v1703
        %v1736 = vsub.f32 %v1571, %v1704
        %v1737 = vmul.f32 %v1705, %v1705
        %v1738 = vmul.f32 %v1706, %v1706
        %v1739 = vmul.f32 %v1707, %v1707
        %v1740 = vmul.f32 %v1708, %v1708
        %v1741 = vmul.f32 %v1709, %v1709
        %v1742 = vmul.f32 %v1710, %v1710
        %v1743 = vmul.f32 %v1711, %v1711
        %v1744 = vmul.f32 %v1712, %v1712
        %v1745 = vmul.f32 %v1713, %v1713
        %v1746 = vmul.f32 %v1714, %v1714
        %v1747 = vmul.f32 %v1715, %v1715
        %v1748 = vmul.f32 %v1716, %v1716
        %v1749 = vmul.f32 %v1717, %v1717
        %v1750 = vmul.f32 %v1718, %v1718
        %v1751 = vmul.f32 %v1719, %v1719
        %v1752 = vmul.f32 %v1720, %v1720
        %v1753 = vmul.f32 %v1721, %v1721
        %v1754 = vmul.f32 %v1722, %v1722
        %v1755 = vmul.f32 %v1723, %v1723
        %v1756 = vmul.f32 %v1724, %v1724
        %v1757 = vmul.f32 %v1725, %v1725
        %v1758 = vmul.f32 %v1726, %v1726
        %v1759 = vmul.f32 %v1727, %v1727
        %v1760 = vmul.f32 %v1728, %v1728
        %v1761 = vmul.f32 %v1729, %v1729
        %v1762 = vmul.f32 %v1730, %v1730
        %v1763 = vmul.f32 %v1731, %v1731
        %v1764 = vmul.f32 %v1732, %v1732
        %v1765 = vmul.f32 %v1733, %v1733
        %v1766 = vmul.f32 %v1734, %v1734
        %v1767 = vmul.f32 %v1735, %v1735
        %v1768 = vmul.f32 %v1736, %v1736
        %v1769 = vsel %vm723, %v1737, 0.0
        %1770 = vadd.xlane.f32.xlu0 %v1769
        %v1771 = vpop.xlane.xlu0 %1770
        %v1772 = vsel %vm723, %v1738, 0.0
        %1773 = vadd.xlane.f32.xlu0 %v1772
        %v1774 = vpop.xlane.xlu0 %1773
        %v1775 = vsel %vm723, %v1739, 0.0
        %1776 = vadd.xlane.f32.xlu0 %v1775
        %v1777 = vpop.xlane.xlu0 %1776
        %v1778 = vsel %vm723, %v1740, 0.0
        %1779 = vadd.xlane.f32.xlu0 %v1778
        %v1780 = vpop.xlane.xlu0 %1779
        %v1781 = vsel %vm723, %v1741, 0.0
        %1782 = vadd.xlane.f32.xlu0 %v1781
        %v1783 = vpop.xlane.xlu0 %1782
        %v1784 = vsel %vm723, %v1742, 0.0
        %1785 = vadd.xlane.f32.xlu0 %v1784
        %v1786 = vpop.xlane.xlu0 %1785
        %v1787 = vsel %vm723, %v1743, 0.0
        %1788 = vadd.xlane.f32.xlu0 %v1787
        %v1789 = vpop.xlane.xlu0 %1788
        %v1790 = vsel %vm723, %v1744, 0.0
        %1791 = vadd.xlane.f32.xlu0 %v1790
        %v1792 = vpop.xlane.xlu0 %1791
        %v1793 = vsel %vm723, %v1745, 0.0
        %1794 = vadd.xlane.f32.xlu0 %v1793
        %v1795 = vpop.xlane.xlu0 %1794
        %v1796 = vsel %vm723, %v1746, 0.0
        %1797 = vadd.xlane.f32.xlu0 %v1796
        %v1798 = vpop.xlane.xlu0 %1797
        %v1799 = vsel %vm723, %v1747, 0.0
        %1800 = vadd.xlane.f32.xlu0 %v1799
        %v1801 = vpop.xlane.xlu0 %1800
        %v1802 = vsel %vm723, %v1748, 0.0
        %1803 = vadd.xlane.f32.xlu0 %v1802
        %v1804 = vpop.xlane.xlu0 %1803
        %v1805 = vsel %vm723, %v1749, 0.0
        %1806 = vadd.xlane.f32.xlu0 %v1805
        %v1807 = vpop.xlane.xlu0 %1806
        %v1808 = vsel %vm723, %v1750, 0.0
        %1809 = vadd.xlane.f32.xlu0 %v1808
        %v1810 = vpop.xlane.xlu0 %1809
        %v1811 = vsel %vm723, %v1751, 0.0
        %1812 = vadd.xlane.f32.xlu0 %v1811
        %v1813 = vpop.xlane.xlu0 %1812
        %v1814 = vsel %vm723, %v1752, 0.0
        %1815 = vadd.xlane.f32.xlu0 %v1814
        %v1816 = vpop.xlane.xlu0 %1815
        %v1817 = vsel %vm723, %v1753, 0.0
        %1818 = vadd.xlane.f32.xlu0 %v1817
        %v1819 = vpop.xlane.xlu0 %1818
        %v1820 = vsel %vm723, %v1754, 0.0
        %1821 = vadd.xlane.f32.xlu0 %v1820
        %v1822 = vpop.xlane.xlu0 %1821
        %v1823 = vsel %vm723, %v1755, 0.0
        %1824 = vadd.xlane.f32.xlu0 %v1823
        %v1825 = vpop.xlane.xlu0 %1824
        %v1826 = vsel %vm723, %v1756, 0.0
        %1827 = vadd.xlane.f32.xlu0 %v1826
        %v1828 = vpop.xlane.xlu0 %1827
        %v1829 = vsel %vm723, %v1757, 0.0
        %1830 = vadd.xlane.f32.xlu0 %v1829
        %v1831 = vpop.xlane.xlu0 %1830
        %v1832 = vsel %vm723, %v1758, 0.0
        %1833 = vadd.xlane.f32.xlu0 %v1832
        %v1834 = vpop.xlane.xlu0 %1833
        %v1835 = vsel %vm723, %v1759, 0.0
        %1836 = vadd.xlane.f32.xlu0 %v1835
        %v1837 = vpop.xlane.xlu0 %1836
        %v1838 = vsel %vm723, %v1760, 0.0
        %1839 = vadd.xlane.f32.xlu0 %v1838
        %v1840 = vpop.xlane.xlu0 %1839
        %v1841 = vsel %vm723, %v1761, 0.0
        %1842 = vadd.xlane.f32.xlu0 %v1841
        %v1843 = vpop.xlane.xlu0 %1842
        %v1844 = vsel %vm723, %v1762, 0.0
        %1845 = vadd.xlane.f32.xlu0 %v1844
        %v1846 = vpop.xlane.xlu0 %1845
        %v1847 = vsel %vm723, %v1763, 0.0
        %1848 = vadd.xlane.f32.xlu0 %v1847
        %v1849 = vpop.xlane.xlu0 %1848
        %v1850 = vsel %vm723, %v1764, 0.0
        %1851 = vadd.xlane.f32.xlu0 %v1850
        %v1852 = vpop.xlane.xlu0 %1851
        %v1853 = vsel %vm723, %v1765, 0.0
        %1854 = vadd.xlane.f32.xlu0 %v1853
        %v1855 = vpop.xlane.xlu0 %1854
        %v1856 = vsel %vm723, %v1766, 0.0
        %1857 = vadd.xlane.f32.xlu0 %v1856
        %v1858 = vpop.xlane.xlu0 %1857
        %v1859 = vsel %vm723, %v1767, 0.0
        %1860 = vadd.xlane.f32.xlu0 %v1859
        %v1861 = vpop.xlane.xlu0 %1860
        %v1862 = vsel %vm723, %v1768, 0.0
        %1863 = vadd.xlane.f32.xlu0 %v1862
        %v1864 = vpop.xlane.xlu0 %1863
        %v1865 = vmul.f32 %v1771, %v1672
        %v1866 = vmul.f32 %v1774, %v1672
        %v1867 = vmul.f32 %v1777, %v1672
        %v1868 = vmul.f32 %v1780, %v1672
        %v1869 = vmul.f32 %v1783, %v1672
        %v1870 = vmul.f32 %v1786, %v1672
        %v1871 = vmul.f32 %v1789, %v1672
        %v1872 = vmul.f32 %v1792, %v1672
        %v1873 = vmul.f32 %v1795, %v1672
        %v1874 = vmul.f32 %v1798, %v1672
        %v1875 = vmul.f32 %v1801, %v1672
        %v1876 = vmul.f32 %v1804, %v1672
        %v1877 = vmul.f32 %v1807, %v1672
        %v1878 = vmul.f32 %v1810, %v1672
        %v1879 = vmul.f32 %v1813, %v1672
        %v1880 = vmul.f32 %v1816, %v1672
        %v1881 = vmul.f32 %v1819, %v1672
        %v1882 = vmul.f32 %v1822, %v1672
        %v1883 = vmul.f32 %v1825, %v1672
        %v1884 = vmul.f32 %v1828, %v1672
        %v1885 = vmul.f32 %v1831, %v1672
        %v1886 = vmul.f32 %v1834, %v1672
        %v1887 = vmul.f32 %v1837, %v1672
        %v1888 = vmul.f32 %v1840, %v1672
        %v1889 = vmul.f32 %v1843, %v1672
        %v1890 = vmul.f32 %v1846, %v1672
        %v1891 = vmul.f32 %v1849, %v1672
        %v1892 = vmul.f32 %v1852, %v1672
        %v1893 = vmul.f32 %v1855, %v1672
        %v1894 = vmul.f32 %v1858, %v1672
        %v1895 = vmul.f32 %v1861, %v1672
        %v1896 = vmul.f32 %v1864, %v1672
        %v1897 = vadd.f32 %v1865, 1e-05
        %v1898 = vadd.f32 %v1866, 1e-05
        %v1899 = vadd.f32 %v1867, 1e-05
        %v1900 = vadd.f32 %v1868, 1e-05
        %v1901 = vadd.f32 %v1869, 1e-05
        %v1902 = vadd.f32 %v1870, 1e-05
        %v1903 = vadd.f32 %v1871, 1e-05
        %v1904 = vadd.f32 %v1872, 1e-05
        %v1905 = vadd.f32 %v1873, 1e-05
        %v1906 = vadd.f32 %v1874, 1e-05
        %v1907 = vadd.f32 %v1875, 1e-05
        %v1908 = vadd.f32 %v1876, 1e-05
        %v1909 = vadd.f32 %v1877, 1e-05
        %v1910 = vadd.f32 %v1878, 1e-05
        %v1911 = vadd.f32 %v1879, 1e-05
        %v1912 = vadd.f32 %v1880, 1e-05
        %v1913 = vadd.f32 %v1881, 1e-05
        %v1914 = vadd.f32 %v1882, 1e-05
        %v1915 = vadd.f32 %v1883, 1e-05
        %v1916 = vadd.f32 %v1884, 1e-05
        %v1917 = vadd.f32 %v1885, 1e-05
        %v1918 = vadd.f32 %v1886, 1e-05
        %v1919 = vadd.f32 %v1887, 1e-05
        %v1920 = vadd.f32 %v1888, 1e-05
        %v1921 = vadd.f32 %v1889, 1e-05
        %v1922 = vadd.f32 %v1890, 1e-05
        %v1923 = vadd.f32 %v1891, 1e-05
        %v1924 = vadd.f32 %v1892, 1e-05
        %v1925 = vadd.f32 %v1893, 1e-05
        %v1926 = vadd.f32 %v1894, 1e-05
        %v1927 = vadd.f32 %v1895, 1e-05
        %v1928 = vadd.f32 %v1896, 1e-05
        %v1929 = vrsqrt.pop %v1897
        %v1930 = vrsqrt.pop %v1898
        %v1931 = vrsqrt.pop %v1899
        %v1932 = vrsqrt.pop %v1900
        %v1933 = vrsqrt.pop %v1901
        %v1934 = vrsqrt.pop %v1902
        %v1935 = vrsqrt.pop %v1903
        %v1936 = vrsqrt.pop %v1904
        %v1937 = vrsqrt.pop %v1905
        %v1938 = vrsqrt.pop %v1906
        %v1939 = vrsqrt.pop %v1907
        %v1940 = vrsqrt.pop %v1908
        %v1941 = vrsqrt.pop %v1909
        %v1942 = vrsqrt.pop %v1910
        %v1943 = vrsqrt.pop %v1911
        %v1944 = vrsqrt.pop %v1912
        %v1945 = vrsqrt.pop %v1913
        %v1946 = vrsqrt.pop %v1914
        %v1947 = vrsqrt.pop %v1915
        %v1948 = vrsqrt.pop %v1916
        %v1949 = vrsqrt.pop %v1917
        %v1950 = vrsqrt.pop %v1918
        %v1951 = vrsqrt.pop %v1919
        %v1952 = vrsqrt.pop %v1920
        %v1953 = vrsqrt.pop %v1921
        %v1954 = vrsqrt.pop %v1922
        %v1955 = vrsqrt.pop %v1923
        %v1956 = vrsqrt.pop %v1924
        %v1957 = vrsqrt.pop %v1925
        %v1958 = vrsqrt.pop %v1926
        %v1959 = vrsqrt.pop %v1927
        %v1960 = vrsqrt.pop %v1928
        %v1961 = vmul.f32 %v1705, %v1929
        %v1962 = vmul.f32 %v1706, %v1930
        %v1963 = vmul.f32 %v1707, %v1931
        %v1964 = vmul.f32 %v1708, %v1932
        %v1965 = vmul.f32 %v1709, %v1933
        %v1966 = vmul.f32 %v1710, %v1934
        %v1967 = vmul.f32 %v1711, %v1935
        %v1968 = vmul.f32 %v1712, %v1936
        %v1969 = vmul.f32 %v1713, %v1937
        %v1970 = vmul.f32 %v1714, %v1938
        %v1971 = vmul.f32 %v1715, %v1939
        %v1972 = vmul.f32 %v1716, %v1940
        %v1973 = vmul.f32 %v1717, %v1941
        %v1974 = vmul.f32 %v1718, %v1942
        %v1975 = vmul.f32 %v1719, %v1943
        %v1976 = vmul.f32 %v1720, %v1944
        %v1977 = vmul.f32 %v1721, %v1945
        %v1978 = vmul.f32 %v1722, %v1946
        %v1979 = vmul.f32 %v1723, %v1947
        %v1980 = vmul.f32 %v1724, %v1948
        %v1981 = vmul.f32 %v1725, %v1949
        %v1982 = vmul.f32 %v1726, %v1950
        %v1983 = vmul.f32 %v1727, %v1951
        %v1984 = vmul.f32 %v1728, %v1952
        %v1985 = vmul.f32 %v1729, %v1953
        %v1986 = vmul.f32 %v1730, %v1954
        %v1987 = vmul.f32 %v1731, %v1955
        %v1988 = vmul.f32 %v1732, %v1956
        %v1989 = vmul.f32 %v1733, %v1957
        %v1990 = vmul.f32 %v1734, %v1958
        %v1991 = vmul.f32 %v1735, %v1959
        %v1992 = vmul.f32 %v1736, %v1960
        %v1994 = vlaneseq
        %v1995 = vshrl.u32 %v1994, 7
        %v1996 = vsub.s32 0, %v1995
        %v1997 = vrot.slane %v1574, %v1996
        %v1999 = vmul.f32 %v1961, %v1997
        %v2000 = vmul.f32 %v1962, %v1997
        %v2001 = vmul.f32 %v1963, %v1997
        %v2002 = vmul.f32 %v1964, %v1997
        %v2003 = vmul.f32 %v1965, %v1997
        %v2004 = vmul.f32 %v1966, %v1997
        %v2005 = vmul.f32 %v1967, %v1997
        %v2006 = vmul.f32 %v1968, %v1997
        %v2007 = vmul.f32 %v1969, %v1997
        %v2008 = vmul.f32 %v1970, %v1997
        %v2009 = vmul.f32 %v1971, %v1997
        %v2010 = vmul.f32 %v1972, %v1997
        %v2011 = vmul.f32 %v1973, %v1997
        %v2012 = vmul.f32 %v1974, %v1997
        %v2013 = vmul.f32 %v1975, %v1997
        %v2014 = vmul.f32 %v1976, %v1997
        %v2015 = vmul.f32 %v1977, %v1997
        %v2016 = vmul.f32 %v1978, %v1997
        %v2017 = vmul.f32 %v1979, %v1997
        %v2018 = vmul.f32 %v1980, %v1997
        %v2019 = vmul.f32 %v1981, %v1997
        %v2020 = vmul.f32 %v1982, %v1997
        %v2021 = vmul.f32 %v1983, %v1997
        %v2022 = vmul.f32 %v1984, %v1997
        %v2023 = vmul.f32 %v1985, %v1997
        %v2024 = vmul.f32 %v1986, %v1997
        %v2025 = vmul.f32 %v1987, %v1997
        %v2026 = vmul.f32 %v1988, %v1997
        %v2027 = vmul.f32 %v1989, %v1997
        %v2028 = vmul.f32 %v1990, %v1997
        %v2029 = vmul.f32 %v1991, %v1997
        %v2030 = vmul.f32 %v1992, %v1997
        %v2032 = vlaneseq
        %v2033 = vshrl.u32 %v2032, 7
        %v2034 = vsub.s32 0, %v2033
        %v2035 = vrot.slane %v1575, %v2034
        %v2037 = vadd.f32 %v1999, %v2035
        %v2038 = vadd.f32 %v2000, %v2035
        %v2039 = vadd.f32 %v2001, %v2035
        %v2040 = vadd.f32 %v2002, %v2035
        %v2041 = vadd.f32 %v2003, %v2035
        %v2042 = vadd.f32 %v2004, %v2035
        %v2043 = vadd.f32 %v2005, %v2035
        %v2044 = vadd.f32 %v2006, %v2035
        %v2045 = vadd.f32 %v2007, %v2035
        %v2046 = vadd.f32 %v2008, %v2035
        %v2047 = vadd.f32 %v2009, %v2035
        %v2048 = vadd.f32 %v2010, %v2035
        %v2049 = vadd.f32 %v2011, %v2035
        %v2050 = vadd.f32 %v2012, %v2035
        %v2051 = vadd.f32 %v2013, %v2035
        %v2052 = vadd.f32 %v2014, %v2035
        %v2053 = vadd.f32 %v2015, %v2035
        %v2054 = vadd.f32 %v2016, %v2035
        %v2055 = vadd.f32 %v2017, %v2035
        %v2056 = vadd.f32 %v2018, %v2035
        %v2057 = vadd.f32 %v2019, %v2035
        %v2058 = vadd.f32 %v2020, %v2035
        %v2059 = vadd.f32 %v2021, %v2035
        %v2060 = vadd.f32 %v2022, %v2035
        %v2061 = vadd.f32 %v2023, %v2035
        %v2062 = vadd.f32 %v2024, %v2035
        %v2063 = vadd.f32 %v2025, %v2035
        %v2064 = vadd.f32 %v2026, %v2035
        %v2065 = vadd.f32 %v2027, %v2035
        %v2066 = vadd.f32 %v2028, %v2035
        %v2067 = vadd.f32 %v2029, %v2035
        %v2068 = vadd.f32 %v2030, %v2035
        %v2069 = vpack.c.bf16 %v2038, %v2037
        %v2070 = vpack.c.bf16 %v2040, %v2039
        %v2071 = vpack.c.bf16 %v2042, %v2041
        %v2072 = vpack.c.bf16 %v2044, %v2043
        %v2073 = vpack.c.bf16 %v2046, %v2045
        %v2074 = vpack.c.bf16 %v2048, %v2047
        %v2075 = vpack.c.bf16 %v2050, %v2049
        %v2076 = vpack.c.bf16 %v2052, %v2051
        %v2077 = vpack.c.bf16 %v2054, %v2053
        %v2078 = vpack.c.bf16 %v2056, %v2055
        %v2079 = vpack.c.bf16 %v2058, %v2057
        %v2080 = vpack.c.bf16 %v2060, %v2059
        %v2081 = vpack.c.bf16 %v2062, %v2061
        %v2082 = vpack.c.bf16 %v2064, %v2063
        %v2083 = vpack.c.bf16 %v2066, %v2065
        %v2084 = vpack.c.bf16 %v2068, %v2067
        %v2085 = vld [vmem:[%s10] sm:$0xf]
        %v2086 = vld [vmem:[%s10 + $0x4] sm:$0xf]
        %v2087 = vld [vmem:[%s10 + $0x8] sm:$0xf]
        %v2088 = vld [vmem:[%s10 + $0xc] sm:$0xf]
        %v2089 = vld [vmem:[%s10 + $0x10] sm:$0xf]
        %v2090 = vld [vmem:[%s10 + $0x14] sm:$0xf]
        %v2091 = vld [vmem:[%s10 + $0x18] sm:$0xf]
        %v2092 = vld [vmem:[%s10 + $0x1c] sm:$0xf]
        %v2101 = vunpack.c.l.b16 %v2085
        %v2102 = vunpack.c.l.b16 %v2086
        %v2103 = vunpack.c.l.b16 %v2087
        %v2104 = vunpack.c.l.b16 %v2088
        %v2105 = vunpack.c.l.b16 %v2089
        %v2106 = vunpack.c.l.b16 %v2090
        %v2107 = vunpack.c.l.b16 %v2091
        %v2108 = vunpack.c.l.b16 %v2092
        %v2109 = vpack.c.b16 %v2102, %v2101
        %v2110 = vpack.c.b16 %v2104, %v2103
        %v2111 = vpack.c.b16 %v2106, %v2105
        %v2112 = vpack.c.b16 %v2108, %v2107
        %v2118 = vsel %vm723, %v2069, 0
        %v2121 = vsel %vm723, %v2070, 0
        %v2124 = vsel %vm723, %v2071, 0
        %v2127 = vsel %vm723, %v2072, 0
        %v2130 = vsel %vm723, %v2073, 0
        %v2133 = vsel %vm723, %v2074, 0
        %v2136 = vsel %vm723, %v2075, 0
        %v2139 = vsel %vm723, %v2076, 0
        %v2142 = vsel %vm723, %v2077, 0
        %v2145 = vsel %vm723, %v2078, 0
        %v2148 = vsel %vm723, %v2079, 0
        %v2151 = vsel %vm723, %v2080, 0
        %v2154 = vsel %vm723, %v2081, 0
        %v2157 = vsel %vm723, %v2082, 0
        %v2160 = vsel %vm723, %v2083, 0
        %v2163 = vsel %vm723, %v2084, 0
        %2165 = vmatprep.subr.bf16.mxu0 0
        %2166 = vmatpush1.bf16.msra.mxu0 0
        %2167 = vmatprep.subr.bf16.mxu0 0
        %2168 = vmatpush1.bf16.msra.mxu0 0
        %2169 = vmatprep.subr.bf16.mxu0 0
        %2170 = vmatpush1.bf16.msra.mxu0 0
        %2171 = vmatprep.subr.bf16.mxu0 0
        %2172 = vmatpush1.bf16.msra.mxu0 0
        %2173 = vmatprep.subr.bf16.mxu0 0
        %2174 = vmatpush1.bf16.msra.mxu0 %v2112
        %2175 = vmatprep.subr.bf16.mxu0 0
        %2176 = vmatpush1.bf16.msra.mxu0 %v2111
        %2177 = vmatprep.subr.bf16.mxu0 0
        %2178 = vmatpush1.bf16.msra.mxu0 %v2110
        %2179 = vmatprep.subr.bf16.mxu0 0
        %2180 = vmatpush1.bf16.msra.mxu0 %v2109
        %2181 = vmatprep.subr.bf16.mxu0 0
        %2182 = vmatpush2.bf16.msra.mxu0 0
        %2183 = vmatprep.subr.bf16.mxu0 0
        %2184 = vmatpush2.bf16.msra.mxu0 0
        %2185 = vmatprep.subr.bf16.mxu0 0
        %2186 = vmatpush2.bf16.msra.mxu0 0
        %2187 = vmatprep.subr.bf16.mxu0 0
        %2188 = vmatpush2.bf16.msra.mxu0 0
        %2189 = vmatprep.subr.bf16.mxu0 0
        %2190 = vmatpush2.bf16.msra.mxu0 0
        %2191 = vmatprep.subr.bf16.mxu0 0
        %2192 = vmatpush2.bf16.msra.mxu0 0
        %2193 = vmatprep.subr.bf16.mxu0 0
        %2194 = vmatpush2.bf16.msra.mxu0 0
        %2195 = vmatprep.subr.bf16.mxu0 0
        %2196 = vmatpush2.bf16.msra.mxu0 0
        %2197 = vmatprep.mubr.bf16.mxu0 0
        %2198 = vmatmul.mubr.bf16.gmra.mxu0 %v2118
        %v2199 = vpop.f32.mrf.mxu0
        %v2200 = vadd.f32 0.0, %v2199
        %v2201 = vpop.f32.mrf.mxu0
        %v2202 = vpop.f32.mrf.mxu0
        %v2203 = vadd.f32 0.0, %v2202
        %v2204 = vpop.f32.mrf.mxu0
        %2205 = vmatprep.mubr.bf16.mxu0 0
        %2206 = vmatmul.mubr.bf16.gmra.mxu0 %v2121
        %v2207 = vpop.f32.mrf.mxu0
        %v2208 = vadd.f32 0.0, %v2207
        %v2209 = vpop.f32.mrf.mxu0
        %v2210 = vpop.f32.mrf.mxu0
        %v2211 = vadd.f32 0.0, %v2210
        %v2212 = vpop.f32.mrf.mxu0
        %2213 = vmatprep.mubr.bf16.mxu0 0
        %2214 = vmatmul.mubr.bf16.gmra.mxu0 %v2124
        %v2215 = vpop.f32.mrf.mxu0
        %v2216 = vadd.f32 0.0, %v2215
        %v2217 = vpop.f32.mrf.mxu0
        %v2218 = vpop.f32.mrf.mxu0
        %v2219 = vadd.f32 0.0, %v2218
        %v2220 = vpop.f32.mrf.mxu0
        %2221 = vmatprep.mubr.bf16.mxu0 0
        %2222 = vmatmul.mubr.bf16.gmra.mxu0 %v2127
        %v2223 = vpop.f32.mrf.mxu0
        %v2224 = vadd.f32 0.0, %v2223
        %v2225 = vpop.f32.mrf.mxu0
        %v2226 = vpop.f32.mrf.mxu0
        %v2227 = vadd.f32 0.0, %v2226
        %v2228 = vpop.f32.mrf.mxu0
        %2229 = vmatprep.mubr.bf16.mxu0 0
        %2230 = vmatmul.mubr.bf16.gmra.mxu0 %v2130
        %v2231 = vpop.f32.mrf.mxu0
        %v2232 = vadd.f32 0.0, %v2231
        %v2233 = vpop.f32.mrf.mxu0
        %v2234 = vpop.f32.mrf.mxu0
        %v2235 = vadd.f32 0.0, %v2234
        %v2236 = vpop.f32.mrf.mxu0
        %2237 = vmatprep.mubr.bf16.mxu0 0
        %2238 = vmatmul.mubr.bf16.gmra.mxu0 %v2133
        %v2239 = vpop.f32.mrf.mxu0
        %v2240 = vadd.f32 0.0, %v2239
        %v2241 = vpop.f32.mrf.mxu0
        %v2242 = vpop.f32.mrf.mxu0
        %v2243 = vadd.f32 0.0, %v2242
        %v2244 = vpop.f32.mrf.mxu0
        %2245 = vmatprep.mubr.bf16.mxu0 0
        %2246 = vmatmul.mubr.bf16.gmra.mxu0 %v2136
        %v2247 = vpop.f32.mrf.mxu0
        %v2248 = vadd.f32 0.0, %v2247
        %v2249 = vpop.f32.mrf.mxu0
        %v2250 = vpop.f32.mrf.mxu0
        %v2251 = vadd.f32 0.0, %v2250
        %v2252 = vpop.f32.mrf.mxu0
        %2253 = vmatprep.mubr.bf16.mxu0 0
        %2254 = vmatmul.mubr.bf16.gmra.mxu0 %v2139
        %v2255 = vpop.f32.mrf.mxu0
        %v2256 = vadd.f32 0.0, %v2255
        %v2257 = vpop.f32.mrf.mxu0
        %v2258 = vpop.f32.mrf.mxu0
        %v2259 = vadd.f32 0.0, %v2258
        %v2260 = vpop.f32.mrf.mxu0
        %2261 = vmatprep.mubr.bf16.mxu0 0
        %2262 = vmatmul.mubr.bf16.gmra.mxu0 %v2142
        %v2263 = vpop.f32.mrf.mxu0
        %v2264 = vadd.f32 0.0, %v2263
        %v2265 = vpop.f32.mrf.mxu0
        %v2266 = vpop.f32.mrf.mxu0
        %v2267 = vadd.f32 0.0, %v2266
        %v2268 = vpop.f32.mrf.mxu0
        %2269 = vmatprep.mubr.bf16.mxu0 0
        %2270 = vmatmul.mubr.bf16.gmra.mxu0 %v2145
        %v2271 = vpop.f32.mrf.mxu0
        %v2272 = vadd.f32 0.0, %v2271
        %v2273 = vpop.f32.mrf.mxu0
        %v2274 = vpop.f32.mrf.mxu0
        %v2275 = vadd.f32 0.0, %v2274
        %v2276 = vpop.f32.mrf.mxu0
        %2277 = vmatprep.mubr.bf16.mxu0 0
        %2278 = vmatmul.mubr.bf16.gmra.mxu0 %v2148
        %v2279 = vpop.f32.mrf.mxu0
        %v2280 = vadd.f32 0.0, %v2279
        %v2281 = vpop.f32.mrf.mxu0
        %v2282 = vpop.f32.mrf.mxu0
        %v2283 = vadd.f32 0.0, %v2282
        %v2284 = vpop.f32.mrf.mxu0
        %2285 = vmatprep.mubr.bf16.mxu0 0
        %2286 = vmatmul.mubr.bf16.gmra.mxu0 %v2151
        %v2287 = vpop.f32.mrf.mxu0
        %v2288 = vadd.f32 0.0, %v2287
        %v2289 = vpop.f32.mrf.mxu0
        %v2290 = vpop.f32.mrf.mxu0
        %v2291 = vadd.f32 0.0, %v2290
        %v2292 = vpop.f32.mrf.mxu0
        %2293 = vmatprep.mubr.bf16.mxu0 0
        %2294 = vmatmul.mubr.bf16.gmra.mxu0 %v2154
        %v2295 = vpop.f32.mrf.mxu0
        %v2296 = vadd.f32 0.0, %v2295
        %v2297 = vpop.f32.mrf.mxu0
        %v2298 = vpop.f32.mrf.mxu0
        %v2299 = vadd.f32 0.0, %v2298
        %v2300 = vpop.f32.mrf.mxu0
        %2301 = vmatprep.mubr.bf16.mxu0 0
        %2302 = vmatmul.mubr.bf16.gmra.mxu0 %v2157
        %v2303 = vpop.f32.mrf.mxu0
        %v2304 = vadd.f32 0.0, %v2303
        %v2305 = vpop.f32.mrf.mxu0
        %v2306 = vpop.f32.mrf.mxu0
        %v2307 = vadd.f32 0.0, %v2306
        %v2308 = vpop.f32.mrf.mxu0
        %2309 = vmatprep.mubr.bf16.mxu0 0
        %2310 = vmatmul.mubr.bf16.gmra.mxu0 %v2160
        %v2311 = vpop.f32.mrf.mxu0
        %v2312 = vadd.f32 0.0, %v2311
        %v2313 = vpop.f32.mrf.mxu0
        %v2314 = vpop.f32.mrf.mxu0
        %v2315 = vadd.f32 0.0, %v2314
        %v2316 = vpop.f32.mrf.mxu0
        %2317 = vmatprep.mubr.bf16.mxu0 0
        %2318 = vmatmul.mubr.bf16.gmra.mxu0 %v2163
        %v2319 = vpop.f32.mrf.mxu0
        %v2320 = vadd.f32 0.0, %v2319
        %v2321 = vpop.f32.mrf.mxu0
        %v2322 = vpop.f32.mrf.mxu0
        %v2323 = vadd.f32 0.0, %v2322
        %v2324 = vpop.f32.mrf.mxu0
        %2325 = vdwg.mxu0
        %v2326 = vpack.c.bf16 %v2203, %v2200
        %v2327 = vpack.c.bf16 %v2211, %v2208
        %v2328 = vpack.c.bf16 %v2219, %v2216
        %v2329 = vpack.c.bf16 %v2227, %v2224
        %v2330 = vpack.c.bf16 %v2235, %v2232
        %v2331 = vpack.c.bf16 %v2243, %v2240
        %v2332 = vpack.c.bf16 %v2251, %v2248
        %v2333 = vpack.c.bf16 %v2259, %v2256
        %v2334 = vpack.c.bf16 %v2267, %v2264
        %v2335 = vpack.c.bf16 %v2275, %v2272
        %v2336 = vpack.c.bf16 %v2283, %v2280
        %v2337 = vpack.c.bf16 %v2291, %v2288
        %v2338 = vpack.c.bf16 %v2299, %v2296
        %v2339 = vpack.c.bf16 %v2307, %v2304
        %v2340 = vpack.c.bf16 %v2315, %v2312
        %v2341 = vpack.c.bf16 %v2323, %v2320
        %v2358 = vunpack.c.l.b16 %v2326
        %v2359 = vunpack.c.h.b16 %v2326
        %v2360 = vunpack.c.l.b16 %v2327
        %v2361 = vunpack.c.h.b16 %v2327
        %v2362 = vunpack.c.l.b16 %v2328
        %v2363 = vunpack.c.h.b16 %v2328
        %v2364 = vunpack.c.l.b16 %v2329
        %v2365 = vunpack.c.h.b16 %v2329
        %v2366 = vunpack.c.l.b16 %v2330
        %v2367 = vunpack.c.h.b16 %v2330
        %v2368 = vunpack.c.l.b16 %v2331
        %v2369 = vunpack.c.h.b16 %v2331
        %v2370 = vunpack.c.l.b16 %v2332
        %v2371 = vunpack.c.h.b16 %v2332
        %v2372 = vunpack.c.l.b16 %v2333
        %v2373 = vunpack.c.h.b16 %v2333
        %v2374 = vunpack.c.l.b16 %v2334
        %v2375 = vunpack.c.h.b16 %v2334
        %v2376 = vunpack.c.l.b16 %v2335
        %v2377 = vunpack.c.h.b16 %v2335
        %v2378 = vunpack.c.l.b16 %v2336
        %v2379 = vunpack.c.h.b16 %v2336
        %v2380 = vunpack.c.l.b16 %v2337
        %v2381 = vunpack.c.h.b16 %v2337
        %v2382 = vunpack.c.l.b16 %v2338
        %v2383 = vunpack.c.h.b16 %v2338
        %v2384 = vunpack.c.l.b16 %v2339
        %v2385 = vunpack.c.h.b16 %v2339
        %v2386 = vunpack.c.l.b16 %v2340
        %v2387 = vunpack.c.h.b16 %v2340
        %v2388 = vunpack.c.l.b16 %v2341
        %v2389 = vunpack.c.h.b16 %v2341
        %v2390 = vpack.c.b16 %v2358, %v2358
        %v2391 = vpack.c.b16 %v2359, %v2359
        %v2392 = vpack.c.b16 %v2360, %v2360
        %v2393 = vpack.c.b16 %v2361, %v2361
        %v2394 = vpack.c.b16 %v2362, %v2362
        %v2395 = vpack.c.b16 %v2363, %v2363
        %v2396 = vpack.c.b16 %v2364, %v2364
        %v2397 = vpack.c.b16 %v2365, %v2365
        %v2398 = vpack.c.b16 %v2366, %v2366
        %v2399 = vpack.c.b16 %v2367, %v2367
        %v2400 = vpack.c.b16 %v2368, %v2368
        %v2401 = vpack.c.b16 %v2369, %v2369
        %v2402 = vpack.c.b16 %v2370, %v2370
        %v2403 = vpack.c.b16 %v2371, %v2371
        %v2404 = vpack.c.b16 %v2372, %v2372
        %v2405 = vpack.c.b16 %v2373, %v2373
        %v2406 = vpack.c.b16 %v2374, %v2374
        %v2407 = vpack.c.b16 %v2375, %v2375
        %v2408 = vpack.c.b16 %v2376, %v2376
        %v2409 = vpack.c.b16 %v2377, %v2377
        %v2410 = vpack.c.b16 %v2378, %v2378
        %v2411 = vpack.c.b16 %v2379, %v2379
        %v2412 = vpack.c.b16 %v2380, %v2380
        %v2413 = vpack.c.b16 %v2381, %v2381
        %v2414 = vpack.c.b16 %v2382, %v2382
        %v2415 = vpack.c.b16 %v2383, %v2383
        %v2416 = vpack.c.b16 %v2384, %v2384
        %v2417 = vpack.c.b16 %v2385, %v2385
        %v2418 = vpack.c.b16 %v2386, %v2386
        %v2419 = vpack.c.b16 %v2387, %v2387
        %v2420 = vpack.c.b16 %v2388, %v2388
        %v2421 = vpack.c.b16 %v2389, %v2389
        %vm2454 = vcmask 519168
        %2455 = vst.msk [vmem:[%s662] sm:$0xf] %vm2454, %v2390
        %2456 = vst.msk [vmem:[%s662 + $0x4] sm:$0xf] %vm2454, %v2391
        %2457 = vst.msk [vmem:[%s662 + $0x8] sm:$0xf] %vm2454, %v2392
        %2458 = vst.msk [vmem:[%s662 + $0xc] sm:$0xf] %vm2454, %v2393
        %2459 = vst.msk [vmem:[%s662 + $0x10] sm:$0xf] %vm2454, %v2394
        %2460 = vst.msk [vmem:[%s662 + $0x14] sm:$0xf] %vm2454, %v2395
        %2461 = vst.msk [vmem:[%s662 + $0x18] sm:$0xf] %vm2454, %v2396
        %2462 = vst.msk [vmem:[%s662 + $0x1c] sm:$0xf] %vm2454, %v2397
        %2463 = vst.msk [vmem:[%s662 + $0x20] sm:$0xf] %vm2454, %v2398
        %2464 = vst.msk [vmem:[%s662 + $0x24] sm:$0xf] %vm2454, %v2399
        %2465 = vst.msk [vmem:[%s662 + $0x28] sm:$0xf] %vm2454, %v2400
        %2466 = vst.msk [vmem:[%s662 + $0x2c] sm:$0xf] %vm2454, %v2401
        %2467 = vst.msk [vmem:[%s662 + $0x30] sm:$0xf] %vm2454, %v2402
        %2468 = vst.msk [vmem:[%s662 + $0x34] sm:$0xf] %vm2454, %v2403
        %2469 = vst.msk [vmem:[%s662 + $0x38] sm:$0xf] %vm2454, %v2404
        %2470 = vst.msk [vmem:[%s662 + $0x3c] sm:$0xf] %vm2454, %v2405
        %2471 = vst.msk [vmem:[%s662 + $0x40] sm:$0xf] %vm2454, %v2406
        %2472 = vst.msk [vmem:[%s662 + $0x44] sm:$0xf] %vm2454, %v2407
        %2473 = vst.msk [vmem:[%s662 + $0x48] sm:$0xf] %vm2454, %v2408
        %2474 = vst.msk [vmem:[%s662 + $0x4c] sm:$0xf] %vm2454, %v2409
        %2475 = vst.msk [vmem:[%s662 + $0x50] sm:$0xf] %vm2454, %v2410
        %2476 = vst.msk [vmem:[%s662 + $0x54] sm:$0xf] %vm2454, %v2411
        %2477 = vst.msk [vmem:[%s662 + $0x58] sm:$0xf] %vm2454, %v2412
        %2478 = vst.msk [vmem:[%s662 + $0x5c] sm:$0xf] %vm2454, %v2413
        %2479 = vst.msk [vmem:[%s662 + $0x60] sm:$0xf] %vm2454, %v2414
        %2480 = vst.msk [vmem:[%s662 + $0x64] sm:$0xf] %vm2454, %v2415
        %2481 = vst.msk [vmem:[%s662 + $0x68] sm:$0xf] %vm2454, %v2416
        %2482 = vst.msk [vmem:[%s662 + $0x6c] sm:$0xf] %vm2454, %v2417
        %2483 = vst.msk [vmem:[%s662 + $0x70] sm:$0xf] %vm2454, %v2418
        %2484 = vst.msk [vmem:[%s662 + $0x74] sm:$0xf] %vm2454, %v2419
        %2485 = vst.msk [vmem:[%s662 + $0x78] sm:$0xf] %vm2454, %v2420
        %2486 = vst.msk [vmem:[%s662 + $0x7c] sm:$0xf] %vm2454, %v2421
        %v2487 = vld [vmem:[%s11] sm:$0xf]
        %v2488 = vld [vmem:[%s11 + $0x4] sm:$0xf]
        %v2489 = vld [vmem:[%s11 + $0x8] sm:$0xf]
        %v2490 = vld [vmem:[%s11 + $0xc] sm:$0xf]
        %v2491 = vld [vmem:[%s11 + $0x10] sm:$0xf]
        %v2492 = vld [vmem:[%s11 + $0x14] sm:$0xf]
        %v2493 = vld [vmem:[%s11 + $0x18] sm:$0xf]
        %v2494 = vld [vmem:[%s11 + $0x1c] sm:$0xf]
        %v2503 = vunpack.c.l.b16 %v2487
        %v2504 = vunpack.c.l.b16 %v2488
        %v2505 = vunpack.c.l.b16 %v2489
        %v2506 = vunpack.c.l.b16 %v2490
        %v2507 = vunpack.c.l.b16 %v2491
        %v2508 = vunpack.c.l.b16 %v2492
        %v2509 = vunpack.c.l.b16 %v2493
        %v2510 = vunpack.c.l.b16 %v2494
        %v2511 = vpack.c.b16 %v2504, %v2503
        %v2512 = vpack.c.b16 %v2506, %v2505
        %v2513 = vpack.c.b16 %v2508, %v2507
        %v2514 = vpack.c.b16 %v2510, %v2509
        %2519 = vmatprep.subr.bf16.mxu0 0
        %2520 = vmatpush1.bf16.msra.mxu0 0
        %2521 = vmatprep.subr.bf16.mxu0 0
        %2522 = vmatpush1.bf16.msra.mxu0 0
        %2523 = vmatprep.subr.bf16.mxu0 0
        %2524 = vmatpush1.bf16.msra.mxu0 0
        %2525 = vmatprep.subr.bf16.mxu0 0
        %2526 = vmatpush1.bf16.msra.mxu0 0
        %2527 = vmatprep.subr.bf16.mxu0 0
        %2528 = vmatpush1.bf16.msra.mxu0 %v2514
        %2529 = vmatprep.subr.bf16.mxu0 0
        %2530 = vmatpush1.bf16.msra.mxu0 %v2513
        %2531 = vmatprep.subr.bf16.mxu0 0
        %2532 = vmatpush1.bf16.msra.mxu0 %v2512
        %2533 = vmatprep.subr.bf16.mxu0 0
        %2534 = vmatpush1.bf16.msra.mxu0 %v2511
        %2535 = vmatprep.subr.bf16.mxu0 0
        %2536 = vmatpush2.bf16.msra.mxu0 0
        %2537 = vmatprep.subr.bf16.mxu0 0
        %2538 = vmatpush2.bf16.msra.mxu0 0
        %2539 = vmatprep.subr.bf16.mxu0 0
        %2540 = vmatpush2.bf16.msra.mxu0 0
        %2541 = vmatprep.subr.bf16.mxu0 0
        %2542 = vmatpush2.bf16.msra.mxu0 0
        %2543 = vmatprep.subr.bf16.mxu0 0
        %2544 = vmatpush2.bf16.msra.mxu0 0
        %2545 = vmatprep.subr.bf16.mxu0 0
        %2546 = vmatpush2.bf16.msra.mxu0 0
        %2547 = vmatprep.subr.bf16.mxu0 0
        %2548 = vmatpush2.bf16.msra.mxu0 0
        %2549 = vmatprep.subr.bf16.mxu0 0
        %2550 = vmatpush2.bf16.msra.mxu0 0
        %2551 = vmatprep.mubr.bf16.mxu0 0
        %2552 = vmatmul.mubr.bf16.gmra.mxu0 %v2118
        %v2553 = vpop.f32.mrf.mxu0
        %v2554 = vadd.f32 0.0, %v2553
        %v2555 = vpop.f32.mrf.mxu0
        %v2556 = vpop.f32.mrf.mxu0
        %v2557 = vadd.f32 0.0, %v2556
        %v2558 = vpop.f32.mrf.mxu0
        %2559 = vmatprep.mubr.bf16.mxu0 0
        %2560 = vmatmul.mubr.bf16.gmra.mxu0 %v2121
        %v2561 = vpop.f32.mrf.mxu0
        %v2562 = vadd.f32 0.0, %v2561
        %v2563 = vpop.f32.mrf.mxu0
        %v2564 = vpop.f32.mrf.mxu0
        %v2565 = vadd.f32 0.0, %v2564
        %v2566 = vpop.f32.mrf.mxu0
        %2567 = vmatprep.mubr.bf16.mxu0 0
        %2568 = vmatmul.mubr.bf16.gmra.mxu0 %v2124
        %v2569 = vpop.f32.mrf.mxu0
        %v2570 = vadd.f32 0.0, %v2569
        %v2571 = vpop.f32.mrf.mxu0
        %v2572 = vpop.f32.mrf.mxu0
        %v2573 = vadd.f32 0.0, %v2572
        %v2574 = vpop.f32.mrf.mxu0
        %2575 = vmatprep.mubr.bf16.mxu0 0
        %2576 = vmatmul.mubr.bf16.gmra.mxu0 %v2127
        %v2577 = vpop.f32.mrf.mxu0
        %v2578 = vadd.f32 0.0, %v2577
        %v2579 = vpop.f32.mrf.mxu0
        %v2580 = vpop.f32.mrf.mxu0
        %v2581 = vadd.f32 0.0, %v2580
        %v2582 = vpop.f32.mrf.mxu0
        %2583 = vmatprep.mubr.bf16.mxu0 0
        %2584 = vmatmul.mubr.bf16.gmra.mxu0 %v2130
        %v2585 = vpop.f32.mrf.mxu0
        %v2586 = vadd.f32 0.0, %v2585
        %v2587 = vpop.f32.mrf.mxu0
        %v2588 = vpop.f32.mrf.mxu0
        %v2589 = vadd.f32 0.0, %v2588
        %v2590 = vpop.f32.mrf.mxu0
        %2591 = vmatprep.mubr.bf16.mxu0 0
        %2592 = vmatmul.mubr.bf16.gmra.mxu0 %v2133
        %v2593 = vpop.f32.mrf.mxu0
        %v2594 = vadd.f32 0.0, %v2593
        %v2595 = vpop.f32.mrf.mxu0
        %v2596 = vpop.f32.mrf.mxu0
        %v2597 = vadd.f32 0.0, %v2596
        %v2598 = vpop.f32.mrf.mxu0
        %2599 = vmatprep.mubr.bf16.mxu0 0
        %2600 = vmatmul.mubr.bf16.gmra.mxu0 %v2136
        %v2601 = vpop.f32.mrf.mxu0
        %v2602 = vadd.f32 0.0, %v2601
        %v2603 = vpop.f32.mrf.mxu0
        %v2604 = vpop.f32.mrf.mxu0
        %v2605 = vadd.f32 0.0, %v2604
        %v2606 = vpop.f32.mrf.mxu0
        %2607 = vmatprep.mubr.bf16.mxu0 0
        %2608 = vmatmul.mubr.bf16.gmra.mxu0 %v2139
        %v2609 = vpop.f32.mrf.mxu0
        %v2610 = vadd.f32 0.0, %v2609
        %v2611 = vpop.f32.mrf.mxu0
        %v2612 = vpop.f32.mrf.mxu0
        %v2613 = vadd.f32 0.0, %v2612
        %v2614 = vpop.f32.mrf.mxu0
        %2615 = vmatprep.mubr.bf16.mxu0 0
        %2616 = vmatmul.mubr.bf16.gmra.mxu0 %v2142
        %v2617 = vpop.f32.mrf.mxu0
        %v2618 = vadd.f32 0.0, %v2617
        %v2619 = vpop.f32.mrf.mxu0
        %v2620 = vpop.f32.mrf.mxu0
        %v2621 = vadd.f32 0.0, %v2620
        %v2622 = vpop.f32.mrf.mxu0
        %2623 = vmatprep.mubr.bf16.mxu0 0
        %2624 = vmatmul.mubr.bf16.gmra.mxu0 %v2145
        %v2625 = vpop.f32.mrf.mxu0
        %v2626 = vadd.f32 0.0, %v2625
        %v2627 = vpop.f32.mrf.mxu0
        %v2628 = vpop.f32.mrf.mxu0
        %v2629 = vadd.f32 0.0, %v2628
        %v2630 = vpop.f32.mrf.mxu0
        %2631 = vmatprep.mubr.bf16.mxu0 0
        %2632 = vmatmul.mubr.bf16.gmra.mxu0 %v2148
        %v2633 = vpop.f32.mrf.mxu0
        %v2634 = vadd.f32 0.0, %v2633
        %v2635 = vpop.f32.mrf.mxu0
        %v2636 = vpop.f32.mrf.mxu0
        %v2637 = vadd.f32 0.0, %v2636
        %v2638 = vpop.f32.mrf.mxu0
        %2639 = vmatprep.mubr.bf16.mxu0 0
        %2640 = vmatmul.mubr.bf16.gmra.mxu0 %v2151
        %v2641 = vpop.f32.mrf.mxu0
        %v2642 = vadd.f32 0.0, %v2641
        %v2643 = vpop.f32.mrf.mxu0
        %v2644 = vpop.f32.mrf.mxu0
        %v2645 = vadd.f32 0.0, %v2644
        %v2646 = vpop.f32.mrf.mxu0
        %2647 = vmatprep.mubr.bf16.mxu0 0
        %2648 = vmatmul.mubr.bf16.gmra.mxu0 %v2154
        %v2649 = vpop.f32.mrf.mxu0
        %v2650 = vadd.f32 0.0, %v2649
        %v2651 = vpop.f32.mrf.mxu0
        %v2652 = vpop.f32.mrf.mxu0
        %v2653 = vadd.f32 0.0, %v2652
        %v2654 = vpop.f32.mrf.mxu0
        %2655 = vmatprep.mubr.bf16.mxu0 0
        %2656 = vmatmul.mubr.bf16.gmra.mxu0 %v2157
        %v2657 = vpop.f32.mrf.mxu0
        %v2658 = vadd.f32 0.0, %v2657
        %v2659 = vpop.f32.mrf.mxu0
        %v2660 = vpop.f32.mrf.mxu0
        %v2661 = vadd.f32 0.0, %v2660
        %v2662 = vpop.f32.mrf.mxu0
        %2663 = vmatprep.mubr.bf16.mxu0 0
        %2664 = vmatmul.mubr.bf16.gmra.mxu0 %v2160
        %v2665 = vpop.f32.mrf.mxu0
        %v2666 = vadd.f32 0.0, %v2665
        %v2667 = vpop.f32.mrf.mxu0
        %v2668 = vpop.f32.mrf.mxu0
        %v2669 = vadd.f32 0.0, %v2668
        %v2670 = vpop.f32.mrf.mxu0
        %2671 = vmatprep.mubr.bf16.mxu0 0
        %2672 = vmatmul.mubr.bf16.gmra.mxu0 %v2163
        %v2673 = vpop.f32.mrf.mxu0
        %v2674 = vadd.f32 0.0, %v2673
        %v2675 = vpop.f32.mrf.mxu0
        %v2676 = vpop.f32.mrf.mxu0
        %v2677 = vadd.f32 0.0, %v2676
        %v2678 = vpop.f32.mrf.mxu0
        %2679 = vdwg.mxu0
        %v2680 = vpack.c.bf16 %v2557, %v2554
        %v2681 = vpack.c.bf16 %v2565, %v2562
        %v2682 = vpack.c.bf16 %v2573, %v2570
        %v2683 = vpack.c.bf16 %v2581, %v2578
        %v2684 = vpack.c.bf16 %v2589, %v2586
        %v2685 = vpack.c.bf16 %v2597, %v2594
        %v2686 = vpack.c.bf16 %v2605, %v2602
        %v2687 = vpack.c.bf16 %v2613, %v2610
        %v2688 = vpack.c.bf16 %v2621, %v2618
        %v2689 = vpack.c.bf16 %v2629, %v2626
        %v2690 = vpack.c.bf16 %v2637, %v2634
        %v2691 = vpack.c.bf16 %v2645, %v2642
        %v2692 = vpack.c.bf16 %v2653, %v2650
        %v2693 = vpack.c.bf16 %v2661, %v2658
        %v2694 = vpack.c.bf16 %v2669, %v2666
        %v2695 = vpack.c.bf16 %v2677, %v2674
        %v2712 = vunpack.c.l.b16 %v2680
        %v2713 = vunpack.c.h.b16 %v2680
        %v2714 = vunpack.c.l.b16 %v2681
        %v2715 = vunpack.c.h.b16 %v2681
        %v2716 = vunpack.c.l.b16 %v2682
        %v2717 = vunpack.c.h.b16 %v2682
        %v2718 = vunpack.c.l.b16 %v2683
        %v2719 = vunpack.c.h.b16 %v2683
        %v2720 = vunpack.c.l.b16 %v2684
        %v2721 = vunpack.c.h.b16 %v2684
        %v2722 = vunpack.c.l.b16 %v2685
        %v2723 = vunpack.c.h.b16 %v2685
        %v2724 = vunpack.c.l.b16 %v2686
        %v2725 = vunpack.c.h.b16 %v2686
        %v2726 = vunpack.c.l.b16 %v2687
        %v2727 = vunpack.c.h.b16 %v2687
        %v2728 = vunpack.c.l.b16 %v2688
        %v2729 = vunpack.c.h.b16 %v2688
        %v2730 = vunpack.c.l.b16 %v2689
        %v2731 = vunpack.c.h.b16 %v2689
        %v2732 = vunpack.c.l.b16 %v2690
        %v2733 = vunpack.c.h.b16 %v2690
        %v2734 = vunpack.c.l.b16 %v2691
        %v2735 = vunpack.c.h.b16 %v2691
        %v2736 = vunpack.c.l.b16 %v2692
        %v2737 = vunpack.c.h.b16 %v2692
        %v2738 = vunpack.c.l.b16 %v2693
        %v2739 = vunpack.c.h.b16 %v2693
        %v2740 = vunpack.c.l.b16 %v2694
        %v2741 = vunpack.c.h.b16 %v2694
        %v2742 = vunpack.c.l.b16 %v2695
        %v2743 = vunpack.c.h.b16 %v2695
        %v2744 = vpack.c.b16 %v2712, %v2712
        %v2745 = vpack.c.b16 %v2713, %v2713
        %v2746 = vpack.c.b16 %v2714, %v2714
        %v2747 = vpack.c.b16 %v2715, %v2715
        %v2748 = vpack.c.b16 %v2716, %v2716
        %v2749 = vpack.c.b16 %v2717, %v2717
        %v2750 = vpack.c.b16 %v2718, %v2718
        %v2751 = vpack.c.b16 %v2719, %v2719
        %v2752 = vpack.c.b16 %v2720, %v2720
        %v2753 = vpack.c.b16 %v2721, %v2721
        %v2754 = vpack.c.b16 %v2722, %v2722
        %v2755 = vpack.c.b16 %v2723, %v2723
        %v2756 = vpack.c.b16 %v2724, %v2724
        %v2757 = vpack.c.b16 %v2725, %v2725
        %v2758 = vpack.c.b16 %v2726, %v2726
        %v2759 = vpack.c.b16 %v2727, %v2727
        %v2760 = vpack.c.b16 %v2728, %v2728
        %v2761 = vpack.c.b16 %v2729, %v2729
        %v2762 = vpack.c.b16 %v2730, %v2730
        %v2763 = vpack.c.b16 %v2731, %v2731
        %v2764 = vpack.c.b16 %v2732, %v2732
        %v2765 = vpack.c.b16 %v2733, %v2733
        %v2766 = vpack.c.b16 %v2734, %v2734
        %v2767 = vpack.c.b16 %v2735, %v2735
        %v2768 = vpack.c.b16 %v2736, %v2736
        %v2769 = vpack.c.b16 %v2737, %v2737
        %v2770 = vpack.c.b16 %v2738, %v2738
        %v2771 = vpack.c.b16 %v2739, %v2739
        %v2772 = vpack.c.b16 %v2740, %v2740
        %v2773 = vpack.c.b16 %v2741, %v2741
        %v2774 = vpack.c.b16 %v2742, %v2742
        %v2775 = vpack.c.b16 %v2743, %v2743
        %2808 = vst.msk [vmem:[%s667] sm:$0xf] %vm2454, %v2744
        %2809 = vst.msk [vmem:[%s667 + $0x4] sm:$0xf] %vm2454, %v2745
        %2810 = vst.msk [vmem:[%s667 + $0x8] sm:$0xf] %vm2454, %v2746
        %2811 = vst.msk [vmem:[%s667 + $0xc] sm:$0xf] %vm2454, %v2747
        %2812 = vst.msk [vmem:[%s667 + $0x10] sm:$0xf] %vm2454, %v2748
        %2813 = vst.msk [vmem:[%s667 + $0x14] sm:$0xf] %vm2454, %v2749
        %2814 = vst.msk [vmem:[%s667 + $0x18] sm:$0xf] %vm2454, %v2750
        %2815 = vst.msk [vmem:[%s667 + $0x1c] sm:$0xf] %vm2454, %v2751
        %2816 = vst.msk [vmem:[%s667 + $0x20] sm:$0xf] %vm2454, %v2752
        %2817 = vst.msk [vmem:[%s667 + $0x24] sm:$0xf] %vm2454, %v2753
        %2818 = vst.msk [vmem:[%s667 + $0x28] sm:$0xf] %vm2454, %v2754
        %2819 = vst.msk [vmem:[%s667 + $0x2c] sm:$0xf] %vm2454, %v2755
        %2820 = vst.msk [vmem:[%s667 + $0x30] sm:$0xf] %vm2454, %v2756
        %2821 = vst.msk [vmem:[%s667 + $0x34] sm:$0xf] %vm2454, %v2757
        %2822 = vst.msk [vmem:[%s667 + $0x38] sm:$0xf] %vm2454, %v2758
        %2823 = vst.msk [vmem:[%s667 + $0x3c] sm:$0xf] %vm2454, %v2759
        %2824 = vst.msk [vmem:[%s667 + $0x40] sm:$0xf] %vm2454, %v2760
        %2825 = vst.msk [vmem:[%s667 + $0x44] sm:$0xf] %vm2454, %v2761
        %2826 = vst.msk [vmem:[%s667 + $0x48] sm:$0xf] %vm2454, %v2762
        %2827 = vst.msk [vmem:[%s667 + $0x4c] sm:$0xf] %vm2454, %v2763
        %2828 = vst.msk [vmem:[%s667 + $0x50] sm:$0xf] %vm2454, %v2764
        %2829 = vst.msk [vmem:[%s667 + $0x54] sm:$0xf] %vm2454, %v2765
        %2830 = vst.msk [vmem:[%s667 + $0x58] sm:$0xf] %vm2454, %v2766
        %2831 = vst.msk [vmem:[%s667 + $0x5c] sm:$0xf] %vm2454, %v2767
        %2832 = vst.msk [vmem:[%s667 + $0x60] sm:$0xf] %vm2454, %v2768
        %2833 = vst.msk [vmem:[%s667 + $0x64] sm:$0xf] %vm2454, %v2769
        %2834 = vst.msk [vmem:[%s667 + $0x68] sm:$0xf] %vm2454, %v2770
        %2835 = vst.msk [vmem:[%s667 + $0x6c] sm:$0xf] %vm2454, %v2771
        %2836 = vst.msk [vmem:[%s667 + $0x70] sm:$0xf] %vm2454, %v2772
        %2837 = vst.msk [vmem:[%s667 + $0x74] sm:$0xf] %vm2454, %v2773
        %2838 = vst.msk [vmem:[%s667 + $0x78] sm:$0xf] %vm2454, %v2774
        %2839 = vst.msk [vmem:[%s667 + $0x7c] sm:$0xf] %vm2454, %v2775
        %v2840 = vld [vmem:[%s657] sm:$0xff]
        %v2841 = vld [vmem:[%s657 + $0x8] sm:$0xff]
        %v2842 = vld [vmem:[%s657 + $0x10] sm:$0xff]
        %v2843 = vld [vmem:[%s657 + $0x18] sm:$0xff]
        %v2844 = vld [vmem:[%s657 + $0x20] sm:$0xff]
        %v2845 = vld [vmem:[%s657 + $0x28] sm:$0xff]
        %v2846 = vld [vmem:[%s657 + $0x30] sm:$0xff]
        %v2847 = vld [vmem:[%s657 + $0x38] sm:$0xff]
        %v2848 = vld [vmem:[%s657 + $0x40] sm:$0xff]
        %v2849 = vld [vmem:[%s657 + $0x48] sm:$0xff]
        %v2850 = vld [vmem:[%s657 + $0x50] sm:$0xff]
        %v2851 = vld [vmem:[%s657 + $0x58] sm:$0xff]
        %v2852 = vld [vmem:[%s657 + $0x60] sm:$0xff]
        %v2853 = vld [vmem:[%s657 + $0x68] sm:$0xff]
        %v2854 = vld [vmem:[%s657 + $0x70] sm:$0xff]
        %v2855 = vld [vmem:[%s657 + $0x78] sm:$0xff]
        %v2856 = vpack.c.bf16 %v2841, %v2840
        %v2857 = vpack.c.bf16 %v2843, %v2842
        %v2858 = vpack.c.bf16 %v2845, %v2844
        %v2859 = vpack.c.bf16 %v2847, %v2846
        %v2860 = vpack.c.bf16 %v2849, %v2848
        %v2861 = vpack.c.bf16 %v2851, %v2850
        %v2862 = vpack.c.bf16 %v2853, %v2852
        %v2863 = vpack.c.bf16 %v2855, %v2854
        %v2864 = vld [vmem:[%s12] sm:$0xf]
        %v2865 = vld [vmem:[%s12 + $0x4] sm:$0xf]
        %v2866 = vld [vmem:[%s12 + $0x8] sm:$0xf]
        %v2867 = vld [vmem:[%s12 + $0xc] sm:$0xf]
        %v2872 = vunpack.c.l.b16 %v2864
        %v2873 = vunpack.c.l.b16 %v2865
        %v2874 = vunpack.c.l.b16 %v2866
        %v2875 = vunpack.c.l.b16 %v2867
        %v2876 = vpack.c.b16 %v2873, %v2872
        %v2877 = vpack.c.b16 %v2875, %v2874
        %v2881 = vsel %vm868, %v2856, 0
        %v2884 = vsel %vm868, %v2857, 0
        %v2887 = vsel %vm868, %v2858, 0
        %v2890 = vsel %vm868, %v2859, 0
        %v2893 = vsel %vm868, %v2860, 0
        %v2896 = vsel %vm868, %v2861, 0
        %v2899 = vsel %vm868, %v2862, 0
        %v2902 = vsel %vm868, %v2863, 0
        %2904 = vmatprep.subr.bf16.mxu0 0
        %2905 = vmatpush1.bf16.msra.mxu0 0
        %2906 = vmatprep.subr.bf16.mxu0 0
        %2907 = vmatpush1.bf16.msra.mxu0 0
        %2908 = vmatprep.subr.bf16.mxu0 0
        %2909 = vmatpush1.bf16.msra.mxu0 0
        %2910 = vmatprep.subr.bf16.mxu0 0
        %2911 = vmatpush1.bf16.msra.mxu0 0
        %2912 = vmatprep.subr.bf16.mxu0 0
        %2913 = vmatpush1.bf16.msra.mxu0 0
        %2914 = vmatprep.subr.bf16.mxu0 0
        %2915 = vmatpush1.bf16.msra.mxu0 0
        %2916 = vmatprep.subr.bf16.mxu0 0
        %2917 = vmatpush1.bf16.msra.mxu0 %v2877
        %2918 = vmatprep.subr.bf16.mxu0 0
        %2919 = vmatpush1.bf16.msra.mxu0 %v2876
        %2920 = vmatprep.subr.bf16.mxu0 0
        %2921 = vmatpush2.bf16.msra.mxu0 0
        %2922 = vmatprep.subr.bf16.mxu0 0
        %2923 = vmatpush2.bf16.msra.mxu0 0
        %2924 = vmatprep.subr.bf16.mxu0 0
        %2925 = vmatpush2.bf16.msra.mxu0 0
        %2926 = vmatprep.subr.bf16.mxu0 0
        %2927 = vmatpush2.bf16.msra.mxu0 0
        %2928 = vmatprep.subr.bf16.mxu0 0
        %2929 = vmatpush2.bf16.msra.mxu0 0
        %2930 = vmatprep.subr.bf16.mxu0 0
        %2931 = vmatpush2.bf16.msra.mxu0 0
        %2932 = vmatprep.subr.bf16.mxu0 0
        %2933 = vmatpush2.bf16.msra.mxu0 0
        %2934 = vmatprep.subr.bf16.mxu0 0
        %2935 = vmatpush2.bf16.msra.mxu0 0
        %2936 = vmatprep.mubr.bf16.mxu0 0
        %2937 = vmatmul.mubr.bf16.gmra.mxu0 %v2881
        %v2938 = vpop.f32.mrf.mxu0
        %v2939 = vadd.f32 0.0, %v2938
        %v2940 = vpop.f32.mrf.mxu0
        %v2941 = vpop.f32.mrf.mxu0
        %v2942 = vadd.f32 0.0, %v2941
        %v2943 = vpop.f32.mrf.mxu0
        %2944 = vmatprep.mubr.bf16.mxu0 0
        %2945 = vmatmul.mubr.bf16.gmra.mxu0 %v2884
        %v2946 = vpop.f32.mrf.mxu0
        %v2947 = vadd.f32 0.0, %v2946
        %v2948 = vpop.f32.mrf.mxu0
        %v2949 = vpop.f32.mrf.mxu0
        %v2950 = vadd.f32 0.0, %v2949
        %v2951 = vpop.f32.mrf.mxu0
        %2952 = vmatprep.mubr.bf16.mxu0 0
        %2953 = vmatmul.mubr.bf16.gmra.mxu0 %v2887
        %v2954 = vpop.f32.mrf.mxu0
        %v2955 = vadd.f32 0.0, %v2954
        %v2956 = vpop.f32.mrf.mxu0
        %v2957 = vpop.f32.mrf.mxu0
        %v2958 = vadd.f32 0.0, %v2957
        %v2959 = vpop.f32.mrf.mxu0
        %2960 = vmatprep.mubr.bf16.mxu0 0
        %2961 = vmatmul.mubr.bf16.gmra.mxu0 %v2890
        %v2962 = vpop.f32.mrf.mxu0
        %v2963 = vadd.f32 0.0, %v2962
        %v2964 = vpop.f32.mrf.mxu0
        %v2965 = vpop.f32.mrf.mxu0
        %v2966 = vadd.f32 0.0, %v2965
        %v2967 = vpop.f32.mrf.mxu0
        %2968 = vmatprep.mubr.bf16.mxu0 0
        %2969 = vmatmul.mubr.bf16.gmra.mxu0 %v2893
        %v2970 = vpop.f32.mrf.mxu0
        %v2971 = vadd.f32 0.0, %v2970
        %v2972 = vpop.f32.mrf.mxu0
        %v2973 = vpop.f32.mrf.mxu0
        %v2974 = vadd.f32 0.0, %v2973
        %v2975 = vpop.f32.mrf.mxu0
        %2976 = vmatprep.mubr.bf16.mxu0 0
        %2977 = vmatmul.mubr.bf16.gmra.mxu0 %v2896
        %v2978 = vpop.f32.mrf.mxu0
        %v2979 = vadd.f32 0.0, %v2978
        %v2980 = vpop.f32.mrf.mxu0
        %v2981 = vpop.f32.mrf.mxu0
        %v2982 = vadd.f32 0.0, %v2981
        %v2983 = vpop.f32.mrf.mxu0
        %2984 = vmatprep.mubr.bf16.mxu0 0
        %2985 = vmatmul.mubr.bf16.gmra.mxu0 %v2899
        %v2986 = vpop.f32.mrf.mxu0
        %v2987 = vadd.f32 0.0, %v2986
        %v2988 = vpop.f32.mrf.mxu0
        %v2989 = vpop.f32.mrf.mxu0
        %v2990 = vadd.f32 0.0, %v2989
        %v2991 = vpop.f32.mrf.mxu0
        %2992 = vmatprep.mubr.bf16.mxu0 0
        %2993 = vmatmul.mubr.bf16.gmra.mxu0 %v2902
        %v2994 = vpop.f32.mrf.mxu0
        %v2995 = vadd.f32 0.0, %v2994
        %v2996 = vpop.f32.mrf.mxu0
        %v2997 = vpop.f32.mrf.mxu0
        %v2998 = vadd.f32 0.0, %v2997
        %v2999 = vpop.f32.mrf.mxu0
        %3000 = vdwg.mxu0
        %v3001 = vpack.c.bf16 %v2942, %v2939
        %v3002 = vpack.c.bf16 %v2950, %v2947
        %v3003 = vpack.c.bf16 %v2958, %v2955
        %v3004 = vpack.c.bf16 %v2966, %v2963
        %v3005 = vpack.c.bf16 %v2974, %v2971
        %v3006 = vpack.c.bf16 %v2982, %v2979
        %v3007 = vpack.c.bf16 %v2990, %v2987
        %v3008 = vpack.c.bf16 %v2998, %v2995
        %v3017 = vunpack.c.l.b16 %v3001
        %v3018 = vunpack.c.h.b16 %v3001
        %v3019 = vunpack.c.l.b16 %v3002
        %v3020 = vunpack.c.h.b16 %v3002
        %v3021 = vunpack.c.l.b16 %v3003
        %v3022 = vunpack.c.h.b16 %v3003
        %v3023 = vunpack.c.l.b16 %v3004
        %v3024 = vunpack.c.h.b16 %v3004
        %v3025 = vunpack.c.l.b16 %v3005
        %v3026 = vunpack.c.h.b16 %v3005
        %v3027 = vunpack.c.l.b16 %v3006
        %v3028 = vunpack.c.h.b16 %v3006
        %v3029 = vunpack.c.l.b16 %v3007
        %v3030 = vunpack.c.h.b16 %v3007
        %v3031 = vunpack.c.l.b16 %v3008
        %v3032 = vunpack.c.h.b16 %v3008
        %v3033 = vpack.c.b16 %v3017, %v3017
        %v3034 = vpack.c.b16 %v3018, %v3018
        %v3035 = vpack.c.b16 %v3019, %v3019
        %v3036 = vpack.c.b16 %v3020, %v3020
        %v3037 = vpack.c.b16 %v3021, %v3021
        %v3038 = vpack.c.b16 %v3022, %v3022
        %v3039 = vpack.c.b16 %v3023, %v3023
        %v3040 = vpack.c.b16 %v3024, %v3024
        %v3041 = vpack.c.b16 %v3025, %v3025
        %v3042 = vpack.c.b16 %v3026, %v3026
        %v3043 = vpack.c.b16 %v3027, %v3027
        %v3044 = vpack.c.b16 %v3028, %v3028
        %v3045 = vpack.c.b16 %v3029, %v3029
        %v3046 = vpack.c.b16 %v3030, %v3030
        %v3047 = vpack.c.b16 %v3031, %v3031
        %v3048 = vpack.c.b16 %v3032, %v3032
        %3065 = vst.msk [vmem:[%s672] sm:$0xf] %vm2454, %v3033
        %3066 = vst.msk [vmem:[%s672 + $0x4] sm:$0xf] %vm2454, %v3034
        %3067 = vst.msk [vmem:[%s672 + $0x8] sm:$0xf] %vm2454, %v3035
        %3068 = vst.msk [vmem:[%s672 + $0xc] sm:$0xf] %vm2454, %v3036
        %3069 = vst.msk [vmem:[%s672 + $0x10] sm:$0xf] %vm2454, %v3037
        %3070 = vst.msk [vmem:[%s672 + $0x14] sm:$0xf] %vm2454, %v3038
        %3071 = vst.msk [vmem:[%s672 + $0x18] sm:$0xf] %vm2454, %v3039
        %3072 = vst.msk [vmem:[%s672 + $0x1c] sm:$0xf] %vm2454, %v3040
        %3073 = vst.msk [vmem:[%s672 + $0x20] sm:$0xf] %vm2454, %v3041
        %3074 = vst.msk [vmem:[%s672 + $0x24] sm:$0xf] %vm2454, %v3042
        %3075 = vst.msk [vmem:[%s672 + $0x28] sm:$0xf] %vm2454, %v3043
        %3076 = vst.msk [vmem:[%s672 + $0x2c] sm:$0xf] %vm2454, %v3044
        %3077 = vst.msk [vmem:[%s672 + $0x30] sm:$0xf] %vm2454, %v3045
        %3078 = vst.msk [vmem:[%s672 + $0x34] sm:$0xf] %vm2454, %v3046
        %3079 = vst.msk [vmem:[%s672 + $0x38] sm:$0xf] %vm2454, %v3047
        %3080 = vst.msk [vmem:[%s672 + $0x3c] sm:$0xf] %vm2454, %v3048
        %v3081 = vld [vmem:[%s13] sm:$0xf]
        %v3082 = vld [vmem:[%s13 + $0x4] sm:$0xf]
        %v3083 = vld [vmem:[%s13 + $0x8] sm:$0xf]
        %v3084 = vld [vmem:[%s13 + $0xc] sm:$0xf]
        %v3089 = vunpack.c.l.b16 %v3081
        %v3090 = vunpack.c.l.b16 %v3082
        %v3091 = vunpack.c.l.b16 %v3083
        %v3092 = vunpack.c.l.b16 %v3084
        %v3093 = vpack.c.b16 %v3090, %v3089
        %v3094 = vpack.c.b16 %v3092, %v3091
        %3097 = vmatprep.subr.bf16.mxu0 0
        %3098 = vmatpush1.bf16.msra.mxu0 0
        %3099 = vmatprep.subr.bf16.mxu0 0
        %3100 = vmatpush1.bf16.msra.mxu0 0
        %3101 = vmatprep.subr.bf16.mxu0 0
        %3102 = vmatpush1.bf16.msra.mxu0 0
        %3103 = vmatprep.subr.bf16.mxu0 0
        %3104 = vmatpush1.bf16.msra.mxu0 0
        %3105 = vmatprep.subr.bf16.mxu0 0
        %3106 = vmatpush1.bf16.msra.mxu0 0
        %3107 = vmatprep.subr.bf16.mxu0 0
        %3108 = vmatpush1.bf16.msra.mxu0 0
        %3109 = vmatprep.subr.bf16.mxu0 0
        %3110 = vmatpush1.bf16.msra.mxu0 %v3094
        %3111 = vmatprep.subr.bf16.mxu0 0
        %3112 = vmatpush1.bf16.msra.mxu0 %v3093
        %3113 = vmatprep.subr.bf16.mxu0 0
        %3114 = vmatpush2.bf16.msra.mxu0 0
        %3115 = vmatprep.subr.bf16.mxu0 0
        %3116 = vmatpush2.bf16.msra.mxu0 0
        %3117 = vmatprep.subr.bf16.mxu0 0
        %3118 = vmatpush2.bf16.msra.mxu0 0
        %3119 = vmatprep.subr.bf16.mxu0 0
        %3120 = vmatpush2.bf16.msra.mxu0 0
        %3121 = vmatprep.subr.bf16.mxu0 0
        %3122 = vmatpush2.bf16.msra.mxu0 0
        %3123 = vmatprep.subr.bf16.mxu0 0
        %3124 = vmatpush2.bf16.msra.mxu0 0
        %3125 = vmatprep.subr.bf16.mxu0 0
        %3126 = vmatpush2.bf16.msra.mxu0 0
        %3127 = vmatprep.subr.bf16.mxu0 0
        %3128 = vmatpush2.bf16.msra.mxu0 0
        %3129 = vmatprep.mubr.bf16.mxu0 0
        %3130 = vmatmul.mubr.bf16.gmra.mxu0 %v2881
        %v3131 = vpop.f32.mrf.mxu0
        %v3132 = vadd.f32 0.0, %v3131
        %v3133 = vpop.f32.mrf.mxu0
        %v3134 = vpop.f32.mrf.mxu0
        %v3135 = vadd.f32 0.0, %v3134
        %v3136 = vpop.f32.mrf.mxu0
        %3137 = vmatprep.mubr.bf16.mxu0 0
        %3138 = vmatmul.mubr.bf16.gmra.mxu0 %v2884
        %v3139 = vpop.f32.mrf.mxu0
        %v3140 = vadd.f32 0.0, %v3139
        %v3141 = vpop.f32.mrf.mxu0
        %v3142 = vpop.f32.mrf.mxu0
        %v3143 = vadd.f32 0.0, %v3142
        %v3144 = vpop.f32.mrf.mxu0
        %3145 = vmatprep.mubr.bf16.mxu0 0
        %3146 = vmatmul.mubr.bf16.gmra.mxu0 %v2887
        %v3147 = vpop.f32.mrf.mxu0
        %v3148 = vadd.f32 0.0, %v3147
        %v3149 = vpop.f32.mrf.mxu0
        %v3150 = vpop.f32.mrf.mxu0
        %v3151 = vadd.f32 0.0, %v3150
        %v3152 = vpop.f32.mrf.mxu0
        %3153 = vmatprep.mubr.bf16.mxu0 0
        %3154 = vmatmul.mubr.bf16.gmra.mxu0 %v2890
        %v3155 = vpop.f32.mrf.mxu0
        %v3156 = vadd.f32 0.0, %v3155
        %v3157 = vpop.f32.mrf.mxu0
        %v3158 = vpop.f32.mrf.mxu0
        %v3159 = vadd.f32 0.0, %v3158
        %v3160 = vpop.f32.mrf.mxu0
        %3161 = vmatprep.mubr.bf16.mxu0 0
        %3162 = vmatmul.mubr.bf16.gmra.mxu0 %v2893
        %v3163 = vpop.f32.mrf.mxu0
        %v3164 = vadd.f32 0.0, %v3163
        %v3165 = vpop.f32.mrf.mxu0
        %v3166 = vpop.f32.mrf.mxu0
        %v3167 = vadd.f32 0.0, %v3166
        %v3168 = vpop.f32.mrf.mxu0
        %3169 = vmatprep.mubr.bf16.mxu0 0
        %3170 = vmatmul.mubr.bf16.gmra.mxu0 %v2896
        %v3171 = vpop.f32.mrf.mxu0
        %v3172 = vadd.f32 0.0, %v3171
        %v3173 = vpop.f32.mrf.mxu0
        %v3174 = vpop.f32.mrf.mxu0
        %v3175 = vadd.f32 0.0, %v3174
        %v3176 = vpop.f32.mrf.mxu0
        %3177 = vmatprep.mubr.bf16.mxu0 0
        %3178 = vmatmul.mubr.bf16.gmra.mxu0 %v2899
        %v3179 = vpop.f32.mrf.mxu0
        %v3180 = vadd.f32 0.0, %v3179
        %v3181 = vpop.f32.mrf.mxu0
        %v3182 = vpop.f32.mrf.mxu0
        %v3183 = vadd.f32 0.0, %v3182
        %v3184 = vpop.f32.mrf.mxu0
        %3185 = vmatprep.mubr.bf16.mxu0 0
        %3186 = vmatmul.mubr.bf16.gmra.mxu0 %v2902
        %v3187 = vpop.f32.mrf.mxu0
        %v3188 = vadd.f32 0.0, %v3187
        %v3189 = vpop.f32.mrf.mxu0
        %v3190 = vpop.f32.mrf.mxu0
        %v3191 = vadd.f32 0.0, %v3190
        %v3192 = vpop.f32.mrf.mxu0
        %3193 = vdwg.mxu0
        %v3194 = vpack.c.bf16 %v3135, %v3132
        %v3195 = vpack.c.bf16 %v3143, %v3140
        %v3196 = vpack.c.bf16 %v3151, %v3148
        %v3197 = vpack.c.bf16 %v3159, %v3156
        %v3198 = vpack.c.bf16 %v3167, %v3164
        %v3199 = vpack.c.bf16 %v3175, %v3172
        %v3200 = vpack.c.bf16 %v3183, %v3180
        %v3201 = vpack.c.bf16 %v3191, %v3188
        %v3210 = vunpack.c.l.b16 %v3194
        %v3211 = vunpack.c.h.b16 %v3194
        %v3212 = vunpack.c.l.b16 %v3195
        %v3213 = vunpack.c.h.b16 %v3195
        %v3214 = vunpack.c.l.b16 %v3196
        %v3215 = vunpack.c.h.b16 %v3196
        %v3216 = vunpack.c.l.b16 %v3197
        %v3217 = vunpack.c.h.b16 %v3197
        %v3218 = vunpack.c.l.b16 %v3198
        %v3219 = vunpack.c.h.b16 %v3198
        %v3220 = vunpack.c.l.b16 %v3199
        %v3221 = vunpack.c.h.b16 %v3199
        %v3222 = vunpack.c.l.b16 %v3200
        %v3223 = vunpack.c.h.b16 %v3200
        %v3224 = vunpack.c.l.b16 %v3201
        %v3225 = vunpack.c.h.b16 %v3201
        %v3226 = vpack.c.b16 %v3210, %v3210
        %v3227 = vpack.c.b16 %v3211, %v3211
        %v3228 = vpack.c.b16 %v3212, %v3212
        %v3229 = vpack.c.b16 %v3213, %v3213
        %v3230 = vpack.c.b16 %v3214, %v3214
        %v3231 = vpack.c.b16 %v3215, %v3215
        %v3232 = vpack.c.b16 %v3216, %v3216
        %v3233 = vpack.c.b16 %v3217, %v3217
        %v3234 = vpack.c.b16 %v3218, %v3218
        %v3235 = vpack.c.b16 %v3219, %v3219
        %v3236 = vpack.c.b16 %v3220, %v3220
        %v3237 = vpack.c.b16 %v3221, %v3221
        %v3238 = vpack.c.b16 %v3222, %v3222
        %v3239 = vpack.c.b16 %v3223, %v3223
        %v3240 = vpack.c.b16 %v3224, %v3224
        %v3241 = vpack.c.b16 %v3225, %v3225
        %3258 = vst.msk [vmem:[%s677] sm:$0xf] %vm2454, %v3226
        %3259 = vst.msk [vmem:[%s677 + $0x4] sm:$0xf] %vm2454, %v3227
        %3260 = vst.msk [vmem:[%s677 + $0x8] sm:$0xf] %vm2454, %v3228
        %3261 = vst.msk [vmem:[%s677 + $0xc] sm:$0xf] %vm2454, %v3229
        %3262 = vst.msk [vmem:[%s677 + $0x10] sm:$0xf] %vm2454, %v3230
        %3263 = vst.msk [vmem:[%s677 + $0x14] sm:$0xf] %vm2454, %v3231
        %3264 = vst.msk [vmem:[%s677 + $0x18] sm:$0xf] %vm2454, %v3232
        %3265 = vst.msk [vmem:[%s677 + $0x1c] sm:$0xf] %vm2454, %v3233
        %3266 = vst.msk [vmem:[%s677 + $0x20] sm:$0xf] %vm2454, %v3234
        %3267 = vst.msk [vmem:[%s677 + $0x24] sm:$0xf] %vm2454, %v3235
        %3268 = vst.msk [vmem:[%s677 + $0x28] sm:$0xf] %vm2454, %v3236
        %3269 = vst.msk [vmem:[%s677 + $0x2c] sm:$0xf] %vm2454, %v3237
        %3270 = vst.msk [vmem:[%s677 + $0x30] sm:$0xf] %vm2454, %v3238
        %3271 = vst.msk [vmem:[%s677 + $0x34] sm:$0xf] %vm2454, %v3239
        %3272 = vst.msk [vmem:[%s677 + $0x38] sm:$0xf] %vm2454, %v3240
        %3273 = vst.msk [vmem:[%s677 + $0x3c] sm:$0xf] %vm2454, %v3241
        %s3274 = sand.u32 %s349, 1
        %s3275 = scalar_lea.sflag [#allocation3], %s3274
        %s3276 = sand.u32 %s349, 1
        %s3277 = scalar_lea.vmem [#allocation2], %s3276
        %s3278 = sand.u32 %s375, 1
        %s3279 = scalar_lea.sflag [#allocation5], %s3278
        %s3280 = sand.u32 %s375, 1
        %s3281 = scalar_lea.vmem [#allocation4], %s3280
        %p3282 = scmp.lt.s32.totalorder %s37, 1
        %s3283 = scalar_select %p3282, %s37, 1
        %s3284 = smul.addr %s3283, 32
        %s3285 = smul.addr %s3284, 4
        %s3286 = scalar_lea.vmem %s16, %s3285
        %p3287 = scmp.lt.s32.totalorder %s37, 1
        %s3288 = scalar_select %p3287, %s37, 1
        %s3289 = smul.addr %s3288, 32
        %s3290 = smul.addr %s3289, 4
        %s3291 = scalar_lea.vmem %s17, %s3290
        %p3292 = scmp.lt.s32.totalorder %s37, 1
        %s3293 = scalar_select %p3292, %s37, 1
        %s3294 = smul.addr %s3293, 16
        %s3295 = smul.addr %s3294, 4
        %s3296 = scalar_lea.vmem %s18, %s3295
        %p3297 = scmp.lt.s32.totalorder %s37, 1
        %s3298 = scalar_select %p3297, %s37, 1
        %s3299 = smul.addr %s3298, 16
        %s3300 = smul.addr %s3299, 4
        %s3301 = scalar_lea.vmem %s19, %s3300
        // Predicated region
        $region77: #{tpu_custom_call.1} parent=75 // pred_check
          %p3302 = pneg %p359
        $region78: #{tpu_custom_call.1} parent=75 // pred_check_branch
          %3304 = sbr.rel (%p3302) target = $region80
        $region79: #{tpu_custom_call.1} parent=75 // pred_region
          %s3306 = ssub.s32 16, 16
          %3307 = vsyncadd %s3275, %s3306
          %s3308 = smul.addr %s37, 16
          %s3309 = scalar_lea.hbm %s14, %s3308
          %s3311 = sshll.u32 %s3277, 4
          %s3312 = int_to_ptr.vmem [resolvable:$true] %s3311
          %3314 = dma.vmem_to_hbm [thread:$0]  %s3312, 16, %s3309, %s3275
        $region80: #{tpu_custom_call.1} parent=75 // pred_fallthru
          _
        // Predicated region
        $region81: #{tpu_custom_call.1} parent=75 // pred_check
          %p3315 = pneg %p385
        $region82: #{tpu_custom_call.1} parent=75 // pred_check_branch
          %3317 = sbr.rel (%p3315) target = $region84
        $region83: #{tpu_custom_call.1} parent=75 // pred_region
          %s3319 = ssub.s32 16, 16
          %3320 = vsyncadd %s3279, %s3319
          %s3321 = smul.addr %s37, 16
          %s3322 = scalar_lea.hbm %s15, %s3321
          %s3324 = sshll.u32 %s3281, 4
          %s3325 = int_to_ptr.vmem [resolvable:$true] %s3324
          %3327 = dma.vmem_to_hbm [thread:$0]  %s3325, 16, %s3322, %s3279
        $region84: #{tpu_custom_call.1} parent=75 // pred_fallthru
          _
        // Predicated region
        $region85: #{tpu_custom_call.1} parent=75 // pred_check
          %p3328 = pneg %p411
        $region86: #{tpu_custom_call.1} parent=75 // pred_check_branch
          %3330 = sbr.rel (%p3328) target = $region88
        $region87: #{tpu_custom_call.1} parent=75 // pred_region
          _
        $region88: #{tpu_custom_call.1} parent=75 // pred_fallthru
          _
        // Predicated region
        $region89: #{tpu_custom_call.1} parent=75 // pred_check
          %p3331 = pneg %p437
        $region90: #{tpu_custom_call.1} parent=75 // pred_check_branch
          %3333 = sbr.rel (%p3331) target = $region92
        $region91: #{tpu_custom_call.1} parent=75 // pred_region
          _
        $region92: #{tpu_custom_call.1} parent=75 // pred_fallthru
          _
        // Predicated region
        $region93: #{tpu_custom_call.1} parent=75 // pred_check
          %p3334 = pneg %p463
        $region94: #{tpu_custom_call.1} parent=75 // pred_check_branch
          %3336 = sbr.rel (%p3334) target = $region96
        $region95: #{tpu_custom_call.1} parent=75 // pred_region
          _
        $region96: #{tpu_custom_call.1} parent=75 // pred_fallthru
          _
        // Predicated region
        $region97: #{tpu_custom_call.1} parent=75 // pred_check
          %p3337 = pneg %p489
        $region98: #{tpu_custom_call.1} parent=75 // pred_check_branch
          %3339 = sbr.rel (%p3337) target = $region100
        $region99: #{tpu_custom_call.1} parent=75 // pred_region
          _
        $region100: #{tpu_custom_call.1} parent=75 // pred_fallthru
          _
      $region76: #{tpu_custom_call.1} parent=5 // pred_fallthru
        _
      %p3340 = scmp.le.s32.totalorder 2, %s32
      // Predicated region
      $region101: #{tpu_custom_call.1} parent=5 // pred_check
        %p3341 = pneg %p3340
      $region102: #{tpu_custom_call.1} parent=5 // pred_check_branch
        %3343 = sbr.rel (%p3341) target = $region104
      $region103: #{tpu_custom_call.1} parent=5 // pred_region
        %s3344 = ssub.s32 %s32, 2
        // Predicated region
        $region105: #{tpu_custom_call.1} parent=103 // pred_check
          %p3345 = pneg %p365
        $region106: #{tpu_custom_call.1} parent=103 // pred_check_branch
          %3347 = sbr.rel (%p3345) target = $region108
        $region107: #{tpu_custom_call.1} parent=103 // pred_region
          %s3348 = sand.u32 %s350, 1
          %s3349 = scalar_lea.sflag [#allocation3], %s3348
          %s3350 = sand.u32 %s350, 1
          %s3351 = scalar_lea.vmem [#allocation2], %s3350
          %3352 = dma.done %s3349, 16
        $region108: #{tpu_custom_call.1} parent=103 // pred_fallthru
          _
        // Predicated region
        $region109: #{tpu_custom_call.1} parent=103 // pred_check
          %p3353 = pneg %p391
        $region110: #{tpu_custom_call.1} parent=103 // pred_check_branch
          %3355 = sbr.rel (%p3353) target = $region112
        $region111: #{tpu_custom_call.1} parent=103 // pred_region
          %s3356 = sand.u32 %s376, 1
          %s3357 = scalar_lea.sflag [#allocation5], %s3356
          %s3358 = sand.u32 %s376, 1
          %s3359 = scalar_lea.vmem [#allocation4], %s3358
          %3360 = dma.done %s3357, 16
        $region112: #{tpu_custom_call.1} parent=103 // pred_fallthru
          _
        // Predicated region
        $region113: #{tpu_custom_call.1} parent=103 // pred_check
          %p3361 = pneg %p417
        $region114: #{tpu_custom_call.1} parent=103 // pred_check_branch
          %3363 = sbr.rel (%p3361) target = $region116
        $region115: #{tpu_custom_call.1} parent=103 // pred_region
          %p3364 = scmp.lt.s32.totalorder %s38, 1
          %s3365 = scalar_select %p3364, %s38, 1
          %s3366 = smul.addr %s3365, 32
          %s3367 = smul.addr %s3366, 4
          %s3368 = scalar_lea.vmem %s16, %s3367
        $region116: #{tpu_custom_call.1} parent=103 // pred_fallthru
          _
        // Predicated region
        $region117: #{tpu_custom_call.1} parent=103 // pred_check
          %p3369 = pneg %p443
        $region118: #{tpu_custom_call.1} parent=103 // pred_check_branch
          %3371 = sbr.rel (%p3369) target = $region120
        $region119: #{tpu_custom_call.1} parent=103 // pred_region
          %p3372 = scmp.lt.s32.totalorder %s38, 1
          %s3373 = scalar_select %p3372, %s38, 1
          %s3374 = smul.addr %s3373, 32
          %s3375 = smul.addr %s3374, 4
          %s3376 = scalar_lea.vmem %s17, %s3375
        $region120: #{tpu_custom_call.1} parent=103 // pred_fallthru
          _
        // Predicated region
        $region121: #{tpu_custom_call.1} parent=103 // pred_check
          %p3377 = pneg %p469
        $region122: #{tpu_custom_call.1} parent=103 // pred_check_branch
          %3379 = sbr.rel (%p3377) target = $region124
        $region123: #{tpu_custom_call.1} parent=103 // pred_region
          %p3380 = scmp.lt.s32.totalorder %s38, 1
          %s3381 = scalar_select %p3380, %s38, 1
          %s3382 = smul.addr %s3381, 16
          %s3383 = smul.addr %s3382, 4
          %s3384 = scalar_lea.vmem %s18, %s3383
        $region124: #{tpu_custom_call.1} parent=103 // pred_fallthru
          _
        // Predicated region
        $region125: #{tpu_custom_call.1} parent=103 // pred_check
          %p3385 = pneg %p495
        $region126: #{tpu_custom_call.1} parent=103 // pred_check_branch
          %3387 = sbr.rel (%p3385) target = $region128
        $region127: #{tpu_custom_call.1} parent=103 // pred_region
          %p3388 = scmp.lt.s32.totalorder %s38, 1
          %s3389 = scalar_select %p3388, %s38, 1
          %s3390 = smul.addr %s3389, 16
          %s3391 = smul.addr %s3390, 4
          %s3392 = scalar_lea.vmem %s19, %s3391
        $region128: #{tpu_custom_call.1} parent=103 // pred_fallthru
          _
      $region104: #{tpu_custom_call.1} parent=5 // pred_fallthru
        _
    $region6: #{tpu_custom_call.1} parent=1 // loop_footer
      %s36 = sadd.s32 1, %s32
    $region7: #{tpu_custom_call.1} parent=1 // loop_footer_branch
      %31 = sbr.rel target = $region3
    $region8: #{tpu_custom_call.1} parent=1 // loop_exit
      _
    %3393 = vsyncpa [#allocation3], 1
    %s3394 = scalar_lea.sflag [#allocation3], 1
    %3395 = vsyncpa %s3394, 1
    %3396 = vsyncpa [#allocation5], 1
    %s3397 = scalar_lea.sflag [#allocation5], 1
    %3398 = vsyncpa %s3397, 1

</llo_original>
